<compile_context>
chip_gen: v6e
topology: v6e:2x2x1
jax: 0.10.0
libtpu: 0.0.40
codegen_flags: <defaults>
</compile_context>

<pallas_src>
import functools
import math

import jax
import jax.numpy as jnp
from jax.experimental import pallas as pl
from jax.experimental.pallas import tpu as pltpu

# ---------------- small synthetic config ----------------
VOCAB = 100
HIDDEN = 128
N_LAYERS = 2
N_HEADS = 4
HEAD_DIM = HIDDEN // N_HEADS
INTERMEDIATE = 256
MAX_POS = 64
TYPE_VOCAB = 1
NUM_LABELS = 3
PAD_ID = 1
LN_EPS = 1e-5
LOGIT_PAD = 128                     # class axis padded to a full lane width
MASK_NEG = -1e9
LOGIT_PAD_NEG = -1e30
ATTN_SCALE = 1.0 / math.sqrt(HEAD_DIM)


# ---------------- in-kernel helpers ----------------
def _layernorm(x, g, b):
    mu = jnp.mean(x, axis=-1, keepdims=True)
    var = jnp.mean((x - mu) ** 2, axis=-1, keepdims=True)
    return (x - mu) * jax.lax.rsqrt(var + LN_EPS) * g + b


def _gelu(x):
    # TODO(synk): HF XLM-R uses exact erf-GELU; tanh-approx GELU is used here.
    return 0.5 * x * (1.0 + jnp.tanh(0.7978845608028654 * (x + 0.044715 * x * x * x)))


def _dot(a_f32, w_bf16):
    """bf16-input MXU matmul (weights pre-cast to bf16) with f32 accumulation."""
    return jnp.dot(a_f32.astype(jnp.bfloat16), w_bf16,
                   preferred_element_type=jnp.float32)


# ---------------- fully fused kernel ----------------
def _fused_kernel(emb_ref, emb_g_ref, emb_b_ref, mask_ref,
                  wqkv_ref, bqkv_ref, wo_ref, bo_ref, ln1g_ref, ln1b_ref,
                  w1_ref, b1_ref, w2_ref, b2_ref, ln2g_ref, ln2b_ref,
                  clsw_ref, clsb_ref, wop_ref, bop_ref, oh_ref,
                  logits_ref, nll_ref, x_scr,
                  *, batch, seq, n_heads, head_dim):
    layer = pl.program_id(0)
    H = n_heads * head_dim

    # ---- prologue: embedding LayerNorm (only on the first grid step) ----
    @pl.when(layer == 0)
    def _():
        x_scr[...] = _layernorm(emb_ref[...], emb_g_ref[...], emb_b_ref[...])

    x = x_scr[...]                                              # (M, H) f32

    # ---- fused Q|K|V projection (softmax scale pre-folded into Q cols) ----
    qkv = _dot(x, wqkv_ref[...]) + bqkv_ref[...]                # (M, 3H) f32
    q = qkv[:, :H]
    k = qkv[:, H:2 * H]
    v = qkv[:, 2 * H:]

    # ---- attention, batched over the batch axis per head ----
    bias = mask_ref[...]                                        # (B, 1, S) additive
    ctx_heads = []
    for h in range(n_heads):
        c0 = h * head_dim
        qh = q[:, c0:c0 + head_dim].reshape(batch, seq, head_dim).astype(jnp.bfloat16)
        kh = k[:, c0:c0 + head_dim].reshape(batch, seq, head_dim).astype(jnp.bfloat16)
        vh = v[:, c0:c0 + head_dim].reshape(batch, seq, head_dim).astype(jnp.bfloat16)
        # contract the last axes directly (no explicit K transpose)
        s = jnp.einsum('bqd,bkd->bqk', qh, kh,
                       preferred_element_type=jnp.float32) + bias   # (B, S, S) f32
        s = s - jnp.max(s, axis=-1, keepdims=True)
        p = jnp.exp(s)
        p = p * pl.reciprocal(jnp.sum(p, axis=-1, keepdims=True), approx=True)
        ch = jnp.einsum('bqk,bkd->bqd', p.astype(jnp.bfloat16), vh,
                        preferred_element_type=jnp.float32)          # (B, S, Dh)
        ctx_heads.append(ch.reshape(batch * seq, head_dim))
    ctx = jnp.concatenate(ctx_heads, axis=-1)                    # (M, H), in registers

    # ---- output projection + residual + LayerNorm ----
    attn_out = _dot(ctx, wo_ref[...]) + bo_ref[...]
    x1 = _layernorm(x + attn_out, ln1g_ref[...], ln1b_ref[...])

    # ---- GELU FFN + residual + LayerNorm ----
    hid = _gelu(_dot(x1, w1_ref[...]) + b1_ref[...])             # (M, I)
    ffn = _dot(hid, w2_ref[...]) + b2_ref[...]                   # (M, H)
    x_out = _layernorm(x1 + ffn, ln2g_ref[...], ln2b_ref[...])
    x_scr[...] = x_out

    # ---- epilogue: classification head + NLL (only on the last grid step) ----
    @pl.when(layer == pl.num_programs(0) - 1)
    def _():
        # <s> (first) token of each sequence
        cls_rows = [x_out[b * seq:b * seq + 1, :] for b in range(batch)]
        cls_tok = jnp.concatenate(cls_rows, axis=0)              # (B, H)
        pooled = jnp.tanh(_dot(cls_tok, clsw_ref[...]) + clsb_ref[...])
        lg = _dot(pooled, wop_ref[...]) + bop_ref[...]           # (B, 128) lane-dense
        logits_ref[...] = lg
        m = jnp.max(lg, axis=-1, keepdims=True)
        lse = jnp.log(jnp.sum(jnp.exp(lg - m), axis=-1, keepdims=True)) + m
        nll_ref[...] = lse - jnp.sum(lg * oh_ref[...], axis=-1, keepdims=True)


# ---------------- wrapper ----------------
def fused_forward_kernel(params, emb, mask_bias, labels_onehot, batch, seq):
    H, I, L = HIDDEN, INTERMEDIATE, N_LAYERS
    M = batch * seq

    def fixed2(shape):
        return pl.BlockSpec(shape, lambda l: (0, 0))

    def fixed3(shape):
        return pl.BlockSpec(shape, lambda l: (0, 0, 0))

    def per_layer(shape):
        # leading (layer) dim squeezed out; streamed/double-buffered across grid
        return pl.BlockSpec((None,) + shape, lambda l: (l, 0, 0))

    in_specs = [
        fixed2((M, H)),              # emb
        fixed2((1, H)),              # emb_ln_g
        fixed2((1, H)),              # emb_ln_b
        fixed3((batch, 1, seq)),     # mask_bias
        per_layer((H, 3 * H)),       # w_qkv (bf16)
        per_layer((1, 3 * H)),       # b_qkv
        per_layer((H, H)),           # wo (bf16)
        per_layer((1, H)),           # bo
        per_layer((1, H)),           # ln1_g
        per_layer((1, H)),           # ln1_b
        per_layer((H, I)),           # w1 (bf16)
        per_layer((1, I)),           # b1
        per_layer((I, H)),           # w2 (bf16)
        per_layer((1, H)),           # b2
        per_layer((1, H)),           # ln2_g
        per_layer((1, H)),           # ln2_b
        fixed2((H, H)),              # cls_dense_w (bf16)
        fixed2((1, H)),              # cls_dense_b
        fixed2((H, LOGIT_PAD)),      # out_proj_w_pad (bf16)
        fixed2((1, LOGIT_PAD)),      # out_proj_b_pad
        fixed2((batch, LOGIT_PAD)),  # labels one-hot
    ]
    out_specs = (fixed2((batch, LOGIT_PAD)), fixed2((batch, 1)))

    kernel = functools.partial(_fused_kernel, batch=batch, seq=seq,
                               n_heads=N_HEADS, head_dim=HEAD_DIM)

    logits_pad, nll = pl.pallas_call(
        kernel,
        out_shape=(jax.ShapeDtypeStruct((batch, LOGIT_PAD), jnp.float32),
                   jax.ShapeDtypeStruct((batch, 1), jnp.float32)),
        grid_spec=pltpu.PrefetchScalarGridSpec(
            num_scalar_prefetch=0,
            grid=(L,),
            in_specs=in_specs,
            out_specs=out_specs,
            scratch_shapes=[pltpu.VMEM((M, H), jnp.float32)]),
        compiler_params=pltpu.CompilerParams(
            dimension_semantics=("arbitrary",)),
    )(emb, params["emb_ln_g"], params["emb_ln_b"], mask_bias,
      params["w_qkv"], params["b_qkv"], params["wo"], params["bo"],
      params["ln1_g"], params["ln1_b"], params["w1"], params["b1"],
      params["w2"], params["b2"], params["ln2_g"], params["ln2_b"],
      params["cls_dense_w"], params["cls_dense_b"],
      params["out_proj_w_pad"], params["out_proj_b_pad"], labels_onehot)
    return logits_pad, nll


# ---------------- parameters ----------------
def init_params(key):
    def nrm(k, shape):
        return jax.random.normal(k, shape, jnp.float32) * 0.02

    keys = iter(jax.random.split(key, 64))
    H, I, L = HIDDEN, INTERMEDIATE, N_LAYERS

    p = {
        "word_emb": nrm(next(keys), (VOCAB, H)),
        "pos_emb": nrm(next(keys), (MAX_POS, H)),
        "type_emb": nrm(next(keys), (TYPE_VOCAB, H)),
        "emb_ln_g": jnp.ones((1, H), jnp.float32),
        "emb_ln_b": jnp.zeros((1, H), jnp.float32),
        "cls_dense_w": nrm(next(keys), (H, H)).astype(jnp.bfloat16),
        "cls_dense_b": jnp.zeros((1, H), jnp.float32),
    }
    # lane-padded out_proj: zero weight columns, -1e30 bias on padded classes
    out_w = nrm(next(keys), (H, NUM_LABELS))
    p["out_proj_w_pad"] = jnp.concatenate(
        [out_w, jnp.zeros((H, LOGIT_PAD - NUM_LABELS), jnp.float32)],
        axis=1).astype(jnp.bfloat16)
    p["out_proj_b_pad"] = jnp.concatenate(
        [jnp.zeros((1, NUM_LABELS), jnp.float32),
         jnp.full((1, LOGIT_PAD - NUM_LABELS), LOGIT_PAD_NEG, jnp.float32)], axis=1)

    # stacked per-layer weights (leading layer axis), matmul weights in bf16
    wqkv, wo, w1, w2 = [], [], [], []
    for _ in range(L):
        wq = nrm(next(keys), (H, H))
        wk = nrm(next(keys), (H, H))
        wv = nrm(next(keys), (H, H))
        # fused QKV weight with the softmax scale folded into the Q block
        wqkv.append(jnp.concatenate([wq * ATTN_SCALE, wk, wv], axis=1))
        wo.append(nrm(next(keys), (H, H)))
        w1.append(nrm(next(keys), (H, I)))
        w2.append(nrm(next(keys), (I, H)))

    p["w_qkv"] = jnp.stack(wqkv).astype(jnp.bfloat16)        # (L, H, 3H)
    p["b_qkv"] = jnp.zeros((L, 1, 3 * H), jnp.float32)
    p["wo"] = jnp.stack(wo).astype(jnp.bfloat16)             # (L, H, H)
    p["bo"] = jnp.zeros((L, 1, H), jnp.float32)
    p["ln1_g"] = jnp.ones((L, 1, H), jnp.float32)
    p["ln1_b"] = jnp.zeros((L, 1, H), jnp.float32)
    p["w1"] = jnp.stack(w1).astype(jnp.bfloat16)             # (L, H, I)
    p["b1"] = jnp.zeros((L, 1, I), jnp.float32)
    p["w2"] = jnp.stack(w2).astype(jnp.bfloat16)             # (L, I, H)
    p["b2"] = jnp.zeros((L, 1, H), jnp.float32)
    p["ln2_g"] = jnp.ones((L, 1, H), jnp.float32)
    p["ln2_b"] = jnp.zeros((L, 1, H), jnp.float32)
    return p


# ---------------- forward ----------------
def forward(params, input_ids, attention_mask, token_type_ids, labels):
    B, S = input_ids.shape
    H = HIDDEN

    # RoBERTa-style position ids (offset by padding_idx)
    not_pad = (input_ids != PAD_ID).astype(jnp.int32)
    pos_ids = jnp.cumsum(not_pad, axis=1) * not_pad + PAD_ID

    # embeddings (table gathers stay in XLA; everything else is one Pallas call)
    emb = (params["word_emb"][input_ids]
           + params["pos_emb"][pos_ids]
           + params["type_emb"][token_type_ids]).reshape(B * S, H)

    # additive attention bias over the key axis, broadcast over queries
    mask_bias = ((1.0 - attention_mask.astype(jnp.float32)) * MASK_NEG)[:, None, :]
    labels_onehot = jax.nn.one_hot(labels, LOGIT_PAD, dtype=jnp.float32)

    logits_pad, nll = fused_forward_kernel(params, emb, mask_bias,
                                           labels_onehot, B, S)
    return jnp.mean(nll), logits_pad[:, :NUM_LABELS]


if __name__ == "__main__":
    key = jax.random.PRNGKey(0)
    k_param, k_ids, k_lbl = jax.random.split(key, 3)

    B, S = 2, 8
    params = init_params(k_param)

    input_ids = jax.random.randint(k_ids, (B, S), 2, VOCAB, dtype=jnp.int32)
    # pad the last 2 tokens of the second example to exercise the attention mask
    input_ids = input_ids.at[1, -2:].set(PAD_ID)
    attention_mask = (input_ids != PAD_ID).astype(jnp.int32)
    token_type_ids = jnp.zeros((B, S), jnp.int32)
    labels = jax.random.randint(k_lbl, (B,), 0, NUM_LABELS, dtype=jnp.int32)

    fwd = jax.jit(forward)
    loss, logits = fwd(params, input_ids, attention_mask, token_type_ids, labels)
    jax.block_until_ready((loss, logits))

    assert logits.shape == (B, NUM_LABELS)
    assert bool(jnp.isfinite(loss)) and bool(jnp.all(jnp.isfinite(logits)))
    print("KERNEL_OK")
</pallas_src>

<mosaic_0001>
module attributes {stable_mosaic.version = 11 : i64} {
  func.func @_fused_kernel(%arg0: i32, %arg1: memref<16x128xf32, #tpu.memory_space<vmem>>, %arg2: memref<1x128xf32, #tpu.memory_space<vmem>>, %arg3: memref<1x128xf32, #tpu.memory_space<vmem>>, %arg4: memref<2x1x8xf32, #tpu.memory_space<vmem>>, %arg5: memref<1x128x384xbf16, #tpu.memory_space<vmem>>, %arg6: memref<1x1x384xf32, #tpu.memory_space<vmem>>, %arg7: memref<1x128x128xbf16, #tpu.memory_space<vmem>>, %arg8: memref<1x1x128xf32, #tpu.memory_space<vmem>>, %arg9: memref<1x1x128xf32, #tpu.memory_space<vmem>>, %arg10: memref<1x1x128xf32, #tpu.memory_space<vmem>>, %arg11: memref<1x128x256xbf16, #tpu.memory_space<vmem>>, %arg12: memref<1x1x256xf32, #tpu.memory_space<vmem>>, %arg13: memref<1x256x128xbf16, #tpu.memory_space<vmem>>, %arg14: memref<1x1x128xf32, #tpu.memory_space<vmem>>, %arg15: memref<1x1x128xf32, #tpu.memory_space<vmem>>, %arg16: memref<1x1x128xf32, #tpu.memory_space<vmem>>, %arg17: memref<128x128xbf16, #tpu.memory_space<vmem>>, %arg18: memref<1x128xf32, #tpu.memory_space<vmem>>, %arg19: memref<128x128xbf16, #tpu.memory_space<vmem>>, %arg20: memref<1x128xf32, #tpu.memory_space<vmem>>, %arg21: memref<2x128xf32, #tpu.memory_space<vmem>>, %arg22: memref<2x128xf32, #tpu.memory_space<vmem>>, %arg23: memref<2x1xf32, #tpu.memory_space<vmem>>, %arg24: memref<16x128xf32, #tpu.memory_space<vmem>>) attributes {dimension_semantics = [#tpu.dimension_semantics<arbitrary>], iteration_bounds = array<i64: 2>, scalar_prefetch = 0 : i64, scratch_operands = 1 : i64, tpu.core_type = #tpu.core_type<tc>, window_params = [{pipeline_mode = #tpu.pipeline_mode<synchronous>, transform_indices = @transform_0, window_bounds = array<i64: 16, 128>}, {pipeline_mode = #tpu.pipeline_mode<synchronous>, transform_indices = @transform_1, window_bounds = array<i64: 1, 128>}, {pipeline_mode = #tpu.pipeline_mode<synchronous>, transform_indices = @transform_2, window_bounds = array<i64: 1, 128>}, {pipeline_mode = #tpu.pipeline_mode<synchronous>, transform_indices = @transform_3, window_bounds = array<i64: 2, 1, 8>}, {transform_indices = @transform_4, window_bounds = array<i64: 1, 128, 384>}, {transform_indices = @transform_5, window_bounds = array<i64: 1, 1, 384>}, {transform_indices = @transform_6, window_bounds = array<i64: 1, 128, 128>}, {transform_indices = @transform_7, window_bounds = array<i64: 1, 1, 128>}, {transform_indices = @transform_8, window_bounds = array<i64: 1, 1, 128>}, {transform_indices = @transform_9, window_bounds = array<i64: 1, 1, 128>}, {transform_indices = @transform_10, window_bounds = array<i64: 1, 128, 256>}, {transform_indices = @transform_11, window_bounds = array<i64: 1, 1, 256>}, {transform_indices = @transform_12, window_bounds = array<i64: 1, 256, 128>}, {transform_indices = @transform_13, window_bounds = array<i64: 1, 1, 128>}, {transform_indices = @transform_14, window_bounds = array<i64: 1, 1, 128>}, {transform_indices = @transform_15, window_bounds = array<i64: 1, 1, 128>}, {pipeline_mode = #tpu.pipeline_mode<synchronous>, transform_indices = @transform_16, window_bounds = array<i64: 128, 128>}, {pipeline_mode = #tpu.pipeline_mode<synchronous>, transform_indices = @transform_17, window_bounds = array<i64: 1, 128>}, {pipeline_mode = #tpu.pipeline_mode<synchronous>, transform_indices = @transform_18, window_bounds = array<i64: 128, 128>}, {pipeline_mode = #tpu.pipeline_mode<synchronous>, transform_indices = @transform_19, window_bounds = array<i64: 1, 128>}, {pipeline_mode = #tpu.pipeline_mode<synchronous>, transform_indices = @transform_20, window_bounds = array<i64: 2, 128>}, {pipeline_mode = #tpu.pipeline_mode<synchronous>, transform_indices = @transform_21, window_bounds = array<i64: 2, 128>}, {pipeline_mode = #tpu.pipeline_mode<synchronous>, transform_indices = @transform_22, window_bounds = array<i64: 2, 1>}]} {
    %c0_i32 = arith.constant 0 : i32
    %0 = arith.cmpi eq, %arg0, %c0_i32 : i32
    %1 = arith.extui %0 : i1 to i32
    %c0_i32_0 = arith.constant 0 : i32
    %2 = arith.cmpi ne, %1, %c0_i32_0 : i32
    scf.if %2 {
      %c0_77 = arith.constant 0 : index
      %c0_78 = arith.constant 0 : index
      %212 = vector.load %arg1[%c0_77, %c0_78] : memref<16x128xf32, #tpu.memory_space<vmem>>, vector<16x128xf32>
      %c0_79 = arith.constant 0 : index
      %c0_80 = arith.constant 0 : index
      %213 = vector.load %arg2[%c0_79, %c0_80] : memref<1x128xf32, #tpu.memory_space<vmem>>, vector<1x128xf32>
      %c0_81 = arith.constant 0 : index
      %c0_82 = arith.constant 0 : index
      %214 = vector.load %arg3[%c0_81, %c0_82] : memref<1x128xf32, #tpu.memory_space<vmem>>, vector<1x128xf32>
      %cst_83 = arith.constant dense<0.000000e+00> : vector<16xf32>
      %215 = vector.multi_reduction <add>, %212, %cst_83 [1] : vector<16x128xf32> to vector<16xf32>
      %216 = vector.shape_cast %215 : vector<16xf32> to vector<16x1xf32>
      %cst_84 = arith.constant 1.280000e+02 : f32
      %217 = vector.broadcast %cst_84 : f32 to vector<16x1xf32>
      %218 = arith.divf %216, %217 : vector<16x1xf32>
      %219 = vector.broadcast %218 : vector<16x1xf32> to vector<16x128xf32>
      %220 = arith.subf %212, %219 : vector<16x128xf32>
      %221 = arith.mulf %220, %220 : vector<16x128xf32>
      %cst_85 = arith.constant dense<0.000000e+00> : vector<16xf32>
      %222 = vector.multi_reduction <add>, %221, %cst_85 [1] : vector<16x128xf32> to vector<16xf32>
      %223 = vector.shape_cast %222 : vector<16xf32> to vector<16x1xf32>
      %cst_86 = arith.constant 1.280000e+02 : f32
      %224 = vector.broadcast %cst_86 : f32 to vector<16x1xf32>
      %225 = arith.divf %223, %224 : vector<16x1xf32>
      %226 = vector.broadcast %218 : vector<16x1xf32> to vector<16x128xf32>
      %227 = arith.subf %212, %226 : vector<16x128xf32>
      %cst_87 = arith.constant 9.99999974E-6 : f32
      %228 = vector.broadcast %cst_87 : f32 to vector<16x1xf32>
      %229 = arith.addf %225, %228 : vector<16x1xf32>
      %230 = math.rsqrt %229 : vector<16x1xf32>
      %231 = vector.broadcast %230 : vector<16x1xf32> to vector<16x128xf32>
      %232 = arith.mulf %227, %231 : vector<16x128xf32>
      %233 = vector.broadcast %213 : vector<1x128xf32> to vector<16x128xf32>
      %234 = arith.mulf %232, %233 : vector<16x128xf32>
      %235 = vector.broadcast %214 : vector<1x128xf32> to vector<16x128xf32>
      %236 = arith.addf %234, %235 : vector<16x128xf32>
      %c0_88 = arith.constant 0 : index
      %c0_89 = arith.constant 0 : index
      %237 = vector.load %arg24[%c0_88, %c0_89] : memref<16x128xf32, #tpu.memory_space<vmem>>, vector<16x128xf32>
      tpu.vector_store %arg24[%c0_88, %c0_89], %236 {strides = array<i32>} : memref<16x128xf32, #tpu.memory_space<vmem>>, vector<16x128xf32>,
    } else {
    }
    %c0 = arith.constant 0 : index
    %c0_1 = arith.constant 0 : index
    %3 = vector.load %arg24[%c0, %c0_1] : memref<16x128xf32, #tpu.memory_space<vmem>>, vector<16x128xf32>
    %c0_2 = arith.constant 0 : index
    %c0_3 = arith.constant 0 : index
    %c0_4 = arith.constant 0 : index
    %4 = vector.load %arg5[%c0_2, %c0_3, %c0_4] : memref<1x128x384xbf16, #tpu.memory_space<vmem>>, vector<1x128x384xbf16>
    %5 = vector.shape_cast %4 : vector<1x128x384xbf16> to vector<128x384xbf16>
    %6 = arith.truncf %3 : vector<16x128xf32> to vector<16x128xbf16>
    %cst = arith.constant dense<0.000000e+00> : vector<16x384xf32>
    %7 = tpu.matmul %6, %5, %cst {dimension_numbers = #tpu.dot_dimension_numbers<[1], [0], [0], [1], [0, 0, 1, 1], [], []>} : vector<16x128xbf16>, vector<128x384xbf16>, vector<16x384xf32> -> vector<16x384xf32>
    %c0_5 = arith.constant 0 : index
    %c0_6 = arith.constant 0 : index
    %c0_7 = arith.constant 0 : index
    %8 = vector.load %arg6[%c0_5, %c0_6, %c0_7] : memref<1x1x384xf32, #tpu.memory_space<vmem>>, vector<1x1x384xf32>
    %9 = vector.shape_cast %8 : vector<1x1x384xf32> to vector<1x384xf32>
    %10 = vector.broadcast %9 : vector<1x384xf32> to vector<16x384xf32>
    %11 = arith.addf %7, %10 : vector<16x384xf32>
    %12 = vector.extract_strided_slice %11 {offsets = [0, 0], sizes = [16, 128], strides = [1, 1]} : vector<16x384xf32> to vector<16x128xf32>
    %13 = vector.extract_strided_slice %11 {offsets = [0, 128], sizes = [16, 128], strides = [1, 1]} : vector<16x384xf32> to vector<16x128xf32>
    %14 = vector.extract_strided_slice %11 {offsets = [0, 256], sizes = [16, 128], strides = [1, 1]} : vector<16x384xf32> to vector<16x128xf32>
    %c0_8 = arith.constant 0 : index
    %c0_9 = arith.constant 0 : index
    %c0_10 = arith.constant 0 : index
    %15 = vector.load %arg4[%c0_8, %c0_9, %c0_10] : memref<2x1x8xf32, #tpu.memory_space<vmem>>, vector<2x1x8xf32>
    %16 = vector.extract_strided_slice %12 {offsets = [0, 0], sizes = [16, 32], strides = [1, 1]} : vector<16x128xf32> to vector<16x32xf32>
    %17 = vector.shape_cast %16 : vector<16x32xf32> to vector<2x8x32xf32>
    %18 = arith.truncf %17 : vector<2x8x32xf32> to vector<2x8x32xbf16>
    %19 = vector.extract_strided_slice %13 {offsets = [0, 0], sizes = [16, 32], strides = [1, 1]} : vector<16x128xf32> to vector<16x32xf32>
    %20 = vector.shape_cast %19 : vector<16x32xf32> to vector<2x8x32xf32>
    %21 = arith.truncf %20 : vector<2x8x32xf32> to vector<2x8x32xbf16>
    %22 = vector.extract_strided_slice %14 {offsets = [0, 0], sizes = [16, 32], strides = [1, 1]} : vector<16x128xf32> to vector<16x32xf32>
    %23 = vector.shape_cast %22 : vector<16x32xf32> to vector<2x8x32xf32>
    %24 = arith.truncf %23 : vector<2x8x32xf32> to vector<2x8x32xbf16>
    "tpu.trace_start"() <{level = 10 : i32, message = "bqd,bkd->bqk"}> : () -> ()
    %cst_11 = arith.constant dense<0.000000e+00> : vector<2x8x8xf32>
    %25 = tpu.matmul %18, %21, %cst_11 {dimension_numbers = #tpu.dot_dimension_numbers<[2], [2], [1], [1], [0, 0, 0, 1, 1, 1], [0], [0]>} : vector<2x8x32xbf16>, vector<2x8x32xbf16>, vector<2x8x8xf32> -> vector<2x8x8xf32>
    "tpu.trace_stop"() : () -> ()
    %26 = vector.broadcast %15 : vector<2x1x8xf32> to vector<2x8x8xf32>
    %27 = arith.addf %25, %26 : vector<2x8x8xf32>
    %cst_12 = arith.constant dense<0xFF800000> : vector<2x8xf32>
    %28 = vector.multi_reduction <maximumf>, %27, %cst_12 [2] : vector<2x8x8xf32> to vector<2x8xf32>
    %29 = vector.shape_cast %28 : vector<2x8xf32> to vector<2x8x1xf32>
    %30 = vector.broadcast %29 : vector<2x8x1xf32> to vector<2x8x8xf32>
    %31 = arith.subf %27, %30 : vector<2x8x8xf32>
    %32 = math.exp %31 : vector<2x8x8xf32>
    %cst_13 = arith.constant dense<0.000000e+00> : vector<2x8xf32>
    %33 = vector.multi_reduction <add>, %32, %cst_13 [2] : vector<2x8x8xf32> to vector<2x8xf32>
    %34 = vector.shape_cast %33 : vector<2x8xf32> to vector<2x8x1xf32>
    %35 = tpu.reciprocal %34 {approx = true} : vector<2x8x1xf32> -> vector<2x8x1xf32>
    %36 = vector.broadcast %35 : vector<2x8x1xf32> to vector<2x8x8xf32>
    %37 = arith.mulf %32, %36 : vector<2x8x8xf32>
    %38 = arith.truncf %37 : vector<2x8x8xf32> to vector<2x8x8xbf16>
    "tpu.trace_start"() <{level = 10 : i32, message = "bqk,bkd->bqd"}> : () -> ()
    %cst_14 = arith.constant dense<0.000000e+00> : vector<2x8x32xf32>
    %39 = tpu.matmul %38, %24, %cst_14 {dimension_numbers = #tpu.dot_dimension_numbers<[2], [1], [1], [2], [0, 0, 0, 1, 1, 2], [0], [0]>} : vector<2x8x8xbf16>, vector<2x8x32xbf16>, vector<2x8x32xf32> -> vector<2x8x32xf32>
    "tpu.trace_stop"() : () -> ()
    %40 = vector.shape_cast %39 : vector<2x8x32xf32> to vector<16x32xf32>
    %41 = vector.extract_strided_slice %12 {offsets = [0, 32], sizes = [16, 32], strides = [1, 1]} : vector<16x128xf32> to vector<16x32xf32>
    %42 = vector.shape_cast %41 : vector<16x32xf32> to vector<2x8x32xf32>
    %43 = arith.truncf %42 : vector<2x8x32xf32> to vector<2x8x32xbf16>
    %44 = vector.extract_strided_slice %13 {offsets = [0, 32], sizes = [16, 32], strides = [1, 1]} : vector<16x128xf32> to vector<16x32xf32>
    %45 = vector.shape_cast %44 : vector<16x32xf32> to vector<2x8x32xf32>
    %46 = arith.truncf %45 : vector<2x8x32xf32> to vector<2x8x32xbf16>
    %47 = vector.extract_strided_slice %14 {offsets = [0, 32], sizes = [16, 32], strides = [1, 1]} : vector<16x128xf32> to vector<16x32xf32>
    %48 = vector.shape_cast %47 : vector<16x32xf32> to vector<2x8x32xf32>
    %49 = arith.truncf %48 : vector<2x8x32xf32> to vector<2x8x32xbf16>
    "tpu.trace_start"() <{level = 10 : i32, message = "bqd,bkd->bqk"}> : () -> ()
    %cst_15 = arith.constant dense<0.000000e+00> : vector<2x8x8xf32>
    %50 = tpu.matmul %43, %46, %cst_15 {dimension_numbers = #tpu.dot_dimension_numbers<[2], [2], [1], [1], [0, 0, 0, 1, 1, 1], [0], [0]>} : vector<2x8x32xbf16>, vector<2x8x32xbf16>, vector<2x8x8xf32> -> vector<2x8x8xf32>
    "tpu.trace_stop"() : () -> ()
    %51 = vector.broadcast %15 : vector<2x1x8xf32> to vector<2x8x8xf32>
    %52 = arith.addf %50, %51 : vector<2x8x8xf32>
    %cst_16 = arith.constant dense<0xFF800000> : vector<2x8xf32>
    %53 = vector.multi_reduction <maximumf>, %52, %cst_16 [2] : vector<2x8x8xf32> to vector<2x8xf32>
    %54 = vector.shape_cast %53 : vector<2x8xf32> to vector<2x8x1xf32>
    %55 = vector.broadcast %54 : vector<2x8x1xf32> to vector<2x8x8xf32>
    %56 = arith.subf %52, %55 : vector<2x8x8xf32>
    %57 = math.exp %56 : vector<2x8x8xf32>
    %cst_17 = arith.constant dense<0.000000e+00> : vector<2x8xf32>
    %58 = vector.multi_reduction <add>, %57, %cst_17 [2] : vector<2x8x8xf32> to vector<2x8xf32>
    %59 = vector.shape_cast %58 : vector<2x8xf32> to vector<2x8x1xf32>
    %60 = tpu.reciprocal %59 {approx = true} : vector<2x8x1xf32> -> vector<2x8x1xf32>
    %61 = vector.broadcast %60 : vector<2x8x1xf32> to vector<2x8x8xf32>
    %62 = arith.mulf %57, %61 : vector<2x8x8xf32>
    %63 = arith.truncf %62 : vector<2x8x8xf32> to vector<2x8x8xbf16>
    "tpu.trace_start"() <{level = 10 : i32, message = "bqk,bkd->bqd"}> : () -> ()
    %cst_18 = arith.constant dense<0.000000e+00> : vector<2x8x32xf32>
    %64 = tpu.matmul %63, %49, %cst_18 {dimension_numbers = #tpu.dot_dimension_numbers<[2], [1], [1], [2], [0, 0, 0, 1, 1, 2], [0], [0]>} : vector<2x8x8xbf16>, vector<2x8x32xbf16>, vector<2x8x32xf32> -> vector<2x8x32xf32>
    "tpu.trace_stop"() : () -> ()
    %65 = vector.shape_cast %64 : vector<2x8x32xf32> to vector<16x32xf32>
    %66 = vector.extract_strided_slice %12 {offsets = [0, 64], sizes = [16, 32], strides = [1, 1]} : vector<16x128xf32> to vector<16x32xf32>
    %67 = vector.shape_cast %66 : vector<16x32xf32> to vector<2x8x32xf32>
    %68 = arith.truncf %67 : vector<2x8x32xf32> to vector<2x8x32xbf16>
    %69 = vector.extract_strided_slice %13 {offsets = [0, 64], sizes = [16, 32], strides = [1, 1]} : vector<16x128xf32> to vector<16x32xf32>
    %70 = vector.shape_cast %69 : vector<16x32xf32> to vector<2x8x32xf32>
    %71 = arith.truncf %70 : vector<2x8x32xf32> to vector<2x8x32xbf16>
    %72 = vector.extract_strided_slice %14 {offsets = [0, 64], sizes = [16, 32], strides = [1, 1]} : vector<16x128xf32> to vector<16x32xf32>
    %73 = vector.shape_cast %72 : vector<16x32xf32> to vector<2x8x32xf32>
    %74 = arith.truncf %73 : vector<2x8x32xf32> to vector<2x8x32xbf16>
    "tpu.trace_start"() <{level = 10 : i32, message = "bqd,bkd->bqk"}> : () -> ()
    %cst_19 = arith.constant dense<0.000000e+00> : vector<2x8x8xf32>
    %75 = tpu.matmul %68, %71, %cst_19 {dimension_numbers = #tpu.dot_dimension_numbers<[2], [2], [1], [1], [0, 0, 0, 1, 1, 1], [0], [0]>} : vector<2x8x32xbf16>, vector<2x8x32xbf16>, vector<2x8x8xf32> -> vector<2x8x8xf32>
    "tpu.trace_stop"() : () -> ()
    %76 = vector.broadcast %15 : vector<2x1x8xf32> to vector<2x8x8xf32>
    %77 = arith.addf %75, %76 : vector<2x8x8xf32>
    %cst_20 = arith.constant dense<0xFF800000> : vector<2x8xf32>
    %78 = vector.multi_reduction <maximumf>, %77, %cst_20 [2] : vector<2x8x8xf32> to vector<2x8xf32>
    %79 = vector.shape_cast %78 : vector<2x8xf32> to vector<2x8x1xf32>
    %80 = vector.broadcast %79 : vector<2x8x1xf32> to vector<2x8x8xf32>
    %81 = arith.subf %77, %80 : vector<2x8x8xf32>
    %82 = math.exp %81 : vector<2x8x8xf32>
    %cst_21 = arith.constant dense<0.000000e+00> : vector<2x8xf32>
    %83 = vector.multi_reduction <add>, %82, %cst_21 [2] : vector<2x8x8xf32> to vector<2x8xf32>
    %84 = vector.shape_cast %83 : vector<2x8xf32> to vector<2x8x1xf32>
    %85 = tpu.reciprocal %84 {approx = true} : vector<2x8x1xf32> -> vector<2x8x1xf32>
    %86 = vector.broadcast %85 : vector<2x8x1xf32> to vector<2x8x8xf32>
    %87 = arith.mulf %82, %86 : vector<2x8x8xf32>
    %88 = arith.truncf %87 : vector<2x8x8xf32> to vector<2x8x8xbf16>
    "tpu.trace_start"() <{level = 10 : i32, message = "bqk,bkd->bqd"}> : () -> ()
    %cst_22 = arith.constant dense<0.000000e+00> : vector<2x8x32xf32>
    %89 = tpu.matmul %88, %74, %cst_22 {dimension_numbers = #tpu.dot_dimension_numbers<[2], [1], [1], [2], [0, 0, 0, 1, 1, 2], [0], [0]>} : vector<2x8x8xbf16>, vector<2x8x32xbf16>, vector<2x8x32xf32> -> vector<2x8x32xf32>
    "tpu.trace_stop"() : () -> ()
    %90 = vector.shape_cast %89 : vector<2x8x32xf32> to vector<16x32xf32>
    %91 = vector.extract_strided_slice %12 {offsets = [0, 96], sizes = [16, 32], strides = [1, 1]} : vector<16x128xf32> to vector<16x32xf32>
    %92 = vector.shape_cast %91 : vector<16x32xf32> to vector<2x8x32xf32>
    %93 = arith.truncf %92 : vector<2x8x32xf32> to vector<2x8x32xbf16>
    %94 = vector.extract_strided_slice %13 {offsets = [0, 96], sizes = [16, 32], strides = [1, 1]} : vector<16x128xf32> to vector<16x32xf32>
    %95 = vector.shape_cast %94 : vector<16x32xf32> to vector<2x8x32xf32>
    %96 = arith.truncf %95 : vector<2x8x32xf32> to vector<2x8x32xbf16>
    %97 = vector.extract_strided_slice %14 {offsets = [0, 96], sizes = [16, 32], strides = [1, 1]} : vector<16x128xf32> to vector<16x32xf32>
    %98 = vector.shape_cast %97 : vector<16x32xf32> to vector<2x8x32xf32>
    %99 = arith.truncf %98 : vector<2x8x32xf32> to vector<2x8x32xbf16>
    "tpu.trace_start"() <{level = 10 : i32, message = "bqd,bkd->bqk"}> : () -> ()
    %cst_23 = arith.constant dense<0.000000e+00> : vector<2x8x8xf32>
    %100 = tpu.matmul %93, %96, %cst_23 {dimension_numbers = #tpu.dot_dimension_numbers<[2], [2], [1], [1], [0, 0, 0, 1, 1, 1], [0], [0]>} : vector<2x8x32xbf16>, vector<2x8x32xbf16>, vector<2x8x8xf32> -> vector<2x8x8xf32>
    "tpu.trace_stop"() : () -> ()
    %101 = vector.broadcast %15 : vector<2x1x8xf32> to vector<2x8x8xf32>
    %102 = arith.addf %100, %101 : vector<2x8x8xf32>
    %cst_24 = arith.constant dense<0xFF800000> : vector<2x8xf32>
    %103 = vector.multi_reduction <maximumf>, %102, %cst_24 [2] : vector<2x8x8xf32> to vector<2x8xf32>
    %104 = vector.shape_cast %103 : vector<2x8xf32> to vector<2x8x1xf32>
    %105 = vector.broadcast %104 : vector<2x8x1xf32> to vector<2x8x8xf32>
    %106 = arith.subf %102, %105 : vector<2x8x8xf32>
    %107 = math.exp %106 : vector<2x8x8xf32>
    %cst_25 = arith.constant dense<0.000000e+00> : vector<2x8xf32>
    %108 = vector.multi_reduction <add>, %107, %cst_25 [2] : vector<2x8x8xf32> to vector<2x8xf32>
    %109 = vector.shape_cast %108 : vector<2x8xf32> to vector<2x8x1xf32>
    %110 = tpu.reciprocal %109 {approx = true} : vector<2x8x1xf32> -> vector<2x8x1xf32>
    %111 = vector.broadcast %110 : vector<2x8x1xf32> to vector<2x8x8xf32>
    %112 = arith.mulf %107, %111 : vector<2x8x8xf32>
    %113 = arith.truncf %112 : vector<2x8x8xf32> to vector<2x8x8xbf16>
    "tpu.trace_start"() <{level = 10 : i32, message = "bqk,bkd->bqd"}> : () -> ()
    %cst_26 = arith.constant dense<0.000000e+00> : vector<2x8x32xf32>
    %114 = tpu.matmul %113, %99, %cst_26 {dimension_numbers = #tpu.dot_dimension_numbers<[2], [1], [1], [2], [0, 0, 0, 1, 1, 2], [0], [0]>} : vector<2x8x8xbf16>, vector<2x8x32xbf16>, vector<2x8x32xf32> -> vector<2x8x32xf32>
    "tpu.trace_stop"() : () -> ()
    %115 = vector.shape_cast %114 : vector<2x8x32xf32> to vector<16x32xf32>
    %116 = tpu.concatenate %40, %65, %90, %115 in 1 : vector<16x32xf32>, vector<16x32xf32>, vector<16x32xf32>, vector<16x32xf32> -> vector<16x128xf32>
    %c0_27 = arith.constant 0 : index
    %c0_28 = arith.constant 0 : index
    %c0_29 = arith.constant 0 : index
    %117 = vector.load %arg7[%c0_27, %c0_28, %c0_29] : memref<1x128x128xbf16, #tpu.memory_space<vmem>>, vector<1x128x128xbf16>
    %118 = vector.shape_cast %117 : vector<1x128x128xbf16> to vector<128x128xbf16>
    %119 = arith.truncf %116 : vector<16x128xf32> to vector<16x128xbf16>
    %cst_30 = arith.constant dense<0.000000e+00> : vector<16x128xf32>
    %120 = tpu.matmul %119, %118, %cst_30 {dimension_numbers = #tpu.dot_dimension_numbers<[1], [0], [0], [1], [0, 0, 1, 1], [], []>} : vector<16x128xbf16>, vector<128x128xbf16>, vector<16x128xf32> -> vector<16x128xf32>
    %c0_31 = arith.constant 0 : index
    %c0_32 = arith.constant 0 : index
    %c0_33 = arith.constant 0 : index
    %121 = vector.load %arg8[%c0_31, %c0_32, %c0_33] : memref<1x1x128xf32, #tpu.memory_space<vmem>>, vector<1x1x128xf32>
    %122 = vector.shape_cast %121 : vector<1x1x128xf32> to vector<1x128xf32>
    %123 = vector.broadcast %122 : vector<1x128xf32> to vector<16x128xf32>
    %124 = arith.addf %120, %123 : vector<16x128xf32>
    %125 = arith.addf %3, %124 : vector<16x128xf32>
    %c0_34 = arith.constant 0 : index
    %c0_35 = arith.constant 0 : index
    %c0_36 = arith.constant 0 : index
    %126 = vector.load %arg9[%c0_34, %c0_35, %c0_36] : memref<1x1x128xf32, #tpu.memory_space<vmem>>, vector<1x1x128xf32>
    %127 = vector.shape_cast %126 : vector<1x1x128xf32> to vector<1x128xf32>
    %c0_37 = arith.constant 0 : index
    %c0_38 = arith.constant 0 : index
    %c0_39 = arith.constant 0 : index
    %128 = vector.load %arg10[%c0_37, %c0_38, %c0_39] : memref<1x1x128xf32, #tpu.memory_space<vmem>>, vector<1x1x128xf32>
    %129 = vector.shape_cast %128 : vector<1x1x128xf32> to vector<1x128xf32>
    %cst_40 = arith.constant dense<0.000000e+00> : vector<16xf32>
    %130 = vector.multi_reduction <add>, %125, %cst_40 [1] : vector<16x128xf32> to vector<16xf32>
    %131 = vector.shape_cast %130 : vector<16xf32> to vector<16x1xf32>
    %cst_41 = arith.constant 1.280000e+02 : f32
    %132 = vector.broadcast %cst_41 : f32 to vector<16x1xf32>
    %133 = arith.divf %131, %132 : vector<16x1xf32>
    %134 = vector.broadcast %133 : vector<16x1xf32> to vector<16x128xf32>
    %135 = arith.subf %125, %134 : vector<16x128xf32>
    %136 = arith.mulf %135, %135 : vector<16x128xf32>
    %cst_42 = arith.constant dense<0.000000e+00> : vector<16xf32>
    %137 = vector.multi_reduction <add>, %136, %cst_42 [1] : vector<16x128xf32> to vector<16xf32>
    %138 = vector.shape_cast %137 : vector<16xf32> to vector<16x1xf32>
    %cst_43 = arith.constant 1.280000e+02 : f32
    %139 = vector.broadcast %cst_43 : f32 to vector<16x1xf32>
    %140 = arith.divf %138, %139 : vector<16x1xf32>
    %141 = vector.broadcast %133 : vector<16x1xf32> to vector<16x128xf32>
    %142 = arith.subf %125, %141 : vector<16x128xf32>
    %cst_44 = arith.constant 9.99999974E-6 : f32
    %143 = vector.broadcast %cst_44 : f32 to vector<16x1xf32>
    %144 = arith.addf %140, %143 : vector<16x1xf32>
    %145 = math.rsqrt %144 : vector<16x1xf32>
    %146 = vector.broadcast %145 : vector<16x1xf32> to vector<16x128xf32>
    %147 = arith.mulf %142, %146 : vector<16x128xf32>
    %148 = vector.broadcast %127 : vector<1x128xf32> to vector<16x128xf32>
    %149 = arith.mulf %147, %148 : vector<16x128xf32>
    %150 = vector.broadcast %129 : vector<1x128xf32> to vector<16x128xf32>
    %151 = arith.addf %149, %150 : vector<16x128xf32>
    %c0_45 = arith.constant 0 : index
    %c0_46 = arith.constant 0 : index
    %c0_47 = arith.constant 0 : index
    %152 = vector.load %arg11[%c0_45, %c0_46, %c0_47] : memref<1x128x256xbf16, #tpu.memory_space<vmem>>, vector<1x128x256xbf16>
    %153 = vector.shape_cast %152 : vector<1x128x256xbf16> to vector<128x256xbf16>
    %154 = arith.truncf %151 : vector<16x128xf32> to vector<16x128xbf16>
    %cst_48 = arith.constant dense<0.000000e+00> : vector<16x256xf32>
    %155 = tpu.matmul %154, %153, %cst_48 {dimension_numbers = #tpu.dot_dimension_numbers<[1], [0], [0], [1], [0, 0, 1, 1], [], []>} : vector<16x128xbf16>, vector<128x256xbf16>, vector<16x256xf32> -> vector<16x256xf32>
    %c0_49 = arith.constant 0 : index
    %c0_50 = arith.constant 0 : index
    %c0_51 = arith.constant 0 : index
    %156 = vector.load %arg12[%c0_49, %c0_50, %c0_51] : memref<1x1x256xf32, #tpu.memory_space<vmem>>, vector<1x1x256xf32>
    %157 = vector.shape_cast %156 : vector<1x1x256xf32> to vector<1x256xf32>
    %158 = vector.broadcast %157 : vector<1x256xf32> to vector<16x256xf32>
    %159 = arith.addf %155, %158 : vector<16x256xf32>
    %cst_52 = arith.constant 5.000000e-01 : f32
    %160 = vector.broadcast %cst_52 : f32 to vector<16x256xf32>
    %161 = arith.mulf %160, %159 : vector<16x256xf32>
    %cst_53 = arith.constant 4.471500e-02 : f32
    %162 = vector.broadcast %cst_53 : f32 to vector<16x256xf32>
    %163 = arith.mulf %162, %159 : vector<16x256xf32>
    %164 = arith.mulf %163, %159 : vector<16x256xf32>
    %165 = arith.mulf %164, %159 : vector<16x256xf32>
    %166 = arith.addf %159, %165 : vector<16x256xf32>
    %cst_54 = arith.constant 0.797884583 : f32
    %167 = vector.broadcast %cst_54 : f32 to vector<16x256xf32>
    %168 = arith.mulf %167, %166 : vector<16x256xf32>
    %169 = math.tanh %168 : vector<16x256xf32>
    %cst_55 = arith.constant 1.000000e+00 : f32
    %170 = vector.broadcast %cst_55 : f32 to vector<16x256xf32>
    %171 = arith.addf %170, %169 : vector<16x256xf32>
    %172 = arith.mulf %161, %171 : vector<16x256xf32>
    %c0_56 = arith.constant 0 : index
    %c0_57 = arith.constant 0 : index
    %c0_58 = arith.constant 0 : index
    %173 = vector.load %arg13[%c0_56, %c0_57, %c0_58] : memref<1x256x128xbf16, #tpu.memory_space<vmem>>, vector<1x256x128xbf16>
    %174 = vector.shape_cast %173 : vector<1x256x128xbf16> to vector<256x128xbf16>
    %175 = arith.truncf %172 : vector<16x256xf32> to vector<16x256xbf16>
    %cst_59 = arith.constant dense<0.000000e+00> : vector<16x128xf32>
    %176 = tpu.matmul %175, %174, %cst_59 {dimension_numbers = #tpu.dot_dimension_numbers<[1], [0], [0], [1], [0, 0, 1, 1], [], []>} : vector<16x256xbf16>, vector<256x128xbf16>, vector<16x128xf32> -> vector<16x128xf32>
    %c0_60 = arith.constant 0 : index
    %c0_61 = arith.constant 0 : index
    %c0_62 = arith.constant 0 : index
    %177 = vector.load %arg14[%c0_60, %c0_61, %c0_62] : memref<1x1x128xf32, #tpu.memory_space<vmem>>, vector<1x1x128xf32>
    %178 = vector.shape_cast %177 : vector<1x1x128xf32> to vector<1x128xf32>
    %179 = vector.broadcast %178 : vector<1x128xf32> to vector<16x128xf32>
    %180 = arith.addf %176, %179 : vector<16x128xf32>
    %181 = arith.addf %151, %180 : vector<16x128xf32>
    %c0_63 = arith.constant 0 : index
    %c0_64 = arith.constant 0 : index
    %c0_65 = arith.constant 0 : index
    %182 = vector.load %arg15[%c0_63, %c0_64, %c0_65] : memref<1x1x128xf32, #tpu.memory_space<vmem>>, vector<1x1x128xf32>
    %183 = vector.shape_cast %182 : vector<1x1x128xf32> to vector<1x128xf32>
    %c0_66 = arith.constant 0 : index
    %c0_67 = arith.constant 0 : index
    %c0_68 = arith.constant 0 : index
    %184 = vector.load %arg16[%c0_66, %c0_67, %c0_68] : memref<1x1x128xf32, #tpu.memory_space<vmem>>, vector<1x1x128xf32>
    %185 = vector.shape_cast %184 : vector<1x1x128xf32> to vector<1x128xf32>
    %cst_69 = arith.constant dense<0.000000e+00> : vector<16xf32>
    %186 = vector.multi_reduction <add>, %181, %cst_69 [1] : vector<16x128xf32> to vector<16xf32>
    %187 = vector.shape_cast %186 : vector<16xf32> to vector<16x1xf32>
    %cst_70 = arith.constant 1.280000e+02 : f32
    %188 = vector.broadcast %cst_70 : f32 to vector<16x1xf32>
    %189 = arith.divf %187, %188 : vector<16x1xf32>
    %190 = vector.broadcast %189 : vector<16x1xf32> to vector<16x128xf32>
    %191 = arith.subf %181, %190 : vector<16x128xf32>
    %192 = arith.mulf %191, %191 : vector<16x128xf32>
    %cst_71 = arith.constant dense<0.000000e+00> : vector<16xf32>
    %193 = vector.multi_reduction <add>, %192, %cst_71 [1] : vector<16x128xf32> to vector<16xf32>
    %194 = vector.shape_cast %193 : vector<16xf32> to vector<16x1xf32>
    %cst_72 = arith.constant 1.280000e+02 : f32
    %195 = vector.broadcast %cst_72 : f32 to vector<16x1xf32>
    %196 = arith.divf %194, %195 : vector<16x1xf32>
    %197 = vector.broadcast %189 : vector<16x1xf32> to vector<16x128xf32>
    %198 = arith.subf %181, %197 : vector<16x128xf32>
    %cst_73 = arith.constant 9.99999974E-6 : f32
    %199 = vector.broadcast %cst_73 : f32 to vector<16x1xf32>
    %200 = arith.addf %196, %199 : vector<16x1xf32>
    %201 = math.rsqrt %200 : vector<16x1xf32>
    %202 = vector.broadcast %201 : vector<16x1xf32> to vector<16x128xf32>
    %203 = arith.mulf %198, %202 : vector<16x128xf32>
    %204 = vector.broadcast %183 : vector<1x128xf32> to vector<16x128xf32>
    %205 = arith.mulf %203, %204 : vector<16x128xf32>
    %206 = vector.broadcast %185 : vector<1x128xf32> to vector<16x128xf32>
    %207 = arith.addf %205, %206 : vector<16x128xf32>
    %c0_74 = arith.constant 0 : index
    %c0_75 = arith.constant 0 : index
    %208 = vector.load %arg24[%c0_74, %c0_75] : memref<16x128xf32, #tpu.memory_space<vmem>>, vector<16x128xf32>
    tpu.vector_store %arg24[%c0_74, %c0_75], %207 {strides = array<i32>} : memref<16x128xf32, #tpu.memory_space<vmem>>, vector<16x128xf32>,
    %c1_i32 = arith.constant 1 : i32
    %209 = arith.cmpi eq, %arg0, %c1_i32 : i32
    %210 = arith.extui %209 : i1 to i32
    %c0_i32_76 = arith.constant 0 : i32
    %211 = arith.cmpi ne, %210, %c0_i32_76 : i32
    scf.if %211 {
      %212 = vector.extract_strided_slice %207 {offsets = [0, 0], sizes = [1, 128], strides = [1, 1]} : vector<16x128xf32> to vector<1x128xf32>
      %213 = vector.extract_strided_slice %207 {offsets = [8, 0], sizes = [1, 128], strides = [1, 1]} : vector<16x128xf32> to vector<1x128xf32>
      %214 = tpu.concatenate %212, %213 in 0 : vector<1x128xf32>, vector<1x128xf32> -> vector<2x128xf32>
      %c0_77 = arith.constant 0 : index
      %c0_78 = arith.constant 0 : index
      %215 = vector.load %arg17[%c0_77, %c0_78] : memref<128x128xbf16, #tpu.memory_space<vmem>>, vector<128x128xbf16>
      %216 = arith.truncf %214 : vector<2x128xf32> to vector<2x128xbf16>
      %cst_79 = arith.constant dense<0.000000e+00> : vector<2x128xf32>
      %217 = tpu.matmul %216, %215, %cst_79 {dimension_numbers = #tpu.dot_dimension_numbers<[1], [0], [0], [1], [0, 0, 1, 1], [], []>} : vector<2x128xbf16>, vector<128x128xbf16>, vector<2x128xf32> -> vector<2x128xf32>
      %c0_80 = arith.constant 0 : index
      %c0_81 = arith.constant 0 : index
      %218 = vector.load %arg18[%c0_80, %c0_81] : memref<1x128xf32, #tpu.memory_space<vmem>>, vector<1x128xf32>
      %219 = vector.broadcast %218 : vector<1x128xf32> to vector<2x128xf32>
      %220 = arith.addf %217, %219 : vector<2x128xf32>
      %221 = math.tanh %220 : vector<2x128xf32>
      %c0_82 = arith.constant 0 : index
      %c0_83 = arith.constant 0 : index
      %222 = vector.load %arg19[%c0_82, %c0_83] : memref<128x128xbf16, #tpu.memory_space<vmem>>, vector<128x128xbf16>
      %223 = arith.truncf %221 : vector<2x128xf32> to vector<2x128xbf16>
      %cst_84 = arith.constant dense<0.000000e+00> : vector<2x128xf32>
      %224 = tpu.matmul %223, %222, %cst_84 {dimension_numbers = #tpu.dot_dimension_numbers<[1], [0], [0], [1], [0, 0, 1, 1], [], []>} : vector<2x128xbf16>, vector<128x128xbf16>, vector<2x128xf32> -> vector<2x128xf32>
      %c0_85 = arith.constant 0 : index
      %c0_86 = arith.constant 0 : index
      %225 = vector.load %arg20[%c0_85, %c0_86] : memref<1x128xf32, #tpu.memory_space<vmem>>, vector<1x128xf32>
      %226 = vector.broadcast %225 : vector<1x128xf32> to vector<2x128xf32>
      %227 = arith.addf %224, %226 : vector<2x128xf32>
      %c0_87 = arith.constant 0 : index
      %c0_88 = arith.constant 0 : index
      %228 = vector.load %arg22[%c0_87, %c0_88] : memref<2x128xf32, #tpu.memory_space<vmem>>, vector<2x128xf32>
      tpu.vector_store %arg22[%c0_87, %c0_88], %227 {strides = array<i32>} : memref<2x128xf32, #tpu.memory_space<vmem>>, vector<2x128xf32>,
      %cst_89 = arith.constant dense<0xFF800000> : vector<2xf32>
      %229 = vector.multi_reduction <maximumf>, %227, %cst_89 [1] : vector<2x128xf32> to vector<2xf32>
      %230 = vector.shape_cast %229 : vector<2xf32> to vector<2x1xf32>
      %231 = vector.broadcast %230 : vector<2x1xf32> to vector<2x128xf32>
      %232 = arith.subf %227, %231 : vector<2x128xf32>
      %233 = math.exp %232 : vector<2x128xf32>
      %cst_90 = arith.constant dense<0.000000e+00> : vector<2xf32>
      %234 = vector.multi_reduction <add>, %233, %cst_90 [1] : vector<2x128xf32> to vector<2xf32>
      %235 = vector.shape_cast %234 : vector<2xf32> to vector<2x1xf32>
      %236 = math.log %235 : vector<2x1xf32>
      %237 = arith.addf %236, %230 : vector<2x1xf32>
      %c0_91 = arith.constant 0 : index
      %c0_92 = arith.constant 0 : index
      %238 = vector.load %arg21[%c0_91, %c0_92] : memref<2x128xf32, #tpu.memory_space<vmem>>, vector<2x128xf32>
      %239 = arith.mulf %227, %238 : vector<2x128xf32>
      %cst_93 = arith.constant dense<0.000000e+00> : vector<2xf32>
      %240 = vector.multi_reduction <add>, %239, %cst_93 [1] : vector<2x128xf32> to vector<2xf32>
      %241 = vector.shape_cast %240 : vector<2xf32> to vector<2x1xf32>
      %242 = arith.subf %237, %241 : vector<2x1xf32>
      %c0_94 = arith.constant 0 : index
      %c0_95 = arith.constant 0 : index
      %243 = vector.load %arg23[%c0_94, %c0_95] : memref<2x1xf32, #tpu.memory_space<vmem>>, vector<2x1xf32>
      tpu.vector_store %arg23[%c0_94, %c0_95], %242 {strides = array<i32>} : memref<2x1xf32, #tpu.memory_space<vmem>>, vector<2x1xf32>,
    } else {
    }
    return
  }
  func.func @transform_0(%arg0: i32) -> (i32, i32) {
    %c0_i32 = arith.constant 0 : i32
    %c0_i32_0 = arith.constant 0 : i32
    %c0_i32_1 = arith.constant 0 : i32
    return %c0_i32, %c0_i32_0 : i32, i32
  }
  func.func @transform_1(%arg0: i32) -> (i32, i32) {
    %c0_i32 = arith.constant 0 : i32
    %c0_i32_0 = arith.constant 0 : i32
    %c0_i32_1 = arith.constant 0 : i32
    return %c0_i32, %c0_i32_0 : i32, i32
  }
  func.func @transform_2(%arg0: i32) -> (i32, i32) {
    %c0_i32 = arith.constant 0 : i32
    %c0_i32_0 = arith.constant 0 : i32
    %c0_i32_1 = arith.constant 0 : i32
    return %c0_i32, %c0_i32_0 : i32, i32
  }
  func.func @transform_3(%arg0: i32) -> (i32, i32, i32) {
    %c0_i32 = arith.constant 0 : i32
    %c0_i32_0 = arith.constant 0 : i32
    %c0_i32_1 = arith.constant 0 : i32
    %c0_i32_2 = arith.constant 0 : i32
    return %c0_i32, %c0_i32_0, %c0_i32_1 : i32, i32, i32
  }
  func.func @transform_4(%arg0: i32) -> (i32, i32, i32) {
    %c0_i32 = arith.constant 0 : i32
    %c0_i32_0 = arith.constant 0 : i32
    %c0_i32_1 = arith.constant 0 : i32
    return %arg0, %c0_i32, %c0_i32_0 : i32, i32, i32
  }
  func.func @transform_5(%arg0: i32) -> (i32, i32, i32) {
    %c0_i32 = arith.constant 0 : i32
    %c0_i32_0 = arith.constant 0 : i32
    %c0_i32_1 = arith.constant 0 : i32
    return %arg0, %c0_i32, %c0_i32_0 : i32, i32, i32
  }
  func.func @transform_6(%arg0: i32) -> (i32, i32, i32) {
    %c0_i32 = arith.constant 0 : i32
    %c0_i32_0 = arith.constant 0 : i32
    %c0_i32_1 = arith.constant 0 : i32
    return %arg0, %c0_i32, %c0_i32_0 : i32, i32, i32
  }
  func.func @transform_7(%arg0: i32) -> (i32, i32, i32) {
    %c0_i32 = arith.constant 0 : i32
    %c0_i32_0 = arith.constant 0 : i32
    %c0_i32_1 = arith.constant 0 : i32
    return %arg0, %c0_i32, %c0_i32_0 : i32, i32, i32
  }
  func.func @transform_8(%arg0: i32) -> (i32, i32, i32) {
    %c0_i32 = arith.constant 0 : i32
    %c0_i32_0 = arith.constant 0 : i32
    %c0_i32_1 = arith.constant 0 : i32
    return %arg0, %c0_i32, %c0_i32_0 : i32, i32, i32
  }
  func.func @transform_9(%arg0: i32) -> (i32, i32, i32) {
    %c0_i32 = arith.constant 0 : i32
    %c0_i32_0 = arith.constant 0 : i32
    %c0_i32_1 = arith.constant 0 : i32
    return %arg0, %c0_i32, %c0_i32_0 : i32, i32, i32
  }
  func.func @transform_10(%arg0: i32) -> (i32, i32, i32) {
    %c0_i32 = arith.constant 0 : i32
    %c0_i32_0 = arith.constant 0 : i32
    %c0_i32_1 = arith.constant 0 : i32
    return %arg0, %c0_i32, %c0_i32_0 : i32, i32, i32
  }
  func.func @transform_11(%arg0: i32) -> (i32, i32, i32) {
    %c0_i32 = arith.constant 0 : i32
    %c0_i32_0 = arith.constant 0 : i32
    %c0_i32_1 = arith.constant 0 : i32
    return %arg0, %c0_i32, %c0_i32_0 : i32, i32, i32
  }
  func.func @transform_12(%arg0: i32) -> (i32, i32, i32) {
    %c0_i32 = arith.constant 0 : i32
    %c0_i32_0 = arith.constant 0 : i32
    %c0_i32_1 = arith.constant 0 : i32
    return %arg0, %c0_i32, %c0_i32_0 : i32, i32, i32
  }
  func.func @transform_13(%arg0: i32) -> (i32, i32, i32) {
    %c0_i32 = arith.constant 0 : i32
    %c0_i32_0 = arith.constant 0 : i32
    %c0_i32_1 = arith.constant 0 : i32
    return %arg0, %c0_i32, %c0_i32_0 : i32, i32, i32
  }
  func.func @transform_14(%arg0: i32) -> (i32, i32, i32) {
    %c0_i32 = arith.constant 0 : i32
    %c0_i32_0 = arith.constant 0 : i32
    %c0_i32_1 = arith.constant 0 : i32
    return %arg0, %c0_i32, %c0_i32_0 : i32, i32, i32
  }
  func.func @transform_15(%arg0: i32) -> (i32, i32, i32) {
    %c0_i32 = arith.constant 0 : i32
    %c0_i32_0 = arith.constant 0 : i32
    %c0_i32_1 = arith.constant 0 : i32
    return %arg0, %c0_i32, %c0_i32_0 : i32, i32, i32
  }
  func.func @transform_16(%arg0: i32) -> (i32, i32) {
    %c0_i32 = arith.constant 0 : i32
    %c0_i32_0 = arith.constant 0 : i32
    %c0_i32_1 = arith.constant 0 : i32
    return %c0_i32, %c0_i32_0 : i32, i32
  }
  func.func @transform_17(%arg0: i32) -> (i32, i32) {
    %c0_i32 = arith.constant 0 : i32
    %c0_i32_0 = arith.constant 0 : i32
    %c0_i32_1 = arith.constant 0 : i32
    return %c0_i32, %c0_i32_0 : i32, i32
  }
  func.func @transform_18(%arg0: i32) -> (i32, i32) {
    %c0_i32 = arith.constant 0 : i32
    %c0_i32_0 = arith.constant 0 : i32
    %c0_i32_1 = arith.constant 0 : i32
    return %c0_i32, %c0_i32_0 : i32, i32
  }
  func.func @transform_19(%arg0: i32) -> (i32, i32) {
    %c0_i32 = arith.constant 0 : i32
    %c0_i32_0 = arith.constant 0 : i32
    %c0_i32_1 = arith.constant 0 : i32
    return %c0_i32, %c0_i32_0 : i32, i32
  }
  func.func @transform_20(%arg0: i32) -> (i32, i32) {
    %c0_i32 = arith.constant 0 : i32
    %c0_i32_0 = arith.constant 0 : i32
    %c0_i32_1 = arith.constant 0 : i32
    return %c0_i32, %c0_i32_0 : i32, i32
  }
  func.func @transform_21(%arg0: i32) -> (i32, i32) {
    %c0_i32 = arith.constant 0 : i32
    %c0_i32_0 = arith.constant 0 : i32
    %c0_i32_1 = arith.constant 0 : i32
    return %c0_i32, %c0_i32_0 : i32, i32
  }
  func.func @transform_22(%arg0: i32) -> (i32, i32) {
    %c0_i32 = arith.constant 0 : i32
    %c0_i32_0 = arith.constant 0 : i32
    %c0_i32_1 = arith.constant 0 : i32
    return %c0_i32, %c0_i32_0 : i32, i32
  }
}

</mosaic_0001>

<llo_original>
// kernel: forward.1
$region0: #{forward.1}
  #allocation0 [shape = 'u32[]', space=smem, size = 0x4, offset = 0x4, fixed_abs, tag = 'smem constant byte address 0x4 - core index']
  #allocation1 [shape = 'u32[144,128]{1,0:T(1,128)}', space=vmem, size = 0x12000, scoped, tag = 'internal scratch']
  #allocation2 [shape = 'f32[16,128]{1,0:T(8,128)}', space=vmem, size = 0x2000, scoped, tag = 'scratch operand']
  %s0 = inlined_call_operand.vmem [shape: f32[16,128], index: 0, kind: input, shape index: {}]
  %s1 = inlined_call_operand.vmem [shape: f32[1,128], index: 1, kind: input, shape index: {}]
  %s2 = inlined_call_operand.vmem [shape: f32[1,128], index: 2, kind: input, shape index: {}]
  %s3 = inlined_call_operand.vmem [shape: f32[2,1,8], index: 3, kind: input, shape index: {}]
  %s4 = inlined_call_operand.vmem [shape: bf16[2,128,384], index: 4, kind: input, shape index: {}]
  %s5 = inlined_call_operand.vmem [shape: f32[2,1,384], index: 5, kind: input, shape index: {}]
  %s6 = inlined_call_operand.hbm [shape: bf16[2,128,128], index: 6, kind: input, shape index: {}]
  %s7 = inlined_call_operand.vmem [shape: f32[2,1,128], index: 7, kind: input, shape index: {}]
  %s8 = inlined_call_operand.vmem [shape: f32[2,1,128], index: 8, kind: input, shape index: {}]
  %s9 = inlined_call_operand.vmem [shape: f32[2,1,128], index: 9, kind: input, shape index: {}]
  %s10 = inlined_call_operand.hbm [shape: bf16[2,128,256], index: 10, kind: input, shape index: {}]
  %s11 = inlined_call_operand.vmem [shape: f32[2,1,256], index: 11, kind: input, shape index: {}]
  %s12 = inlined_call_operand.hbm [shape: bf16[2,256,128], index: 12, kind: input, shape index: {}]
  %s13 = inlined_call_operand.vmem [shape: f32[2,1,128], index: 13, kind: input, shape index: {}]
  %s14 = inlined_call_operand.hbm [shape: f32[2,1,128], index: 14, kind: input, shape index: {}]
  %s15 = inlined_call_operand.vmem [shape: f32[2,1,128], index: 15, kind: input, shape index: {}]
  %s16 = inlined_call_operand.hbm [shape: bf16[128,128], index: 16, kind: input, shape index: {}]
  %s17 = inlined_call_operand.vmem [shape: f32[1,128], index: 17, kind: input, shape index: {}]
  %s18 = inlined_call_operand.hbm [shape: bf16[128,128], index: 18, kind: input, shape index: {}]
  %s19 = inlined_call_operand.hbm [shape: f32[1,128], index: 19, kind: input, shape index: {}]
  %s20 = inlined_call_operand.vmem [shape: f32[2,128], index: 20, kind: input, shape index: {}]
  %s21 = inlined_call_operand.hbm [shape: f32[2,128], index: 21, kind: output, shape index: {0}]
  %s22 = inlined_call_operand.vmem [shape: f32[2,1], index: 22, kind: output, shape index: {1}]
  %23 = xla_tuple %s21, %s22
  %s24 = sld [smem:[#allocation0]]
  $region161: #{forward.1} parent=0
    _
  %s26 = ssub.s32 1, %s24
  %s27 = scalar_select 0, %s26, %s24
  $region1: #{forward.1} parent=0
    #allocation3 [shape = 'u8[65536]{0}', space=vmem, size = 0x10000, scoped, tag = 'input window, operand 6']
    #allocation4 [shape = 's32[2]{0}', space=sflag, size = 0x8, scoped, tag = 'scoped memory for forward.1']
    #allocation5 [shape = 's32[2]{0}', space=sflag, size = 0x8, scoped, tag = 'scoped memory for forward.1']
    #allocation6 [shape = 'u8[131072]{0}', space=vmem, size = 0x20000, scoped, tag = 'input window, operand 10']
    #allocation7 [shape = 's32[2]{0}', space=sflag, size = 0x8, scoped, tag = 'scoped memory for forward.1']
    #allocation8 [shape = 'u8[131072]{0}', space=vmem, size = 0x20000, scoped, tag = 'input window, operand 12']
    #allocation9 [shape = 'u8[1024]{0}', space=vmem, size = 0x400, scoped, tag = 'input window, operand 14']
    #allocation10 [shape = 's32[2]{0}', space=sflag, size = 0x8, scoped, tag = 'scoped memory for forward.1']
    #allocation11 [shape = 'u8[32768]{0}', space=vmem, size = 0x8000, scoped, tag = 'input window, operand 16, single buffered']
    #allocation12 [shape = 'u8[32768]{0}', space=vmem, size = 0x8000, scoped, tag = 'input window, operand 18, single buffered']
    #allocation13 [shape = 's32[1]{0}', space=sflag, size = 0x4, scoped, tag = 'scoped memory for forward.1']
    #allocation14 [shape = 'u8[512]{0}', space=vmem, size = 0x400, scoped, tag = 'input window, operand 19, single buffered']
    #allocation15 [shape = 'u8[1024]{0}', space=vmem, size = 0x400, scoped, tag = 'output window, operand 0, single buffered']
    %28 = vsyncpa [#allocation4], 0
    %s29 = scalar_lea.sflag [#allocation4], 1
    %30 = vsyncpa %s29, 0
    %31 = vsyncpa [#allocation7], 0
    %s32 = scalar_lea.sflag [#allocation7], 1
    %33 = vsyncpa %s32, 0
    %34 = vsyncpa [#allocation10], 0
    %s35 = scalar_lea.sflag [#allocation10], 1
    %36 = vsyncpa %s35, 0
    %37 = vsyncpa [#allocation13], 0
    %38 = vsyncpa [#allocation5], 0
    loop: start=0, step=1, limit=4
    $region2: #{forward.1} parent=1 // loop_pre_header
      _
    $region3: #{forward.1} parent=1 // loop_header
      %s40 = sphi 0, %s44
      %p41 = scmp.ge.s32.totalorder %s40, 4
      %s48 = sphi 0, %s48
      %s50 = sphi 0, %s48
      %s51 = sphi 0, %s50
      %s65 = sphi 0, %s51
      %s69 = sphi 0, %s69
      %s71 = sphi 0, %s69
      %s72 = sphi 0, %s71
      %s86 = sphi 0, %s72
      %s90 = sphi 0, %s90
      %s92 = sphi 0, %s90
      %s93 = sphi 0, %s92
      %s107 = sphi 0, %s93
      %s111 = sphi 0, %s111
      %s113 = sphi 0, %s111
      %s114 = sphi 0, %s113
      %s128 = sphi 0, %s114
      %s134 = sphi 0, %s136
      %s137 = sphi 0, %s134
      %s138 = sphi 0, %s137
      %s154 = sphi 0, %s138
      %s160 = sphi 0, %s162
      %s163 = sphi 0, %s160
      %s164 = sphi 0, %s163
      %s180 = sphi 0, %s164
      %s186 = sphi 0, %s188
      %s189 = sphi 0, %s186
      %s190 = sphi 0, %s189
      %s206 = sphi 0, %s190
      %s212 = sphi 0, %s214
      %s215 = sphi 0, %s212
      %s216 = sphi 0, %s215
      %s232 = sphi 0, %s216
      %s238 = sphi 0, %s240
      %s241 = sphi 0, %s238
      %s242 = sphi 0, %s241
      %s258 = sphi 0, %s242
      %s264 = sphi 0, %s266
      %s267 = sphi 0, %s264
      %s268 = sphi 0, %s267
      %s284 = sphi 0, %s268
      %s290 = sphi 0, %s292
      %s293 = sphi 0, %s290
      %s294 = sphi 0, %s293
      %s310 = sphi 0, %s294
      %s316 = sphi 0, %s318
      %s319 = sphi 0, %s316
      %s320 = sphi 0, %s319
      %s336 = sphi 0, %s320
      %s342 = sphi 0, %s344
      %s345 = sphi 0, %s342
      %s346 = sphi 0, %s345
      %s362 = sphi 0, %s346
      %s368 = sphi 0, %s370
      %s371 = sphi 0, %s368
      %s372 = sphi 0, %s371
      %s388 = sphi 0, %s372
      %s394 = sphi 0, %s396
      %s397 = sphi 0, %s394
      %s398 = sphi 0, %s397
      %s414 = sphi 0, %s398
      %s420 = sphi 0, %s422
      %s423 = sphi 0, %s420
      %s424 = sphi 0, %s423
      %s440 = sphi 0, %s424
      %s444 = sphi 0, %s444
      %s446 = sphi 0, %s444
      %s447 = sphi 0, %s446
      %s461 = sphi 0, %s447
      %s465 = sphi 0, %s465
      %s467 = sphi 0, %s465
      %s468 = sphi 0, %s467
      %s482 = sphi 0, %s468
      %s486 = sphi 0, %s486
      %s488 = sphi 0, %s486
      %s489 = sphi 0, %s488
      %s503 = sphi 0, %s489
      %s507 = sphi 0, %s507
      %s509 = sphi 0, %s507
      %s510 = sphi 0, %s509
      %s524 = sphi 0, %s510
      %s528 = sphi 0, %s528
      %s530 = sphi 0, %s528
      %s531 = sphi 0, %s530
      %s545 = sphi 0, %s531
      %s549 = sphi 0, %s549
      %s551 = sphi 0, %s549
      %s552 = sphi 0, %s551
      %s566 = sphi 0, %s552
      %s570 = sphi 0, %s570
      %s572 = sphi 0, %s570
      %s573 = sphi 0, %s572
      %s587 = sphi 0, %s573
    $region4: #{forward.1} parent=1 // loop_header_branch
      %43 = sbr.rel (%p41) target = $region8
    $region5: #{forward.1} parent=1 // loop_body
      %s45 = ssub.s32 %s40, 1
      %s46 = ssub.s32 %s40, 2
      %s47 = sadd.s32 %s40, 1
      %s49 = sadd.s32 %s48, 1
      %p52 = scmp.eq.s32.totalorder %s40, 1
      %p53 = scmp.ne.s32.totalorder %s48, %s50
      %p54 = scmp.eq.s32.totalorder %s40, 0
      %p55 = por %p53, %p54
      %p56 = scmp.ne.s32.totalorder %s48, %s50
      %p57 = scmp.eq.s32.totalorder %s45, 1
      %p58 = por %p56, %p57
      %p59 = scmp.ne.s32.totalorder %s50, %s51
      %p60 = scmp.eq.s32.totalorder %s45, 0
      %p61 = por %p59, %p60
      %p62 = scmp.ne.s32.totalorder %s50, %s51
      %p63 = scmp.eq.s32.totalorder %s46, 1
      %p64 = por %p62, %p63
      %p66 = scmp.ne.s32.totalorder %s51, %s65
      %p67 = scmp.eq.s32.totalorder %s46, 0
      %p68 = por %p66, %p67
      %s70 = sadd.s32 %s69, 1
      %p73 = scmp.eq.s32.totalorder %s40, 1
      %p74 = scmp.ne.s32.totalorder %s69, %s71
      %p75 = scmp.eq.s32.totalorder %s40, 0
      %p76 = por %p74, %p75
      %p77 = scmp.ne.s32.totalorder %s69, %s71
      %p78 = scmp.eq.s32.totalorder %s45, 1
      %p79 = por %p77, %p78
      %p80 = scmp.ne.s32.totalorder %s71, %s72
      %p81 = scmp.eq.s32.totalorder %s45, 0
      %p82 = por %p80, %p81
      %p83 = scmp.ne.s32.totalorder %s71, %s72
      %p84 = scmp.eq.s32.totalorder %s46, 1
      %p85 = por %p83, %p84
      %p87 = scmp.ne.s32.totalorder %s72, %s86
      %p88 = scmp.eq.s32.totalorder %s46, 0
      %p89 = por %p87, %p88
      %s91 = sadd.s32 %s90, 1
      %p94 = scmp.eq.s32.totalorder %s40, 1
      %p95 = scmp.ne.s32.totalorder %s90, %s92
      %p96 = scmp.eq.s32.totalorder %s40, 0
      %p97 = por %p95, %p96
      %p98 = scmp.ne.s32.totalorder %s90, %s92
      %p99 = scmp.eq.s32.totalorder %s45, 1
      %p100 = por %p98, %p99
      %p101 = scmp.ne.s32.totalorder %s92, %s93
      %p102 = scmp.eq.s32.totalorder %s45, 0
      %p103 = por %p101, %p102
      %p104 = scmp.ne.s32.totalorder %s92, %s93
      %p105 = scmp.eq.s32.totalorder %s46, 1
      %p106 = por %p104, %p105
      %p108 = scmp.ne.s32.totalorder %s93, %s107
      %p109 = scmp.eq.s32.totalorder %s46, 0
      %p110 = por %p108, %p109
      %s112 = sadd.s32 %s111, 1
      %p115 = scmp.eq.s32.totalorder %s40, 1
      %p116 = scmp.ne.s32.totalorder %s111, %s113
      %p117 = scmp.eq.s32.totalorder %s40, 0
      %p118 = por %p116, %p117
      %p119 = scmp.ne.s32.totalorder %s111, %s113
      %p120 = scmp.eq.s32.totalorder %s45, 1
      %p121 = por %p119, %p120
      %p122 = scmp.ne.s32.totalorder %s113, %s114
      %p123 = scmp.eq.s32.totalorder %s45, 0
      %p124 = por %p122, %p123
      %p125 = scmp.ne.s32.totalorder %s113, %s114
      %p126 = scmp.eq.s32.totalorder %s46, 1
      %p127 = por %p125, %p126
      %p129 = scmp.ne.s32.totalorder %s114, %s128
      %p130 = scmp.eq.s32.totalorder %s46, 0
      %p131 = por %p129, %p130
      %s132 = ssub.s32 %s40, %s47
      %p133 = scmp.eq.s32.totalorder %s132, 0
      %s135 = sadd.s32 %s134, 1
      %s136 = scalar_select %p133, %s134, %s135
      %p139 = pneg %p133
      %p140 = scmp.eq.s32.totalorder %s40, 1
      %p141 = por %p139, %p140
      %p142 = scmp.ne.s32.totalorder %s134, %s137
      %p143 = scmp.eq.s32.totalorder %s40, 0
      %p144 = por %p142, %p143
      %p145 = scmp.ne.s32.totalorder %s134, %s137
      %p146 = scmp.eq.s32.totalorder %s45, 1
      %p147 = por %p145, %p146
      %p148 = scmp.ne.s32.totalorder %s137, %s138
      %p149 = scmp.eq.s32.totalorder %s45, 0
      %p150 = por %p148, %p149
      %p151 = scmp.ne.s32.totalorder %s137, %s138
      %p152 = scmp.eq.s32.totalorder %s46, 1
      %p153 = por %p151, %p152
      %p155 = scmp.ne.s32.totalorder %s138, %s154
      %p156 = scmp.eq.s32.totalorder %s46, 0
      %p157 = por %p155, %p156
      %s158 = ssub.s32 %s40, %s47
      %p159 = scmp.eq.s32.totalorder %s158, 0
      %s161 = sadd.s32 %s160, 1
      %s162 = scalar_select %p159, %s160, %s161
      %p165 = pneg %p159
      %p166 = scmp.eq.s32.totalorder %s40, 1
      %p167 = por %p165, %p166
      %p168 = scmp.ne.s32.totalorder %s160, %s163
      %p169 = scmp.eq.s32.totalorder %s40, 0
      %p170 = por %p168, %p169
      %p171 = scmp.ne.s32.totalorder %s160, %s163
      %p172 = scmp.eq.s32.totalorder %s45, 1
      %p173 = por %p171, %p172
      %p174 = scmp.ne.s32.totalorder %s163, %s164
      %p175 = scmp.eq.s32.totalorder %s45, 0
      %p176 = por %p174, %p175
      %p177 = scmp.ne.s32.totalorder %s163, %s164
      %p178 = scmp.eq.s32.totalorder %s46, 1
      %p179 = por %p177, %p178
      %p181 = scmp.ne.s32.totalorder %s164, %s180
      %p182 = scmp.eq.s32.totalorder %s46, 0
      %p183 = por %p181, %p182
      %s184 = ssub.s32 %s40, %s47
      %p185 = scmp.eq.s32.totalorder %s184, 0
      %s187 = sadd.s32 %s186, 1
      %s188 = scalar_select %p185, %s186, %s187
      %p191 = pneg %p185
      %p192 = scmp.eq.s32.totalorder %s40, 1
      %p193 = por %p191, %p192
      %p194 = scmp.ne.s32.totalorder %s186, %s189
      %p195 = scmp.eq.s32.totalorder %s40, 0
      %p196 = por %p194, %p195
      %p197 = scmp.ne.s32.totalorder %s186, %s189
      %p198 = scmp.eq.s32.totalorder %s45, 1
      %p199 = por %p197, %p198
      %p200 = scmp.ne.s32.totalorder %s189, %s190
      %p201 = scmp.eq.s32.totalorder %s45, 0
      %p202 = por %p200, %p201
      %p203 = scmp.ne.s32.totalorder %s189, %s190
      %p204 = scmp.eq.s32.totalorder %s46, 1
      %p205 = por %p203, %p204
      %p207 = scmp.ne.s32.totalorder %s190, %s206
      %p208 = scmp.eq.s32.totalorder %s46, 0
      %p209 = por %p207, %p208
      %s210 = ssub.s32 %s40, %s47
      %p211 = scmp.eq.s32.totalorder %s210, 0
      %s213 = sadd.s32 %s212, 1
      %s214 = scalar_select %p211, %s212, %s213
      %p217 = pneg %p211
      %p218 = scmp.eq.s32.totalorder %s40, 1
      %p219 = por %p217, %p218
      %p220 = scmp.ne.s32.totalorder %s212, %s215
      %p221 = scmp.eq.s32.totalorder %s40, 0
      %p222 = por %p220, %p221
      %p223 = scmp.ne.s32.totalorder %s212, %s215
      %p224 = scmp.eq.s32.totalorder %s45, 1
      %p225 = por %p223, %p224
      %p226 = scmp.ne.s32.totalorder %s215, %s216
      %p227 = scmp.eq.s32.totalorder %s45, 0
      %p228 = por %p226, %p227
      %p229 = scmp.ne.s32.totalorder %s215, %s216
      %p230 = scmp.eq.s32.totalorder %s46, 1
      %p231 = por %p229, %p230
      %p233 = scmp.ne.s32.totalorder %s216, %s232
      %p234 = scmp.eq.s32.totalorder %s46, 0
      %p235 = por %p233, %p234
      %s236 = ssub.s32 %s40, %s47
      %p237 = scmp.eq.s32.totalorder %s236, 0
      %s239 = sadd.s32 %s238, 1
      %s240 = scalar_select %p237, %s238, %s239
      %p243 = pneg %p237
      %p244 = scmp.eq.s32.totalorder %s40, 1
      %p245 = por %p243, %p244
      %p246 = scmp.ne.s32.totalorder %s238, %s241
      %p247 = scmp.eq.s32.totalorder %s40, 0
      %p248 = por %p246, %p247
      %p249 = scmp.ne.s32.totalorder %s238, %s241
      %p250 = scmp.eq.s32.totalorder %s45, 1
      %p251 = por %p249, %p250
      %p252 = scmp.ne.s32.totalorder %s241, %s242
      %p253 = scmp.eq.s32.totalorder %s45, 0
      %p254 = por %p252, %p253
      %p255 = scmp.ne.s32.totalorder %s241, %s242
      %p256 = scmp.eq.s32.totalorder %s46, 1
      %p257 = por %p255, %p256
      %p259 = scmp.ne.s32.totalorder %s242, %s258
      %p260 = scmp.eq.s32.totalorder %s46, 0
      %p261 = por %p259, %p260
      %s262 = ssub.s32 %s40, %s47
      %p263 = scmp.eq.s32.totalorder %s262, 0
      %s265 = sadd.s32 %s264, 1
      %s266 = scalar_select %p263, %s264, %s265
      %p269 = pneg %p263
      %p270 = scmp.eq.s32.totalorder %s40, 1
      %p271 = por %p269, %p270
      %p272 = scmp.ne.s32.totalorder %s264, %s267
      %p273 = scmp.eq.s32.totalorder %s40, 0
      %p274 = por %p272, %p273
      %p275 = scmp.ne.s32.totalorder %s264, %s267
      %p276 = scmp.eq.s32.totalorder %s45, 1
      %p277 = por %p275, %p276
      %p278 = scmp.ne.s32.totalorder %s267, %s268
      %p279 = scmp.eq.s32.totalorder %s45, 0
      %p280 = por %p278, %p279
      %p281 = scmp.ne.s32.totalorder %s267, %s268
      %p282 = scmp.eq.s32.totalorder %s46, 1
      %p283 = por %p281, %p282
      %p285 = scmp.ne.s32.totalorder %s268, %s284
      %p286 = scmp.eq.s32.totalorder %s46, 0
      %p287 = por %p285, %p286
      %s288 = ssub.s32 %s40, %s47
      %p289 = scmp.eq.s32.totalorder %s288, 0
      %s291 = sadd.s32 %s290, 1
      %s292 = scalar_select %p289, %s290, %s291
      %p295 = pneg %p289
      %p296 = scmp.eq.s32.totalorder %s40, 1
      %p297 = por %p295, %p296
      %p298 = scmp.ne.s32.totalorder %s290, %s293
      %p299 = scmp.eq.s32.totalorder %s40, 0
      %p300 = por %p298, %p299
      %p301 = scmp.ne.s32.totalorder %s290, %s293
      %p302 = scmp.eq.s32.totalorder %s45, 1
      %p303 = por %p301, %p302
      %p304 = scmp.ne.s32.totalorder %s293, %s294
      %p305 = scmp.eq.s32.totalorder %s45, 0
      %p306 = por %p304, %p305
      %p307 = scmp.ne.s32.totalorder %s293, %s294
      %p308 = scmp.eq.s32.totalorder %s46, 1
      %p309 = por %p307, %p308
      %p311 = scmp.ne.s32.totalorder %s294, %s310
      %p312 = scmp.eq.s32.totalorder %s46, 0
      %p313 = por %p311, %p312
      %s314 = ssub.s32 %s40, %s47
      %p315 = scmp.eq.s32.totalorder %s314, 0
      %s317 = sadd.s32 %s316, 1
      %s318 = scalar_select %p315, %s316, %s317
      %p321 = pneg %p315
      %p322 = scmp.eq.s32.totalorder %s40, 1
      %p323 = por %p321, %p322
      %p324 = scmp.ne.s32.totalorder %s316, %s319
      %p325 = scmp.eq.s32.totalorder %s40, 0
      %p326 = por %p324, %p325
      %p327 = scmp.ne.s32.totalorder %s316, %s319
      %p328 = scmp.eq.s32.totalorder %s45, 1
      %p329 = por %p327, %p328
      %p330 = scmp.ne.s32.totalorder %s319, %s320
      %p331 = scmp.eq.s32.totalorder %s45, 0
      %p332 = por %p330, %p331
      %p333 = scmp.ne.s32.totalorder %s319, %s320
      %p334 = scmp.eq.s32.totalorder %s46, 1
      %p335 = por %p333, %p334
      %p337 = scmp.ne.s32.totalorder %s320, %s336
      %p338 = scmp.eq.s32.totalorder %s46, 0
      %p339 = por %p337, %p338
      %s340 = ssub.s32 %s40, %s47
      %p341 = scmp.eq.s32.totalorder %s340, 0
      %s343 = sadd.s32 %s342, 1
      %s344 = scalar_select %p341, %s342, %s343
      %p347 = pneg %p341
      %p348 = scmp.eq.s32.totalorder %s40, 1
      %p349 = por %p347, %p348
      %p350 = scmp.ne.s32.totalorder %s342, %s345
      %p351 = scmp.eq.s32.totalorder %s40, 0
      %p352 = por %p350, %p351
      %p353 = scmp.ne.s32.totalorder %s342, %s345
      %p354 = scmp.eq.s32.totalorder %s45, 1
      %p355 = por %p353, %p354
      %p356 = scmp.ne.s32.totalorder %s345, %s346
      %p357 = scmp.eq.s32.totalorder %s45, 0
      %p358 = por %p356, %p357
      %p359 = scmp.ne.s32.totalorder %s345, %s346
      %p360 = scmp.eq.s32.totalorder %s46, 1
      %p361 = por %p359, %p360
      %p363 = scmp.ne.s32.totalorder %s346, %s362
      %p364 = scmp.eq.s32.totalorder %s46, 0
      %p365 = por %p363, %p364
      %s366 = ssub.s32 %s40, %s47
      %p367 = scmp.eq.s32.totalorder %s366, 0
      %s369 = sadd.s32 %s368, 1
      %s370 = scalar_select %p367, %s368, %s369
      %p373 = pneg %p367
      %p374 = scmp.eq.s32.totalorder %s40, 1
      %p375 = por %p373, %p374
      %p376 = scmp.ne.s32.totalorder %s368, %s371
      %p377 = scmp.eq.s32.totalorder %s40, 0
      %p378 = por %p376, %p377
      %p379 = scmp.ne.s32.totalorder %s368, %s371
      %p380 = scmp.eq.s32.totalorder %s45, 1
      %p381 = por %p379, %p380
      %p382 = scmp.ne.s32.totalorder %s371, %s372
      %p383 = scmp.eq.s32.totalorder %s45, 0
      %p384 = por %p382, %p383
      %p385 = scmp.ne.s32.totalorder %s371, %s372
      %p386 = scmp.eq.s32.totalorder %s46, 1
      %p387 = por %p385, %p386
      %p389 = scmp.ne.s32.totalorder %s372, %s388
      %p390 = scmp.eq.s32.totalorder %s46, 0
      %p391 = por %p389, %p390
      %s392 = ssub.s32 %s40, %s47
      %p393 = scmp.eq.s32.totalorder %s392, 0
      %s395 = sadd.s32 %s394, 1
      %s396 = scalar_select %p393, %s394, %s395
      %p399 = pneg %p393
      %p400 = scmp.eq.s32.totalorder %s40, 1
      %p401 = por %p399, %p400
      %p402 = scmp.ne.s32.totalorder %s394, %s397
      %p403 = scmp.eq.s32.totalorder %s40, 0
      %p404 = por %p402, %p403
      %p405 = scmp.ne.s32.totalorder %s394, %s397
      %p406 = scmp.eq.s32.totalorder %s45, 1
      %p407 = por %p405, %p406
      %p408 = scmp.ne.s32.totalorder %s397, %s398
      %p409 = scmp.eq.s32.totalorder %s45, 0
      %p410 = por %p408, %p409
      %p411 = scmp.ne.s32.totalorder %s397, %s398
      %p412 = scmp.eq.s32.totalorder %s46, 1
      %p413 = por %p411, %p412
      %p415 = scmp.ne.s32.totalorder %s398, %s414
      %p416 = scmp.eq.s32.totalorder %s46, 0
      %p417 = por %p415, %p416
      %s418 = ssub.s32 %s40, %s47
      %p419 = scmp.eq.s32.totalorder %s418, 0
      %s421 = sadd.s32 %s420, 1
      %s422 = scalar_select %p419, %s420, %s421
      %p425 = pneg %p419
      %p426 = scmp.eq.s32.totalorder %s40, 1
      %p427 = por %p425, %p426
      %p428 = scmp.ne.s32.totalorder %s420, %s423
      %p429 = scmp.eq.s32.totalorder %s40, 0
      %p430 = por %p428, %p429
      %p431 = scmp.ne.s32.totalorder %s420, %s423
      %p432 = scmp.eq.s32.totalorder %s45, 1
      %p433 = por %p431, %p432
      %p434 = scmp.ne.s32.totalorder %s423, %s424
      %p435 = scmp.eq.s32.totalorder %s45, 0
      %p436 = por %p434, %p435
      %p437 = scmp.ne.s32.totalorder %s423, %s424
      %p438 = scmp.eq.s32.totalorder %s46, 1
      %p439 = por %p437, %p438
      %p441 = scmp.ne.s32.totalorder %s424, %s440
      %p442 = scmp.eq.s32.totalorder %s46, 0
      %p443 = por %p441, %p442
      %s445 = sadd.s32 %s444, 1
      %p448 = scmp.eq.s32.totalorder %s40, 1
      %p449 = scmp.ne.s32.totalorder %s444, %s446
      %p450 = scmp.eq.s32.totalorder %s40, 0
      %p451 = por %p449, %p450
      %p452 = scmp.ne.s32.totalorder %s444, %s446
      %p453 = scmp.eq.s32.totalorder %s45, 1
      %p454 = por %p452, %p453
      %p455 = scmp.ne.s32.totalorder %s446, %s447
      %p456 = scmp.eq.s32.totalorder %s45, 0
      %p457 = por %p455, %p456
      %p458 = scmp.ne.s32.totalorder %s446, %s447
      %p459 = scmp.eq.s32.totalorder %s46, 1
      %p460 = por %p458, %p459
      %p462 = scmp.ne.s32.totalorder %s447, %s461
      %p463 = scmp.eq.s32.totalorder %s46, 0
      %p464 = por %p462, %p463
      %s466 = sadd.s32 %s465, 1
      %p469 = scmp.eq.s32.totalorder %s40, 1
      %p470 = scmp.ne.s32.totalorder %s465, %s467
      %p471 = scmp.eq.s32.totalorder %s40, 0
      %p472 = por %p470, %p471
      %p473 = scmp.ne.s32.totalorder %s465, %s467
      %p474 = scmp.eq.s32.totalorder %s45, 1
      %p475 = por %p473, %p474
      %p476 = scmp.ne.s32.totalorder %s467, %s468
      %p477 = scmp.eq.s32.totalorder %s45, 0
      %p478 = por %p476, %p477
      %p479 = scmp.ne.s32.totalorder %s467, %s468
      %p480 = scmp.eq.s32.totalorder %s46, 1
      %p481 = por %p479, %p480
      %p483 = scmp.ne.s32.totalorder %s468, %s482
      %p484 = scmp.eq.s32.totalorder %s46, 0
      %p485 = por %p483, %p484
      %s487 = sadd.s32 %s486, 1
      %p490 = scmp.eq.s32.totalorder %s40, 1
      %p491 = scmp.ne.s32.totalorder %s486, %s488
      %p492 = scmp.eq.s32.totalorder %s40, 0
      %p493 = por %p491, %p492
      %p494 = scmp.ne.s32.totalorder %s486, %s488
      %p495 = scmp.eq.s32.totalorder %s45, 1
      %p496 = por %p494, %p495
      %p497 = scmp.ne.s32.totalorder %s488, %s489
      %p498 = scmp.eq.s32.totalorder %s45, 0
      %p499 = por %p497, %p498
      %p500 = scmp.ne.s32.totalorder %s488, %s489
      %p501 = scmp.eq.s32.totalorder %s46, 1
      %p502 = por %p500, %p501
      %p504 = scmp.ne.s32.totalorder %s489, %s503
      %p505 = scmp.eq.s32.totalorder %s46, 0
      %p506 = por %p504, %p505
      %s508 = sadd.s32 %s507, 1
      %p511 = scmp.eq.s32.totalorder %s40, 1
      %p512 = scmp.ne.s32.totalorder %s507, %s509
      %p513 = scmp.eq.s32.totalorder %s40, 0
      %p514 = por %p512, %p513
      %p515 = scmp.ne.s32.totalorder %s507, %s509
      %p516 = scmp.eq.s32.totalorder %s45, 1
      %p517 = por %p515, %p516
      %p518 = scmp.ne.s32.totalorder %s509, %s510
      %p519 = scmp.eq.s32.totalorder %s45, 0
      %p520 = por %p518, %p519
      %p521 = scmp.ne.s32.totalorder %s509, %s510
      %p522 = scmp.eq.s32.totalorder %s46, 1
      %p523 = por %p521, %p522
      %p525 = scmp.ne.s32.totalorder %s510, %s524
      %p526 = scmp.eq.s32.totalorder %s46, 0
      %p527 = por %p525, %p526
      %s529 = sadd.s32 %s528, 1
      %p532 = scmp.eq.s32.totalorder %s40, 1
      %p533 = scmp.ne.s32.totalorder %s528, %s530
      %p534 = scmp.eq.s32.totalorder %s40, 0
      %p535 = por %p533, %p534
      %p536 = scmp.ne.s32.totalorder %s528, %s530
      %p537 = scmp.eq.s32.totalorder %s45, 1
      %p538 = por %p536, %p537
      %p539 = scmp.ne.s32.totalorder %s530, %s531
      %p540 = scmp.eq.s32.totalorder %s45, 0
      %p541 = por %p539, %p540
      %p542 = scmp.ne.s32.totalorder %s530, %s531
      %p543 = scmp.eq.s32.totalorder %s46, 1
      %p544 = por %p542, %p543
      %p546 = scmp.ne.s32.totalorder %s531, %s545
      %p547 = scmp.eq.s32.totalorder %s46, 0
      %p548 = por %p546, %p547
      %s550 = sadd.s32 %s549, 1
      %p553 = scmp.eq.s32.totalorder %s40, 1
      %p554 = scmp.ne.s32.totalorder %s549, %s551
      %p555 = scmp.eq.s32.totalorder %s40, 0
      %p556 = por %p554, %p555
      %p557 = scmp.ne.s32.totalorder %s549, %s551
      %p558 = scmp.eq.s32.totalorder %s45, 1
      %p559 = por %p557, %p558
      %p560 = scmp.ne.s32.totalorder %s551, %s552
      %p561 = scmp.eq.s32.totalorder %s45, 0
      %p562 = por %p560, %p561
      %p563 = scmp.ne.s32.totalorder %s551, %s552
      %p564 = scmp.eq.s32.totalorder %s46, 1
      %p565 = por %p563, %p564
      %p567 = scmp.ne.s32.totalorder %s552, %s566
      %p568 = scmp.eq.s32.totalorder %s46, 0
      %p569 = por %p567, %p568
      %s571 = sadd.s32 %s570, 1
      %p574 = scmp.eq.s32.totalorder %s40, 1
      %p575 = scmp.ne.s32.totalorder %s570, %s572
      %p576 = scmp.eq.s32.totalorder %s40, 0
      %p577 = por %p575, %p576
      %p578 = scmp.ne.s32.totalorder %s570, %s572
      %p579 = scmp.eq.s32.totalorder %s45, 1
      %p580 = por %p578, %p579
      %p581 = scmp.ne.s32.totalorder %s572, %s573
      %p582 = scmp.eq.s32.totalorder %s45, 0
      %p583 = por %p581, %p582
      %p584 = scmp.ne.s32.totalorder %s572, %s573
      %p585 = scmp.eq.s32.totalorder %s46, 1
      %p586 = por %p584, %p585
      %p588 = scmp.ne.s32.totalorder %s573, %s587
      %p589 = scmp.eq.s32.totalorder %s46, 0
      %p590 = por %p588, %p589
      %p591 = scmp.le.s32.totalorder 1, %s40
      %p592 = scmp.lt.s32.totalorder %s40, 3
      %p593 = pnand %p591, %p592
      %p594 = pneg %p593
      // Predicated region
      $region9: #{forward.1} parent=5 // pred_check
        _
      $region10: #{forward.1} parent=5 // pred_check_branch
        %596 = sbr.rel (%p593) target = $region12
      $region11: #{forward.1} parent=5 // pred_region
        %s597 = ssub.s32 %s40, 1
        // Predicated region
        $region13: #{forward.1} parent=11 // pred_check
          %p598 = pneg %p61
        $region14: #{forward.1} parent=11 // pred_check_branch
          %600 = sbr.rel (%p598) target = $region16
        $region15: #{forward.1} parent=11 // pred_region
          _
        $region16: #{forward.1} parent=11 // pred_fallthru
          _
        // Predicated region
        $region17: #{forward.1} parent=11 // pred_check
          %p601 = pneg %p82
        $region18: #{forward.1} parent=11 // pred_check_branch
          %603 = sbr.rel (%p601) target = $region20
        $region19: #{forward.1} parent=11 // pred_region
          _
        $region20: #{forward.1} parent=11 // pred_fallthru
          _
        // Predicated region
        $region21: #{forward.1} parent=11 // pred_check
          %p604 = pneg %p103
        $region22: #{forward.1} parent=11 // pred_check_branch
          %606 = sbr.rel (%p604) target = $region24
        $region23: #{forward.1} parent=11 // pred_region
          _
        $region24: #{forward.1} parent=11 // pred_fallthru
          _
        // Predicated region
        $region25: #{forward.1} parent=11 // pred_check
          %p607 = pneg %p124
        $region26: #{forward.1} parent=11 // pred_check_branch
          %609 = sbr.rel (%p607) target = $region28
        $region27: #{forward.1} parent=11 // pred_region
          _
        $region28: #{forward.1} parent=11 // pred_fallthru
          _
        // Predicated region
        $region29: #{forward.1} parent=11 // pred_check
          %p610 = pneg %p457
        $region30: #{forward.1} parent=11 // pred_check_branch
          %612 = sbr.rel (%p610) target = $region32
        $region31: #{forward.1} parent=11 // pred_region
          %s614 = ssub.s32 1024, 1024
          %615 = vsyncadd [#allocation10], %s614
          %s616 = sshll.u32 [#allocation11], 4
          %s617 = int_to_ptr.vmem [resolvable:$true] %s616
          %622 = dma.hbm_to_vmem [thread:$0]  %s16, 1024, %s617, [#allocation10], 64, 64, 4
        $region32: #{forward.1} parent=11 // pred_fallthru
          _
        // Predicated region
        $region33: #{forward.1} parent=11 // pred_check
          %p623 = pneg %p478
        $region34: #{forward.1} parent=11 // pred_check_branch
          %625 = sbr.rel (%p623) target = $region36
        $region35: #{forward.1} parent=11 // pred_region
          _
        $region36: #{forward.1} parent=11 // pred_fallthru
          _
        // Predicated region
        $region37: #{forward.1} parent=11 // pred_check
          %p626 = pneg %p499
        $region38: #{forward.1} parent=11 // pred_check_branch
          %628 = sbr.rel (%p626) target = $region40
        $region39: #{forward.1} parent=11 // pred_region
          %s630 = ssub.s32 1024, 1024
          %631 = vsyncadd [#allocation13], %s630
          %s632 = sshll.u32 [#allocation12], 4
          %s633 = int_to_ptr.vmem [resolvable:$true] %s632
          %638 = dma.hbm_to_vmem [thread:$0]  %s18, 1024, %s633, [#allocation13], 64, 64, 4
        $region40: #{forward.1} parent=11 // pred_fallthru
          _
        // Predicated region
        $region41: #{forward.1} parent=11 // pred_check
          %p639 = pneg %p520
        $region42: #{forward.1} parent=11 // pred_check_branch
          %641 = sbr.rel (%p639) target = $region44
        $region43: #{forward.1} parent=11 // pred_region
          %s643 = ssub.s32 16, 16
          %644 = vsyncadd [#allocation13], %s643
          %s646 = sshll.u32 [#allocation14], 4
          %s647 = int_to_ptr.vmem [resolvable:$true] %s646
          %649 = dma.hbm_to_vmem [thread:$0]  %s19, 16, %s647, [#allocation13]
        $region44: #{forward.1} parent=11 // pred_fallthru
          _
        // Predicated region
        $region45: #{forward.1} parent=11 // pred_check
          %p650 = pneg %p541
        $region46: #{forward.1} parent=11 // pred_check_branch
          %652 = sbr.rel (%p650) target = $region48
        $region47: #{forward.1} parent=11 // pred_region
          _
        $region48: #{forward.1} parent=11 // pred_fallthru
          _
      $region12: #{forward.1} parent=5 // pred_fallthru
        _
      %p653 = scmp.lt.s32.totalorder %s40, 2
      // Predicated region
      $region49: #{forward.1} parent=5 // pred_check
        %p654 = pneg %p653
      $region50: #{forward.1} parent=5 // pred_check_branch
        %656 = sbr.rel (%p654) target = $region52
      $region51: #{forward.1} parent=5 // pred_region
        // Predicated region
        $region53: #{forward.1} parent=51 // pred_check
          %p657 = pneg %p144
        $region54: #{forward.1} parent=51 // pred_check_branch
          %659 = sbr.rel (%p657) target = $region56
        $region55: #{forward.1} parent=51 // pred_region
          %p660 = scmp.lt.s32.totalorder %s40, 1
          %s661 = scalar_select %p660, %s40, 1
          %s662 = smul.addr %s661, 48
          %s663 = smul.addr %s662, 4
          %s664 = scalar_lea.vmem %s4, %s663
        $region56: #{forward.1} parent=51 // pred_fallthru
          _
        // Predicated region
        $region57: #{forward.1} parent=51 // pred_check
          %p665 = pneg %p170
        $region58: #{forward.1} parent=51 // pred_check_branch
          %667 = sbr.rel (%p665) target = $region60
        $region59: #{forward.1} parent=51 // pred_region
          %p668 = scmp.lt.s32.totalorder %s40, 1
          %s669 = scalar_select %p668, %s40, 1
          %s670 = smul.addr %s669, 3
          %s671 = scalar_lea.vmem %s5, %s670
        $region60: #{forward.1} parent=51 // pred_fallthru
          _
        // Predicated region
        $region61: #{forward.1} parent=51 // pred_check
          %p672 = pneg %p196
        $region62: #{forward.1} parent=51 // pred_check_branch
          %674 = sbr.rel (%p672) target = $region64
        $region63: #{forward.1} parent=51 // pred_region
          %s675 = sand.u32 %s186, 1
          %s676 = scalar_lea.sflag [#allocation4], %s675
          %s677 = sand.u32 %s186, 1
          %s678 = smul.addr %s677, 64
          %s679 = scalar_lea.vmem [#allocation3], %s678
          %s681 = ssub.s32 1024, 1024
          %682 = vsyncadd %s676, %s681
          %s683 = smul.addr %s40, 16
          %s684 = smul.addr %s683, 64
          %s685 = scalar_lea.hbm %s6, %s684
          %s686 = sshll.u32 %s679, 4
          %s687 = int_to_ptr.vmem [resolvable:$true] %s686
          %692 = dma.hbm_to_vmem [thread:$0]  %s685, 1024, %s687, %s676, 64, 64, 4
        $region64: #{forward.1} parent=51 // pred_fallthru
          _
        // Predicated region
        $region65: #{forward.1} parent=51 // pred_check
          %p693 = pneg %p222
        $region66: #{forward.1} parent=51 // pred_check_branch
          %695 = sbr.rel (%p693) target = $region68
        $region67: #{forward.1} parent=51 // pred_region
          %p696 = scmp.lt.s32.totalorder %s40, 1
          %s697 = scalar_select %p696, %s40, 1
          %s698 = scalar_lea.vmem %s7, %s697
        $region68: #{forward.1} parent=51 // pred_fallthru
          _
        // Predicated region
        $region69: #{forward.1} parent=51 // pred_check
          %p699 = pneg %p248
        $region70: #{forward.1} parent=51 // pred_check_branch
          %701 = sbr.rel (%p699) target = $region72
        $region71: #{forward.1} parent=51 // pred_region
          %p702 = scmp.lt.s32.totalorder %s40, 1
          %s703 = scalar_select %p702, %s40, 1
          %s704 = scalar_lea.vmem %s8, %s703
        $region72: #{forward.1} parent=51 // pred_fallthru
          _
        // Predicated region
        $region73: #{forward.1} parent=51 // pred_check
          %p705 = pneg %p274
        $region74: #{forward.1} parent=51 // pred_check_branch
          %707 = sbr.rel (%p705) target = $region76
        $region75: #{forward.1} parent=51 // pred_region
          %p708 = scmp.lt.s32.totalorder %s40, 1
          %s709 = scalar_select %p708, %s40, 1
          %s710 = scalar_lea.vmem %s9, %s709
        $region76: #{forward.1} parent=51 // pred_fallthru
          _
        // Predicated region
        $region77: #{forward.1} parent=51 // pred_check
          %p711 = pneg %p300
        $region78: #{forward.1} parent=51 // pred_check_branch
          %713 = sbr.rel (%p711) target = $region80
        $region79: #{forward.1} parent=51 // pred_region
          %s714 = sand.u32 %s40, 1
          %s715 = scalar_lea.sflag [#allocation7], %s714
          %s716 = sand.u32 %s290, 1
          %s717 = smul.addr %s716, 128
          %s718 = scalar_lea.vmem [#allocation6], %s717
          %s720 = ssub.s32 2048, 2048
          %721 = vsyncadd %s715, %s720
          %s722 = smul.addr %s40, 32
          %s723 = smul.addr %s722, 64
          %s724 = scalar_lea.hbm %s10, %s723
          %s725 = sshll.u32 %s718, 4
          %s726 = int_to_ptr.vmem [resolvable:$true] %s725
          %731 = dma.hbm_to_vmem [thread:$0]  %s724, 2048, %s726, %s715, 128, 128, 8
        $region80: #{forward.1} parent=51 // pred_fallthru
          _
        // Predicated region
        $region81: #{forward.1} parent=51 // pred_check
          %p732 = pneg %p326
        $region82: #{forward.1} parent=51 // pred_check_branch
          %734 = sbr.rel (%p732) target = $region84
        $region83: #{forward.1} parent=51 // pred_region
          %p735 = scmp.lt.s32.totalorder %s40, 1
          %s736 = scalar_select %p735, %s40, 1
          %s737 = smul.addr %s736, 2
          %s738 = scalar_lea.vmem %s11, %s737
        $region84: #{forward.1} parent=51 // pred_fallthru
          _
        // Predicated region
        $region85: #{forward.1} parent=51 // pred_check
          %p739 = pneg %p352
        $region86: #{forward.1} parent=51 // pred_check_branch
          %741 = sbr.rel (%p739) target = $region88
        $region87: #{forward.1} parent=51 // pred_region
          %s742 = sand.u32 %s40, 1
          %s743 = scalar_lea.sflag [#allocation7], %s742
          %s744 = sand.u32 %s342, 1
          %s745 = smul.addr %s744, 128
          %s746 = scalar_lea.vmem [#allocation8], %s745
          %s748 = ssub.s32 2048, 2048
          %749 = vsyncadd %s743, %s748
          %s750 = smul.addr %s40, 32
          %s751 = smul.addr %s750, 64
          %s752 = scalar_lea.hbm %s12, %s751
          %s753 = sshll.u32 %s746, 4
          %s754 = int_to_ptr.vmem [resolvable:$true] %s753
          %759 = dma.hbm_to_vmem [thread:$0]  %s752, 2048, %s754, %s743, 64, 64, 4
        $region88: #{forward.1} parent=51 // pred_fallthru
          _
        // Predicated region
        $region89: #{forward.1} parent=51 // pred_check
          %p760 = pneg %p378
        $region90: #{forward.1} parent=51 // pred_check_branch
          %762 = sbr.rel (%p760) target = $region92
        $region91: #{forward.1} parent=51 // pred_region
          %p763 = scmp.lt.s32.totalorder %s40, 1
          %s764 = scalar_select %p763, %s40, 1
          %s765 = scalar_lea.vmem %s13, %s764
        $region92: #{forward.1} parent=51 // pred_fallthru
          _
        // Predicated region
        $region93: #{forward.1} parent=51 // pred_check
          %p766 = pneg %p404
        $region94: #{forward.1} parent=51 // pred_check_branch
          %768 = sbr.rel (%p766) target = $region96
        $region95: #{forward.1} parent=51 // pred_region
          %s769 = sand.u32 %s40, 1
          %s770 = scalar_lea.sflag [#allocation10], %s769
          %s771 = sand.u32 %s394, 1
          %s772 = scalar_lea.vmem [#allocation9], %s771
          %s774 = ssub.s32 16, 16
          %775 = vsyncadd %s770, %s774
          %s776 = smul.addr %s40, 16
          %s777 = scalar_lea.hbm %s14, %s776
          %s779 = sshll.u32 %s772, 4
          %s780 = int_to_ptr.vmem [resolvable:$true] %s779
          %782 = dma.hbm_to_vmem [thread:$0]  %s777, 16, %s780, %s770
        $region96: #{forward.1} parent=51 // pred_fallthru
          _
        // Predicated region
        $region97: #{forward.1} parent=51 // pred_check
          %p783 = pneg %p430
        $region98: #{forward.1} parent=51 // pred_check_branch
          %785 = sbr.rel (%p783) target = $region100
        $region99: #{forward.1} parent=51 // pred_region
          %p786 = scmp.lt.s32.totalorder %s40, 1
          %s787 = scalar_select %p786, %s40, 1
          %s788 = scalar_lea.vmem %s15, %s787
        $region100: #{forward.1} parent=51 // pred_fallthru
          _
      $region52: #{forward.1} parent=5 // pred_fallthru
        _
      %p789 = scmp.le.s32.totalorder 1, %s40
      %p790 = scmp.lt.s32.totalorder %s40, 3
      %p791 = pnand %p789, %p790
      %p792 = pneg %p791
      // Predicated region
      $region101: #{forward.1} parent=5 // pred_check
        _
      $region102: #{forward.1} parent=5 // pred_check_branch
        %794 = sbr.rel (%p791) target = $region104
      $region103: #{forward.1} parent=5 // pred_region
        %s795 = ssub.s32 %s40, 1
        %s796 = sand.u32 %s189, 1
        %s797 = scalar_lea.sflag [#allocation4], %s796
        %s798 = sand.u32 %s189, 1
        %s799 = smul.addr %s798, 64
        %s800 = scalar_lea.vmem [#allocation3], %s799
        // Predicated region
        $region105: #{forward.1} parent=103 // pred_check
          %p801 = pneg %p202
        $region106: #{forward.1} parent=103 // pred_check_branch
          %803 = sbr.rel (%p801) target = $region108
        $region107: #{forward.1} parent=103 // pred_region
          %804 = dma.done %s797, 1024
        $region108: #{forward.1} parent=103 // pred_fallthru
          _
        %s805 = sand.u32 %s45, 1
        %s806 = scalar_lea.sflag [#allocation7], %s805
        %s807 = sand.u32 %s293, 1
        %s808 = smul.addr %s807, 128
        %s809 = scalar_lea.vmem [#allocation6], %s808
        // Predicated region
        $region109: #{forward.1} parent=103 // pred_check
          %p810 = pneg %p306
        $region110: #{forward.1} parent=103 // pred_check_branch
          %812 = sbr.rel (%p810) target = $region112
        $region111: #{forward.1} parent=103 // pred_region
          %813 = dma.done %s806, 2048
        $region112: #{forward.1} parent=103 // pred_fallthru
          _
        %s814 = sand.u32 %s45, 1
        %s815 = scalar_lea.sflag [#allocation7], %s814
        %s816 = sand.u32 %s345, 1
        %s817 = smul.addr %s816, 128
        %s818 = scalar_lea.vmem [#allocation8], %s817
        // Predicated region
        $region113: #{forward.1} parent=103 // pred_check
          %p819 = pneg %p358
        $region114: #{forward.1} parent=103 // pred_check_branch
          %821 = sbr.rel (%p819) target = $region116
        $region115: #{forward.1} parent=103 // pred_region
          %822 = dma.done %s815, 2048
        $region116: #{forward.1} parent=103 // pred_fallthru
          _
        %s823 = sand.u32 %s45, 1
        %s824 = scalar_lea.sflag [#allocation10], %s823
        %s825 = sand.u32 %s397, 1
        %s826 = scalar_lea.vmem [#allocation9], %s825
        // Predicated region
        $region117: #{forward.1} parent=103 // pred_check
          %p827 = pneg %p410
        $region118: #{forward.1} parent=103 // pred_check_branch
          %829 = sbr.rel (%p827) target = $region120
        $region119: #{forward.1} parent=103 // pred_region
          %830 = dma.done %s824, 16
        $region120: #{forward.1} parent=103 // pred_fallthru
          _
        // Predicated region
        $region121: #{forward.1} parent=103 // pred_check
          %p831 = pneg %p457
        $region122: #{forward.1} parent=103 // pred_check_branch
          %833 = sbr.rel (%p831) target = $region124
        $region123: #{forward.1} parent=103 // pred_region
          %834 = dma.done [#allocation10], 1024
        $region124: #{forward.1} parent=103 // pred_fallthru
          _
        // Predicated region
        $region125: #{forward.1} parent=103 // pred_check
          %p835 = pneg %p499
        $region126: #{forward.1} parent=103 // pred_check_branch
          %837 = sbr.rel (%p835) target = $region128
        $region127: #{forward.1} parent=103 // pred_region
          %838 = dma.done [#allocation13], 1024
        $region128: #{forward.1} parent=103 // pred_fallthru
          _
        // Predicated region
        $region129: #{forward.1} parent=103 // pred_check
          %p839 = pneg %p520
        $region130: #{forward.1} parent=103 // pred_check_branch
          %841 = sbr.rel (%p839) target = $region132
        $region131: #{forward.1} parent=103 // pred_region
          %842 = dma.done [#allocation13], 16
        $region132: #{forward.1} parent=103 // pred_fallthru
          _
        %p843 = pneg %p61
        %p844 = pneg %p58
        %p845 = pneg %p82
        %p846 = pneg %p79
        %p847 = pneg %p103
        %p848 = pneg %p100
        %p849 = pneg %p124
        %p850 = pneg %p121
        %p851 = scmp.lt.s32.totalorder %s45, 1
        %s852 = scalar_select %p851, %s45, 1
        %s853 = smul.addr %s852, 48
        %s854 = smul.addr %s853, 4
        %s855 = scalar_lea.vmem %s4, %s854
        %p856 = pneg %p150
        %p857 = pneg %p147
        %p858 = scmp.lt.s32.totalorder %s45, 1
        %s859 = scalar_select %p858, %s45, 1
        %s860 = smul.addr %s859, 3
        %s861 = scalar_lea.vmem %s5, %s860
        %p862 = pneg %p176
        %p863 = pneg %p173
        %s864 = sand.u32 %s189, 1
        %s865 = scalar_lea.sflag [#allocation4], %s864
        %s866 = sand.u32 %s189, 1
        %s867 = smul.addr %s866, 64
        %s868 = scalar_lea.vmem [#allocation3], %s867
        %p869 = pneg %p202
        %p870 = pneg %p199
        %p871 = scmp.lt.s32.totalorder %s45, 1
        %s872 = scalar_select %p871, %s45, 1
        %s873 = scalar_lea.vmem %s7, %s872
        %p874 = pneg %p228
        %p875 = pneg %p225
        %p876 = scmp.lt.s32.totalorder %s45, 1
        %s877 = scalar_select %p876, %s45, 1
        %s878 = scalar_lea.vmem %s8, %s877
        %p879 = pneg %p254
        %p880 = pneg %p251
        %p881 = scmp.lt.s32.totalorder %s45, 1
        %s882 = scalar_select %p881, %s45, 1
        %s883 = scalar_lea.vmem %s9, %s882
        %p884 = pneg %p280
        %p885 = pneg %p277
        %s886 = sand.u32 %s45, 1
        %s887 = scalar_lea.sflag [#allocation7], %s886
        %s888 = sand.u32 %s293, 1
        %s889 = smul.addr %s888, 128
        %s890 = scalar_lea.vmem [#allocation6], %s889
        %p891 = pneg %p306
        %p892 = pneg %p303
        %p893 = scmp.lt.s32.totalorder %s45, 1
        %s894 = scalar_select %p893, %s45, 1
        %s895 = smul.addr %s894, 2
        %s896 = scalar_lea.vmem %s11, %s895
        %p897 = pneg %p332
        %p898 = pneg %p329
        %s899 = sand.u32 %s45, 1
        %s900 = scalar_lea.sflag [#allocation7], %s899
        %s901 = sand.u32 %s345, 1
        %s902 = smul.addr %s901, 128
        %s903 = scalar_lea.vmem [#allocation8], %s902
        %p904 = pneg %p358
        %p905 = pneg %p355
        %p906 = scmp.lt.s32.totalorder %s45, 1
        %s907 = scalar_select %p906, %s45, 1
        %s908 = scalar_lea.vmem %s13, %s907
        %p909 = pneg %p384
        %p910 = pneg %p381
        %s911 = sand.u32 %s45, 1
        %s912 = scalar_lea.sflag [#allocation10], %s911
        %s913 = sand.u32 %s397, 1
        %s914 = scalar_lea.vmem [#allocation9], %s913
        %p915 = pneg %p410
        %p916 = pneg %p407
        %p917 = scmp.lt.s32.totalorder %s45, 1
        %s918 = scalar_select %p917, %s45, 1
        %s919 = scalar_lea.vmem %s15, %s918
        %p920 = pneg %p436
        %p921 = pneg %p433
        %p922 = pneg %p457
        %p923 = pneg %p454
        %p924 = pneg %p478
        %p925 = pneg %p475
        %p926 = pneg %p499
        %p927 = pneg %p496
        %p928 = pneg %p520
        %p929 = pneg %p517
        %p930 = pneg %p541
        %p931 = pneg %p538
        %p932 = pneg %p562
        %p933 = pneg %p559
        %p934 = pneg %p583
        %p935 = pneg %p580
        %p936 = scmp.lt.s32.totalorder %s45, 1
        %s937 = scalar_select %p936, %s45, 1
        %s938 = smul.addr %s937, 48
        %s939 = smul.addr %s938, 4
        %s940 = scalar_lea.vmem %s4, %s939
        %p941 = scmp.lt.s32.totalorder %s45, 1
        %s942 = scalar_select %p941, %s45, 1
        %s943 = smul.addr %s942, 3
        %s944 = scalar_lea.vmem %s5, %s943
        %p945 = scmp.lt.s32.totalorder %s45, 1
        %s946 = scalar_select %p945, %s45, 1
        %s947 = scalar_lea.vmem %s7, %s946
        %p948 = scmp.lt.s32.totalorder %s45, 1
        %s949 = scalar_select %p948, %s45, 1
        %s950 = scalar_lea.vmem %s8, %s949
        %p951 = scmp.lt.s32.totalorder %s45, 1
        %s952 = scalar_select %p951, %s45, 1
        %s953 = scalar_lea.vmem %s9, %s952
        %p954 = scmp.lt.s32.totalorder %s45, 1
        %s955 = scalar_select %p954, %s45, 1
        %s956 = smul.addr %s955, 2
        %s957 = scalar_lea.vmem %s11, %s956
        %p958 = scmp.lt.s32.totalorder %s45, 1
        %s959 = scalar_select %p958, %s45, 1
        %s960 = scalar_lea.vmem %s13, %s959
        %p961 = scmp.lt.s32.totalorder %s45, 1
        %s962 = scalar_select %p961, %s45, 1
        %s963 = scalar_lea.vmem %s15, %s962
        %p965 = scmp.eq.s32.totalorder %s45, 0
        // Predicated region
        $region133: #{forward.1} parent=103 // pred_check
          %p966 = pneg %p965
        $region134: #{forward.1} parent=103 // pred_check_branch
          %968 = sbr.rel (%p966) target = $region136
        $region135: #{forward.1} parent=103 // pred_region
          %v969 = vld [vmem:[%s0] sm:$0xff]
          %v970 = vld [vmem:[%s0 + $0x8] sm:$0xff]
          %v971 = vld [vmem:[%s1] sm:$0x1]
          %v972 = vld [vmem:[%s2] sm:$0x1]
          %973 = vadd.xlane.f32.xlu0 %v969
          %v974 = vpop.xlane.xlu0 %973
          %975 = vadd.xlane.f32.xlu0 %v970
          %v976 = vpop.xlane.xlu0 %975
          %v977 = vrcp.pop 128.0
          %v978 = vmul.f32 %v974, %v977
          %v979 = vmul.f32 %v976, %v977
          %v980 = vsub.f32 %v969, %v978
          %v981 = vsub.f32 %v970, %v979
          %v982 = vmul.f32 %v980, %v980
          %v983 = vmul.f32 %v981, %v981
          %984 = vadd.xlane.f32.xlu0 %v982
          %v985 = vpop.xlane.xlu0 %984
          %986 = vadd.xlane.f32.xlu0 %v983
          %v987 = vpop.xlane.xlu0 %986
          %v988 = vmul.f32 %v985, %v977
          %v989 = vmul.f32 %v987, %v977
          %v990 = vadd.f32 %v988, 1e-05
          %v991 = vadd.f32 %v989, 1e-05
          %v992 = vrsqrt.pop %v990
          %v993 = vrsqrt.pop %v991
          %v994 = vmul.f32 %v980, %v992
          %v995 = vmul.f32 %v981, %v993
          %v997 = vlaneseq
          %v998 = vshrl.u32 %v997, 7
          %v999 = vsub.s32 0, %v998
          %v1000 = vrot.slane %v971, %v999
          %v1002 = vmul.f32 %v994, %v1000
          %v1003 = vmul.f32 %v995, %v1000
          %v1005 = vlaneseq
          %v1006 = vshrl.u32 %v1005, 7
          %v1007 = vsub.s32 0, %v1006
          %v1008 = vrot.slane %v972, %v1007
          %v1010 = vadd.f32 %v1002, %v1008
          %v1011 = vadd.f32 %v1003, %v1008
          %1012 = vst [vmem:[#allocation2] sm:$0xff] %v1010
          %1013 = vst [vmem:[#allocation2 + $0x8] sm:$0xff] %v1011
        $region136: #{forward.1} parent=103 // pred_fallthru
          _
        %v1014 = vld [vmem:[#allocation2] sm:$0xff]
        %v1015 = vld [vmem:[#allocation2 + $0x8] sm:$0xff]
        %v1016 = vld [vmem:[%s940] sm:$0xff]
        %v1017 = vld [vmem:[%s940 + $0x8] sm:$0xf]
        %v1018 = vld [vmem:[%s940 + $0xc] sm:$0xff]
        %v1019 = vld [vmem:[%s940 + $0x14] sm:$0xf]
        %v1020 = vld [vmem:[%s940 + $0x18] sm:$0xff]
        %v1021 = vld [vmem:[%s940 + $0x20] sm:$0xf]
        %v1022 = vld [vmem:[%s940 + $0x24] sm:$0xff]
        %v1023 = vld [vmem:[%s940 + $0x2c] sm:$0xf]
        %v1024 = vld [vmem:[%s940 + $0x30] sm:$0xff]
        %v1025 = vld [vmem:[%s940 + $0x38] sm:$0xf]
        %v1026 = vld [vmem:[%s940 + $0x3c] sm:$0xff]
        %v1027 = vld [vmem:[%s940 + $0x44] sm:$0xf]
        %v1028 = vld [vmem:[%s940 + $0x48] sm:$0xff]
        %v1029 = vld [vmem:[%s940 + $0x50] sm:$0xf]
        %v1030 = vld [vmem:[%s940 + $0x54] sm:$0xff]
        %v1031 = vld [vmem:[%s940 + $0x5c] sm:$0xf]
        %v1032 = vld [vmem:[%s940 + $0x60] sm:$0xff]
        %v1033 = vld [vmem:[%s940 + $0x68] sm:$0xf]
        %v1034 = vld [vmem:[%s940 + $0x6c] sm:$0xff]
        %v1035 = vld [vmem:[%s940 + $0x74] sm:$0xf]
        %v1036 = vld [vmem:[%s940 + $0x78] sm:$0xff]
        %v1037 = vld [vmem:[%s940 + $0x80] sm:$0xf]
        %v1038 = vld [vmem:[%s940 + $0x84] sm:$0xff]
        %v1039 = vld [vmem:[%s940 + $0x8c] sm:$0xf]
        %v1040 = vld [vmem:[%s940 + $0x90] sm:$0xff]
        %v1041 = vld [vmem:[%s940 + $0x98] sm:$0xf]
        %v1042 = vld [vmem:[%s940 + $0x9c] sm:$0xff]
        %v1043 = vld [vmem:[%s940 + $0xa4] sm:$0xf]
        %v1044 = vld [vmem:[%s940 + $0xa8] sm:$0xff]
        %v1045 = vld [vmem:[%s940 + $0xb0] sm:$0xf]
        %v1046 = vld [vmem:[%s940 + $0xb4] sm:$0xff]
        %v1047 = vld [vmem:[%s940 + $0xbc] sm:$0xf]
        %v1048 = vpack.c.bf16 %v1015, %v1014
        %v1049 = vld [vmem:[%s944] sm:$0x7]
        %v1051 = vlaneseq
        %v1052 = vshrl.u32 %v1051, 7
        %v1053 = vsub.s32 0, %v1052
        %v1054 = vrot.slane %v1049, %v1053
        %v1055 = vlaneseq
        %v1056 = vshrl.u32 %v1055, 7
        %v1057 = vsub.s32 1, %v1056
        %v1058 = vrot.slane %v1049, %v1057
        %v1059 = vlaneseq
        %v1060 = vshrl.u32 %v1059, 7
        %v1061 = vsub.s32 2, %v1060
        %v1062 = vrot.slane %v1049, %v1061
        %v1098 = vunpack.c.l.b16 %v1016
        %v1099 = vunpack.c.h.b16 %v1016
        %v1100 = vunpack.c.l.b16 %v1017
        %v1101 = vunpack.c.l.b16 %v1018
        %v1102 = vunpack.c.h.b16 %v1018
        %v1103 = vunpack.c.l.b16 %v1019
        %v1104 = vunpack.c.l.b16 %v1020
        %v1105 = vunpack.c.h.b16 %v1020
        %v1106 = vunpack.c.l.b16 %v1021
        %v1107 = vunpack.c.l.b16 %v1022
        %v1108 = vunpack.c.h.b16 %v1022
        %v1109 = vunpack.c.l.b16 %v1023
        %v1110 = vunpack.c.l.b16 %v1024
        %v1111 = vunpack.c.h.b16 %v1024
        %v1112 = vunpack.c.l.b16 %v1025
        %v1113 = vunpack.c.l.b16 %v1026
        %v1114 = vunpack.c.h.b16 %v1026
        %v1115 = vunpack.c.l.b16 %v1027
        %v1116 = vunpack.c.l.b16 %v1028
        %v1117 = vunpack.c.h.b16 %v1028
        %v1118 = vunpack.c.l.b16 %v1029
        %v1119 = vunpack.c.l.b16 %v1030
        %v1120 = vunpack.c.h.b16 %v1030
        %v1121 = vunpack.c.l.b16 %v1031
        %v1122 = vunpack.c.l.b16 %v1032
        %v1123 = vunpack.c.h.b16 %v1032
        %v1124 = vunpack.c.l.b16 %v1033
        %v1125 = vunpack.c.l.b16 %v1034
        %v1126 = vunpack.c.h.b16 %v1034
        %v1127 = vunpack.c.l.b16 %v1035
        %v1128 = vunpack.c.l.b16 %v1036
        %v1129 = vunpack.c.h.b16 %v1036
        %v1130 = vunpack.c.l.b16 %v1037
        %v1131 = vunpack.c.l.b16 %v1038
        %v1132 = vunpack.c.h.b16 %v1038
        %v1133 = vunpack.c.l.b16 %v1039
        %v1134 = vunpack.c.l.b16 %v1040
        %v1135 = vunpack.c.h.b16 %v1040
        %v1136 = vunpack.c.l.b16 %v1041
        %v1137 = vunpack.c.l.b16 %v1042
        %v1138 = vunpack.c.h.b16 %v1042
        %v1139 = vunpack.c.l.b16 %v1043
        %v1140 = vunpack.c.l.b16 %v1044
        %v1141 = vunpack.c.h.b16 %v1044
        %v1142 = vunpack.c.l.b16 %v1045
        %v1143 = vunpack.c.l.b16 %v1046
        %v1144 = vunpack.c.h.b16 %v1046
        %v1145 = vunpack.c.l.b16 %v1047
        %v1146 = vpack.c.b16 %v1101, %v1098
        %v1147 = vpack.c.b16 %v1102, %v1099
        %v1148 = vpack.c.b16 %v1103, %v1100
        %v1149 = vpack.c.b16 %v1107, %v1104
        %v1150 = vpack.c.b16 %v1108, %v1105
        %v1151 = vpack.c.b16 %v1109, %v1106
        %v1152 = vpack.c.b16 %v1113, %v1110
        %v1153 = vpack.c.b16 %v1114, %v1111
        %v1154 = vpack.c.b16 %v1115, %v1112
        %v1155 = vpack.c.b16 %v1119, %v1116
        %v1156 = vpack.c.b16 %v1120, %v1117
        %v1157 = vpack.c.b16 %v1121, %v1118
        %v1158 = vpack.c.b16 %v1125, %v1122
        %v1159 = vpack.c.b16 %v1126, %v1123
        %v1160 = vpack.c.b16 %v1127, %v1124
        %v1161 = vpack.c.b16 %v1131, %v1128
        %v1162 = vpack.c.b16 %v1132, %v1129
        %v1163 = vpack.c.b16 %v1133, %v1130
        %v1164 = vpack.c.b16 %v1137, %v1134
        %v1165 = vpack.c.b16 %v1138, %v1135
        %v1166 = vpack.c.b16 %v1139, %v1136
        %v1167 = vpack.c.b16 %v1143, %v1140
        %v1168 = vpack.c.b16 %v1144, %v1141
        %v1169 = vpack.c.b16 %v1145, %v1142
        %1194 = vmatprep.subr.bf16.mxu0 %v1168
        %1195 = vmatpush1.bf16.msra.mxu0 %v1167
        %1196 = vmatprep.subr.bf16.mxu0 %v1165
        %1197 = vmatpush1.bf16.msra.mxu0 %v1164
        %1198 = vmatprep.subr.bf16.mxu0 %v1162
        %1199 = vmatpush1.bf16.msra.mxu0 %v1161
        %1200 = vmatprep.subr.bf16.mxu0 %v1159
        %1201 = vmatpush1.bf16.msra.mxu0 %v1158
        %1202 = vmatprep.subr.bf16.mxu0 %v1156
        %1203 = vmatpush1.bf16.msra.mxu0 %v1155
        %1204 = vmatprep.subr.bf16.mxu0 %v1153
        %1205 = vmatpush1.bf16.msra.mxu0 %v1152
        %1206 = vmatprep.subr.bf16.mxu0 %v1150
        %1207 = vmatpush1.bf16.msra.mxu0 %v1149
        %1208 = vmatprep.subr.bf16.mxu0 %v1147
        %1209 = vmatpush1.bf16.msra.mxu0 %v1146
        %1210 = vmatprep.subr.bf16.mxu0 0
        %1211 = vmatpush2.bf16.msra.mxu0 0
        %1212 = vmatprep.subr.bf16.mxu0 0
        %1213 = vmatpush2.bf16.msra.mxu0 0
        %1214 = vmatprep.subr.bf16.mxu0 0
        %1215 = vmatpush2.bf16.msra.mxu0 0
        %1216 = vmatprep.subr.bf16.mxu0 0
        %1217 = vmatpush2.bf16.msra.mxu0 0
        %1218 = vmatprep.subr.bf16.mxu0 0
        %1219 = vmatpush2.bf16.msra.mxu0 0
        %1220 = vmatprep.subr.bf16.mxu0 0
        %1221 = vmatpush2.bf16.msra.mxu0 0
        %1222 = vmatprep.subr.bf16.mxu0 0
        %1223 = vmatpush2.bf16.msra.mxu0 0
        %1224 = vmatprep.subr.bf16.mxu0 0
        %1225 = vmatpush2.bf16.msra.mxu0 0
        %1226 = vmatprep.mubr.bf16.mxu0 0
        %1227 = vmatmul.mubr.bf16.gmra.mxu0 %v1048
        %v1228 = vpop.f32.mrf.mxu0
        %v1229 = vadd.f32 %v1054, %v1228
        %v1230 = vpop.f32.mrf.mxu0
        %v1231 = vadd.f32 %v1058, %v1230
        %v1232 = vpop.f32.mrf.mxu0
        %v1233 = vadd.f32 %v1054, %v1232
        %v1234 = vpop.f32.mrf.mxu0
        %v1235 = vadd.f32 %v1058, %v1234
        %1236 = vdwg.mxu0
        %1237 = vmatprep.subr.bf16.mxu0 0
        %1238 = vmatpush1.bf16.msra.mxu0 %v1169
        %1239 = vmatprep.subr.bf16.mxu0 0
        %1240 = vmatpush1.bf16.msra.mxu0 %v1166
        %1241 = vmatprep.subr.bf16.mxu0 0
        %1242 = vmatpush1.bf16.msra.mxu0 %v1163
        %1243 = vmatprep.subr.bf16.mxu0 0
        %1244 = vmatpush1.bf16.msra.mxu0 %v1160
        %1245 = vmatprep.subr.bf16.mxu0 0
        %1246 = vmatpush1.bf16.msra.mxu0 %v1157
        %1247 = vmatprep.subr.bf16.mxu0 0
        %1248 = vmatpush1.bf16.msra.mxu0 %v1154
        %1249 = vmatprep.subr.bf16.mxu0 0
        %1250 = vmatpush1.bf16.msra.mxu0 %v1151
        %1251 = vmatprep.subr.bf16.mxu0 0
        %1252 = vmatpush1.bf16.msra.mxu0 %v1148
        %1253 = vmatprep.subr.bf16.mxu0 0
        %1254 = vmatpush2.bf16.msra.mxu0 0
        %1255 = vmatprep.subr.bf16.mxu0 0
        %1256 = vmatpush2.bf16.msra.mxu0 0
        %1257 = vmatprep.subr.bf16.mxu0 0
        %1258 = vmatpush2.bf16.msra.mxu0 0
        %1259 = vmatprep.subr.bf16.mxu0 0
        %1260 = vmatpush2.bf16.msra.mxu0 0
        %1261 = vmatprep.subr.bf16.mxu0 0
        %1262 = vmatpush2.bf16.msra.mxu0 0
        %1263 = vmatprep.subr.bf16.mxu0 0
        %1264 = vmatpush2.bf16.msra.mxu0 0
        %1265 = vmatprep.subr.bf16.mxu0 0
        %1266 = vmatpush2.bf16.msra.mxu0 0
        %1267 = vmatprep.subr.bf16.mxu0 0
        %1268 = vmatpush2.bf16.msra.mxu0 0
        %1269 = vmatprep.mubr.bf16.mxu0 0
        %1270 = vmatmul.mubr.bf16.gmra.mxu0 %v1048
        %v1271 = vpop.f32.mrf.mxu0
        %v1272 = vadd.f32 %v1062, %v1271
        %v1273 = vpop.f32.mrf.mxu0
        %v1274 = vpop.f32.mrf.mxu0
        %v1275 = vadd.f32 %v1062, %v1274
        %v1276 = vpop.f32.mrf.mxu0
        %1277 = vdwg.mxu0
        %v1278 = vld [vmem:[%s3] sm:$0x1]
        %v1279 = vld [vmem:[%s3 + $0x1] sm:$0x1]
        %v1280 = vpack.c.bf16 %v1229, %v1229
        %v1281 = vpack.c.bf16 %v1233, %v1233
        %v1282 = vpack.c.bf16 %v1231, %v1231
        %v1283 = vpack.c.bf16 %v1235, %v1235
        %v1284 = vpack.c.bf16 %v1272, %v1272
        %v1285 = vpack.c.bf16 %v1275, %v1275
        %v1288 = vlaneseq
        %v1289 = vshrl.u32 %v1288, 7
        %v1290 = vsub.s32 0, %v1289
        %v1291 = vrot.slane %v1278, %v1290
        %v1292 = vlaneseq
        %v1293 = vshrl.u32 %v1292, 7
        %v1294 = vsub.s32 0, %v1293
        %v1295 = vrot.slane %v1279, %v1294
        %vm1298 = vcmask 261120
        %v1300 = vsel %vm1298, %v1280, 0
        %v1303 = vsel %vm1298, %v1282, 0
        %1305 = vmatprep.subr.bf16.mxu0 0
        %1306 = vmatpush1.bf16.xpose.msra.mxu0 0
        %1307 = vmatprep.subr.bf16.mxu0 0
        %1308 = vmatpush1.bf16.xpose.msra.mxu0 0
        %1309 = vmatprep.subr.bf16.mxu0 0
        %1310 = vmatpush1.bf16.xpose.msra.mxu0 0
        %1311 = vmatprep.subr.bf16.mxu0 0
        %1312 = vmatpush1.bf16.xpose.msra.mxu0 0
        %1313 = vmatprep.subr.bf16.mxu0 0
        %1314 = vmatpush1.bf16.xpose.msra.mxu0 0
        %1315 = vmatprep.subr.bf16.mxu0 0
        %1316 = vmatpush1.bf16.xpose.msra.mxu0 0
        %1317 = vmatprep.subr.bf16.mxu0 0
        %1318 = vmatpush1.bf16.xpose.msra.mxu0 0
        %1319 = vmatprep.subr.bf16.mxu0 0
        %1320 = vmatpush1.bf16.xpose.msra.mxu0 %v1303
        %1321 = vmatprep.subr.bf16.mxu0 0
        %1322 = vmatpush2.bf16.xpose.msra.mxu0 0
        %1323 = vmatprep.subr.bf16.mxu0 0
        %1324 = vmatpush2.bf16.xpose.msra.mxu0 0
        %1325 = vmatprep.subr.bf16.mxu0 0
        %1326 = vmatpush2.bf16.xpose.msra.mxu0 0
        %1327 = vmatprep.subr.bf16.mxu0 0
        %1328 = vmatpush2.bf16.xpose.msra.mxu0 0
        %1329 = vmatprep.subr.bf16.mxu0 0
        %1330 = vmatpush2.bf16.xpose.msra.mxu0 0
        %1331 = vmatprep.subr.bf16.mxu0 0
        %1332 = vmatpush2.bf16.xpose.msra.mxu0 0
        %1333 = vmatprep.subr.bf16.mxu0 0
        %1334 = vmatpush2.bf16.xpose.msra.mxu0 0
        %1335 = vmatprep.subr.bf16.mxu0 0
        %1336 = vmatpush2.bf16.xpose.msra.mxu0 0
        %1337 = vmatprep.mubr.bf16.mxu0 0
        %1338 = vmatmul.mubr.bf16.gmra.mxu0 %v1300
        %v1339 = vpop.f32.mrf.mxu0
        %v1340 = vadd.f32 %v1291, %v1339
        %v1341 = vpop.f32.mrf.mxu0
        %v1342 = vpop.f32.mrf.mxu0
        %v1343 = vpop.f32.mrf.mxu0
        %1344 = vdwg.mxu0
        %v1346 = vsel %vm1298, %v1281, 0
        %v1349 = vsel %vm1298, %v1283, 0
        %1351 = vmatprep.subr.bf16.mxu0 0
        %1352 = vmatpush1.bf16.xpose.msra.mxu0 0
        %1353 = vmatprep.subr.bf16.mxu0 0
        %1354 = vmatpush1.bf16.xpose.msra.mxu0 0
        %1355 = vmatprep.subr.bf16.mxu0 0
        %1356 = vmatpush1.bf16.xpose.msra.mxu0 0
        %1357 = vmatprep.subr.bf16.mxu0 0
        %1358 = vmatpush1.bf16.xpose.msra.mxu0 0
        %1359 = vmatprep.subr.bf16.mxu0 0
        %1360 = vmatpush1.bf16.xpose.msra.mxu0 0
        %1361 = vmatprep.subr.bf16.mxu0 0
        %1362 = vmatpush1.bf16.xpose.msra.mxu0 0
        %1363 = vmatprep.subr.bf16.mxu0 0
        %1364 = vmatpush1.bf16.xpose.msra.mxu0 0
        %1365 = vmatprep.subr.bf16.mxu0 0
        %1366 = vmatpush1.bf16.xpose.msra.mxu0 %v1349
        %1367 = vmatprep.subr.bf16.mxu0 0
        %1368 = vmatpush2.bf16.xpose.msra.mxu0 0
        %1369 = vmatprep.subr.bf16.mxu0 0
        %1370 = vmatpush2.bf16.xpose.msra.mxu0 0
        %1371 = vmatprep.subr.bf16.mxu0 0
        %1372 = vmatpush2.bf16.xpose.msra.mxu0 0
        %1373 = vmatprep.subr.bf16.mxu0 0
        %1374 = vmatpush2.bf16.xpose.msra.mxu0 0
        %1375 = vmatprep.subr.bf16.mxu0 0
        %1376 = vmatpush2.bf16.xpose.msra.mxu0 0
        %1377 = vmatprep.subr.bf16.mxu0 0
        %1378 = vmatpush2.bf16.xpose.msra.mxu0 0
        %1379 = vmatprep.subr.bf16.mxu0 0
        %1380 = vmatpush2.bf16.xpose.msra.mxu0 0
        %1381 = vmatprep.subr.bf16.mxu0 0
        %1382 = vmatpush2.bf16.xpose.msra.mxu0 0
        %1383 = vmatprep.mubr.bf16.mxu0 0
        %1384 = vmatmul.mubr.bf16.gmra.mxu0 %v1346
        %v1385 = vpop.f32.mrf.mxu0
        %v1386 = vadd.f32 %v1295, %v1385
        %v1387 = vpop.f32.mrf.mxu0
        %v1388 = vpop.f32.mrf.mxu0
        %v1389 = vpop.f32.mrf.mxu0
        %1390 = vdwg.mxu0
        %vm1391 = vcmask 64512
        %v1392 = vsel %vm1391, %v1340, -inf
        %1393 = vmax.xlane.f32.xlu0 %v1392
        %v1394 = vpop.xlane.xlu0 %1393
        %v1395 = vsel %vm1391, %v1386, -inf
        %1396 = vmax.xlane.f32.xlu0 %v1395
        %v1397 = vpop.xlane.xlu0 %1396
        %v1398 = vsub.f32 %v1340, %v1394
        %v1399 = vsub.f32 %v1386, %v1397
        %v1400 = vmul.f32 %v1398, 1.442695
        %v1401 = vpow.pop %v1400
        %v1402 = vmul.f32 %v1399, 1.442695
        %v1403 = vpow.pop %v1402
        %v1404 = vsel %vm1391, %v1401, 0.0
        %1405 = vadd.xlane.f32.xlu0 %v1404
        %v1406 = vpop.xlane.xlu0 %1405
        %v1407 = vsel %vm1391, %v1403, 0.0
        %1408 = vadd.xlane.f32.xlu0 %v1407
        %v1409 = vpop.xlane.xlu0 %1408
        %v1410 = vrcp.pop %v1406
        %v1411 = vrcp.pop %v1409
        %v1412 = vmul.f32 %v1401, %v1410
        %v1413 = vmul.f32 %v1403, %v1411
        %v1414 = vpack.c.bf16 %v1412, %v1412
        %v1415 = vpack.c.bf16 %v1413, %v1413
        %v1417 = vsel %vm1391, %v1414, 0
        %vm1419 = vcmask 1043456
        %v1421 = vsel %vm1419, %v1284, 0
        %1423 = vmatprep.subr.bf16.mxu0 0
        %1424 = vmatpush1.bf16.msra.mxu0 0
        %1425 = vmatprep.subr.bf16.mxu0 0
        %1426 = vmatpush1.bf16.msra.mxu0 0
        %1427 = vmatprep.subr.bf16.mxu0 0
        %1428 = vmatpush1.bf16.msra.mxu0 0
        %1429 = vmatprep.subr.bf16.mxu0 0
        %1430 = vmatpush1.bf16.msra.mxu0 0
        %1431 = vmatprep.subr.bf16.mxu0 0
        %1432 = vmatpush1.bf16.msra.mxu0 0
        %1433 = vmatprep.subr.bf16.mxu0 0
        %1434 = vmatpush1.bf16.msra.mxu0 0
        %1435 = vmatprep.subr.bf16.mxu0 0
        %1436 = vmatpush1.bf16.msra.mxu0 0
        %1437 = vmatprep.subr.bf16.mxu0 0
        %1438 = vmatpush1.bf16.msra.mxu0 %v1421
        %1439 = vmatprep.subr.bf16.mxu0 0
        %1440 = vmatpush2.bf16.msra.mxu0 0
        %1441 = vmatprep.subr.bf16.mxu0 0
        %1442 = vmatpush2.bf16.msra.mxu0 0
        %1443 = vmatprep.subr.bf16.mxu0 0
        %1444 = vmatpush2.bf16.msra.mxu0 0
        %1445 = vmatprep.subr.bf16.mxu0 0
        %1446 = vmatpush2.bf16.msra.mxu0 0
        %1447 = vmatprep.subr.bf16.mxu0 0
        %1448 = vmatpush2.bf16.msra.mxu0 0
        %1449 = vmatprep.subr.bf16.mxu0 0
        %1450 = vmatpush2.bf16.msra.mxu0 0
        %1451 = vmatprep.subr.bf16.mxu0 0
        %1452 = vmatpush2.bf16.msra.mxu0 0
        %1453 = vmatprep.subr.bf16.mxu0 0
        %1454 = vmatpush2.bf16.msra.mxu0 0
        %1455 = vmatprep.mubr.bf16.mxu0 0
        %1456 = vmatmul.mubr.bf16.gmra.mxu0 %v1417
        %v1457 = vpop.f32.mrf.mxu0
        %v1458 = vadd.f32 0.0, %v1457
        %v1459 = vpop.f32.mrf.mxu0
        %v1460 = vpop.f32.mrf.mxu0
        %v1461 = vpop.f32.mrf.mxu0
        %1462 = vdwg.mxu0
        %v1464 = vsel %vm1391, %v1415, 0
        %v1467 = vsel %vm1419, %v1285, 0
        %1469 = vmatprep.subr.bf16.mxu0 0
        %1470 = vmatpush1.bf16.msra.mxu0 0
        %1471 = vmatprep.subr.bf16.mxu0 0
        %1472 = vmatpush1.bf16.msra.mxu0 0
        %1473 = vmatprep.subr.bf16.mxu0 0
        %1474 = vmatpush1.bf16.msra.mxu0 0
        %1475 = vmatprep.subr.bf16.mxu0 0
        %1476 = vmatpush1.bf16.msra.mxu0 0
        %1477 = vmatprep.subr.bf16.mxu0 0
        %1478 = vmatpush1.bf16.msra.mxu0 0
        %1479 = vmatprep.subr.bf16.mxu0 0
        %1480 = vmatpush1.bf16.msra.mxu0 0
        %1481 = vmatprep.subr.bf16.mxu0 0
        %1482 = vmatpush1.bf16.msra.mxu0 0
        %1483 = vmatprep.subr.bf16.mxu0 0
        %1484 = vmatpush1.bf16.msra.mxu0 %v1467
        %1485 = vmatprep.subr.bf16.mxu0 0
        %1486 = vmatpush2.bf16.msra.mxu0 0
        %1487 = vmatprep.subr.bf16.mxu0 0
        %1488 = vmatpush2.bf16.msra.mxu0 0
        %1489 = vmatprep.subr.bf16.mxu0 0
        %1490 = vmatpush2.bf16.msra.mxu0 0
        %1491 = vmatprep.subr.bf16.mxu0 0
        %1492 = vmatpush2.bf16.msra.mxu0 0
        %1493 = vmatprep.subr.bf16.mxu0 0
        %1494 = vmatpush2.bf16.msra.mxu0 0
        %1495 = vmatprep.subr.bf16.mxu0 0
        %1496 = vmatpush2.bf16.msra.mxu0 0
        %1497 = vmatprep.subr.bf16.mxu0 0
        %1498 = vmatpush2.bf16.msra.mxu0 0
        %1499 = vmatprep.subr.bf16.mxu0 0
        %1500 = vmatpush2.bf16.msra.mxu0 0
        %1501 = vmatprep.mubr.bf16.mxu0 0
        %1502 = vmatmul.mubr.bf16.gmra.mxu0 %v1464
        %v1503 = vpop.f32.mrf.mxu0
        %v1504 = vadd.f32 0.0, %v1503
        %v1505 = vpop.f32.mrf.mxu0
        %v1506 = vpop.f32.mrf.mxu0
        %v1507 = vpop.f32.mrf.mxu0
        %1508 = vdwg.mxu0
        %1510 = vrot.lane.b32.xlu0 %v1280, 96
        %v1511 = vpop.permute.xlu0 %1510
        %1513 = vrot.lane.b32.xlu0 %v1282, 96
        %v1514 = vpop.permute.xlu0 %1513
        %v1516 = vsel %vm1298, %v1511, 0
        %v1519 = vsel %vm1298, %v1514, 0
        %1521 = vmatprep.subr.bf16.mxu0 0
        %1522 = vmatpush1.bf16.xpose.msra.mxu0 0
        %1523 = vmatprep.subr.bf16.mxu0 0
        %1524 = vmatpush1.bf16.xpose.msra.mxu0 0
        %1525 = vmatprep.subr.bf16.mxu0 0
        %1526 = vmatpush1.bf16.xpose.msra.mxu0 0
        %1527 = vmatprep.subr.bf16.mxu0 0
        %1528 = vmatpush1.bf16.xpose.msra.mxu0 0
        %1529 = vmatprep.subr.bf16.mxu0 0
        %1530 = vmatpush1.bf16.xpose.msra.mxu0 0
        %1531 = vmatprep.subr.bf16.mxu0 0
        %1532 = vmatpush1.bf16.xpose.msra.mxu0 0
        %1533 = vmatprep.subr.bf16.mxu0 0
        %1534 = vmatpush1.bf16.xpose.msra.mxu0 0
        %1535 = vmatprep.subr.bf16.mxu0 0
        %1536 = vmatpush1.bf16.xpose.msra.mxu0 %v1519
        %1537 = vmatprep.subr.bf16.mxu0 0
        %1538 = vmatpush2.bf16.xpose.msra.mxu0 0
        %1539 = vmatprep.subr.bf16.mxu0 0
        %1540 = vmatpush2.bf16.xpose.msra.mxu0 0
        %1541 = vmatprep.subr.bf16.mxu0 0
        %1542 = vmatpush2.bf16.xpose.msra.mxu0 0
        %1543 = vmatprep.subr.bf16.mxu0 0
        %1544 = vmatpush2.bf16.xpose.msra.mxu0 0
        %1545 = vmatprep.subr.bf16.mxu0 0
        %1546 = vmatpush2.bf16.xpose.msra.mxu0 0
        %1547 = vmatprep.subr.bf16.mxu0 0
        %1548 = vmatpush2.bf16.xpose.msra.mxu0 0
        %1549 = vmatprep.subr.bf16.mxu0 0
        %1550 = vmatpush2.bf16.xpose.msra.mxu0 0
        %1551 = vmatprep.subr.bf16.mxu0 0
        %1552 = vmatpush2.bf16.xpose.msra.mxu0 0
        %1553 = vmatprep.mubr.bf16.mxu0 0
        %1554 = vmatmul.mubr.bf16.gmra.mxu0 %v1516
        %v1555 = vpop.f32.mrf.mxu0
        %v1556 = vadd.f32 %v1291, %v1555
        %v1557 = vpop.f32.mrf.mxu0
        %v1558 = vpop.f32.mrf.mxu0
        %v1559 = vpop.f32.mrf.mxu0
        %1560 = vdwg.mxu0
        %1562 = vrot.lane.b32.xlu0 %v1281, 96
        %v1563 = vpop.permute.xlu0 %1562
        %1565 = vrot.lane.b32.xlu0 %v1283, 96
        %v1566 = vpop.permute.xlu0 %1565
        %v1568 = vsel %vm1298, %v1563, 0
        %v1571 = vsel %vm1298, %v1566, 0
        %1573 = vmatprep.subr.bf16.mxu0 0
        %1574 = vmatpush1.bf16.xpose.msra.mxu0 0
        %1575 = vmatprep.subr.bf16.mxu0 0
        %1576 = vmatpush1.bf16.xpose.msra.mxu0 0
        %1577 = vmatprep.subr.bf16.mxu0 0
        %1578 = vmatpush1.bf16.xpose.msra.mxu0 0
        %1579 = vmatprep.subr.bf16.mxu0 0
        %1580 = vmatpush1.bf16.xpose.msra.mxu0 0
        %1581 = vmatprep.subr.bf16.mxu0 0
        %1582 = vmatpush1.bf16.xpose.msra.mxu0 0
        %1583 = vmatprep.subr.bf16.mxu0 0
        %1584 = vmatpush1.bf16.xpose.msra.mxu0 0
        %1585 = vmatprep.subr.bf16.mxu0 0
        %1586 = vmatpush1.bf16.xpose.msra.mxu0 0
        %1587 = vmatprep.subr.bf16.mxu0 0
        %1588 = vmatpush1.bf16.xpose.msra.mxu0 %v1571
        %1589 = vmatprep.subr.bf16.mxu0 0
        %1590 = vmatpush2.bf16.xpose.msra.mxu0 0
        %1591 = vmatprep.subr.bf16.mxu0 0
        %1592 = vmatpush2.bf16.xpose.msra.mxu0 0
        %1593 = vmatprep.subr.bf16.mxu0 0
        %1594 = vmatpush2.bf16.xpose.msra.mxu0 0
        %1595 = vmatprep.subr.bf16.mxu0 0
        %1596 = vmatpush2.bf16.xpose.msra.mxu0 0
        %1597 = vmatprep.subr.bf16.mxu0 0
        %1598 = vmatpush2.bf16.xpose.msra.mxu0 0
        %1599 = vmatprep.subr.bf16.mxu0 0
        %1600 = vmatpush2.bf16.xpose.msra.mxu0 0
        %1601 = vmatprep.subr.bf16.mxu0 0
        %1602 = vmatpush2.bf16.xpose.msra.mxu0 0
        %1603 = vmatprep.subr.bf16.mxu0 0
        %1604 = vmatpush2.bf16.xpose.msra.mxu0 0
        %1605 = vmatprep.mubr.bf16.mxu0 0
        %1606 = vmatmul.mubr.bf16.gmra.mxu0 %v1568
        %v1607 = vpop.f32.mrf.mxu0
        %v1608 = vadd.f32 %v1295, %v1607
        %v1609 = vpop.f32.mrf.mxu0
        %v1610 = vpop.f32.mrf.mxu0
        %v1611 = vpop.f32.mrf.mxu0
        %1612 = vdwg.mxu0
        %v1613 = vsel %vm1391, %v1556, -inf
        %1614 = vmax.xlane.f32.xlu0 %v1613
        %v1615 = vpop.xlane.xlu0 %1614
        %v1616 = vsel %vm1391, %v1608, -inf
        %1617 = vmax.xlane.f32.xlu0 %v1616
        %v1618 = vpop.xlane.xlu0 %1617
        %v1619 = vsub.f32 %v1556, %v1615
        %v1620 = vsub.f32 %v1608, %v1618
        %v1621 = vmul.f32 %v1619, 1.442695
        %v1622 = vpow.pop %v1621
        %v1623 = vmul.f32 %v1620, 1.442695
        %v1624 = vpow.pop %v1623
        %v1625 = vsel %vm1391, %v1622, 0.0
        %1626 = vadd.xlane.f32.xlu0 %v1625
        %v1627 = vpop.xlane.xlu0 %1626
        %v1628 = vsel %vm1391, %v1624, 0.0
        %1629 = vadd.xlane.f32.xlu0 %v1628
        %v1630 = vpop.xlane.xlu0 %1629
        %v1631 = vrcp.pop %v1627
        %v1632 = vrcp.pop %v1630
        %v1633 = vmul.f32 %v1622, %v1631
        %v1634 = vmul.f32 %v1624, %v1632
        %v1635 = vpack.c.bf16 %v1633, %v1633
        %v1636 = vpack.c.bf16 %v1634, %v1634
        %1638 = vrot.lane.b32.xlu0 %v1284, 96
        %v1639 = vpop.permute.xlu0 %1638
        %v1641 = vsel %vm1391, %v1635, 0
        %v1644 = vsel %vm1419, %v1639, 0
        %1646 = vmatprep.subr.bf16.mxu0 0
        %1647 = vmatpush1.bf16.msra.mxu0 0
        %1648 = vmatprep.subr.bf16.mxu0 0
        %1649 = vmatpush1.bf16.msra.mxu0 0
        %1650 = vmatprep.subr.bf16.mxu0 0
        %1651 = vmatpush1.bf16.msra.mxu0 0
        %1652 = vmatprep.subr.bf16.mxu0 0
        %1653 = vmatpush1.bf16.msra.mxu0 0
        %1654 = vmatprep.subr.bf16.mxu0 0
        %1655 = vmatpush1.bf16.msra.mxu0 0
        %1656 = vmatprep.subr.bf16.mxu0 0
        %1657 = vmatpush1.bf16.msra.mxu0 0
        %1658 = vmatprep.subr.bf16.mxu0 0
        %1659 = vmatpush1.bf16.msra.mxu0 0
        %1660 = vmatprep.subr.bf16.mxu0 0
        %1661 = vmatpush1.bf16.msra.mxu0 %v1644
        %1662 = vmatprep.subr.bf16.mxu0 0
        %1663 = vmatpush2.bf16.msra.mxu0 0
        %1664 = vmatprep.subr.bf16.mxu0 0
        %1665 = vmatpush2.bf16.msra.mxu0 0
        %1666 = vmatprep.subr.bf16.mxu0 0
        %1667 = vmatpush2.bf16.msra.mxu0 0
        %1668 = vmatprep.subr.bf16.mxu0 0
        %1669 = vmatpush2.bf16.msra.mxu0 0
        %1670 = vmatprep.subr.bf16.mxu0 0
        %1671 = vmatpush2.bf16.msra.mxu0 0
        %1672 = vmatprep.subr.bf16.mxu0 0
        %1673 = vmatpush2.bf16.msra.mxu0 0
        %1674 = vmatprep.subr.bf16.mxu0 0
        %1675 = vmatpush2.bf16.msra.mxu0 0
        %1676 = vmatprep.subr.bf16.mxu0 0
        %1677 = vmatpush2.bf16.msra.mxu0 0
        %1678 = vmatprep.mubr.bf16.mxu0 0
        %1679 = vmatmul.mubr.bf16.gmra.mxu0 %v1641
        %v1680 = vpop.f32.mrf.mxu0
        %v1681 = vadd.f32 0.0, %v1680
        %v1682 = vpop.f32.mrf.mxu0
        %v1683 = vpop.f32.mrf.mxu0
        %v1684 = vpop.f32.mrf.mxu0
        %1685 = vdwg.mxu0
        %1687 = vrot.lane.b32.xlu0 %v1285, 96
        %v1688 = vpop.permute.xlu0 %1687
        %v1690 = vsel %vm1391, %v1636, 0
        %v1693 = vsel %vm1419, %v1688, 0
        %1695 = vmatprep.subr.bf16.mxu0 0
        %1696 = vmatpush1.bf16.msra.mxu0 0
        %1697 = vmatprep.subr.bf16.mxu0 0
        %1698 = vmatpush1.bf16.msra.mxu0 0
        %1699 = vmatprep.subr.bf16.mxu0 0
        %1700 = vmatpush1.bf16.msra.mxu0 0
        %1701 = vmatprep.subr.bf16.mxu0 0
        %1702 = vmatpush1.bf16.msra.mxu0 0
        %1703 = vmatprep.subr.bf16.mxu0 0
        %1704 = vmatpush1.bf16.msra.mxu0 0
        %1705 = vmatprep.subr.bf16.mxu0 0
        %1706 = vmatpush1.bf16.msra.mxu0 0
        %1707 = vmatprep.subr.bf16.mxu0 0
        %1708 = vmatpush1.bf16.msra.mxu0 0
        %1709 = vmatprep.subr.bf16.mxu0 0
        %1710 = vmatpush1.bf16.msra.mxu0 %v1693
        %1711 = vmatprep.subr.bf16.mxu0 0
        %1712 = vmatpush2.bf16.msra.mxu0 0
        %1713 = vmatprep.subr.bf16.mxu0 0
        %1714 = vmatpush2.bf16.msra.mxu0 0
        %1715 = vmatprep.subr.bf16.mxu0 0
        %1716 = vmatpush2.bf16.msra.mxu0 0
        %1717 = vmatprep.subr.bf16.mxu0 0
        %1718 = vmatpush2.bf16.msra.mxu0 0
        %1719 = vmatprep.subr.bf16.mxu0 0
        %1720 = vmatpush2.bf16.msra.mxu0 0
        %1721 = vmatprep.subr.bf16.mxu0 0
        %1722 = vmatpush2.bf16.msra.mxu0 0
        %1723 = vmatprep.subr.bf16.mxu0 0
        %1724 = vmatpush2.bf16.msra.mxu0 0
        %1725 = vmatprep.subr.bf16.mxu0 0
        %1726 = vmatpush2.bf16.msra.mxu0 0
        %1727 = vmatprep.mubr.bf16.mxu0 0
        %1728 = vmatmul.mubr.bf16.gmra.mxu0 %v1690
        %v1729 = vpop.f32.mrf.mxu0
        %v1730 = vadd.f32 0.0, %v1729
        %v1731 = vpop.f32.mrf.mxu0
        %v1732 = vpop.f32.mrf.mxu0
        %v1733 = vpop.f32.mrf.mxu0
        %1734 = vdwg.mxu0
        %1735 = vrot.lane.b32.xlu0 %v1280, 64
        %v1736 = vpop.permute.xlu0 %1735
        %1737 = vrot.lane.b32.xlu0 %v1282, 64
        %v1738 = vpop.permute.xlu0 %1737
        %v1740 = vsel %vm1298, %v1736, 0
        %v1743 = vsel %vm1298, %v1738, 0
        %1745 = vmatprep.subr.bf16.mxu0 0
        %1746 = vmatpush1.bf16.xpose.msra.mxu0 0
        %1747 = vmatprep.subr.bf16.mxu0 0
        %1748 = vmatpush1.bf16.xpose.msra.mxu0 0
        %1749 = vmatprep.subr.bf16.mxu0 0
        %1750 = vmatpush1.bf16.xpose.msra.mxu0 0
        %1751 = vmatprep.subr.bf16.mxu0 0
        %1752 = vmatpush1.bf16.xpose.msra.mxu0 0
        %1753 = vmatprep.subr.bf16.mxu0 0
        %1754 = vmatpush1.bf16.xpose.msra.mxu0 0
        %1755 = vmatprep.subr.bf16.mxu0 0
        %1756 = vmatpush1.bf16.xpose.msra.mxu0 0
        %1757 = vmatprep.subr.bf16.mxu0 0
        %1758 = vmatpush1.bf16.xpose.msra.mxu0 0
        %1759 = vmatprep.subr.bf16.mxu0 0
        %1760 = vmatpush1.bf16.xpose.msra.mxu0 %v1743
        %1761 = vmatprep.subr.bf16.mxu0 0
        %1762 = vmatpush2.bf16.xpose.msra.mxu0 0
        %1763 = vmatprep.subr.bf16.mxu0 0
        %1764 = vmatpush2.bf16.xpose.msra.mxu0 0
        %1765 = vmatprep.subr.bf16.mxu0 0
        %1766 = vmatpush2.bf16.xpose.msra.mxu0 0
        %1767 = vmatprep.subr.bf16.mxu0 0
        %1768 = vmatpush2.bf16.xpose.msra.mxu0 0
        %1769 = vmatprep.subr.bf16.mxu0 0
        %1770 = vmatpush2.bf16.xpose.msra.mxu0 0
        %1771 = vmatprep.subr.bf16.mxu0 0
        %1772 = vmatpush2.bf16.xpose.msra.mxu0 0
        %1773 = vmatprep.subr.bf16.mxu0 0
        %1774 = vmatpush2.bf16.xpose.msra.mxu0 0
        %1775 = vmatprep.subr.bf16.mxu0 0
        %1776 = vmatpush2.bf16.xpose.msra.mxu0 0
        %1777 = vmatprep.mubr.bf16.mxu0 0
        %1778 = vmatmul.mubr.bf16.gmra.mxu0 %v1740
        %v1779 = vpop.f32.mrf.mxu0
        %v1780 = vadd.f32 %v1291, %v1779
        %v1781 = vpop.f32.mrf.mxu0
        %v1782 = vpop.f32.mrf.mxu0
        %v1783 = vpop.f32.mrf.mxu0
        %1784 = vdwg.mxu0
        %1785 = vrot.lane.b32.xlu0 %v1281, 64
        %v1786 = vpop.permute.xlu0 %1785
        %1787 = vrot.lane.b32.xlu0 %v1283, 64
        %v1788 = vpop.permute.xlu0 %1787
        %v1790 = vsel %vm1298, %v1786, 0
        %v1793 = vsel %vm1298, %v1788, 0
        %1795 = vmatprep.subr.bf16.mxu0 0
        %1796 = vmatpush1.bf16.xpose.msra.mxu0 0
        %1797 = vmatprep.subr.bf16.mxu0 0
        %1798 = vmatpush1.bf16.xpose.msra.mxu0 0
        %1799 = vmatprep.subr.bf16.mxu0 0
        %1800 = vmatpush1.bf16.xpose.msra.mxu0 0
        %1801 = vmatprep.subr.bf16.mxu0 0
        %1802 = vmatpush1.bf16.xpose.msra.mxu0 0
        %1803 = vmatprep.subr.bf16.mxu0 0
        %1804 = vmatpush1.bf16.xpose.msra.mxu0 0
        %1805 = vmatprep.subr.bf16.mxu0 0
        %1806 = vmatpush1.bf16.xpose.msra.mxu0 0
        %1807 = vmatprep.subr.bf16.mxu0 0
        %1808 = vmatpush1.bf16.xpose.msra.mxu0 0
        %1809 = vmatprep.subr.bf16.mxu0 0
        %1810 = vmatpush1.bf16.xpose.msra.mxu0 %v1793
        %1811 = vmatprep.subr.bf16.mxu0 0
        %1812 = vmatpush2.bf16.xpose.msra.mxu0 0
        %1813 = vmatprep.subr.bf16.mxu0 0
        %1814 = vmatpush2.bf16.xpose.msra.mxu0 0
        %1815 = vmatprep.subr.bf16.mxu0 0
        %1816 = vmatpush2.bf16.xpose.msra.mxu0 0
        %1817 = vmatprep.subr.bf16.mxu0 0
        %1818 = vmatpush2.bf16.xpose.msra.mxu0 0
        %1819 = vmatprep.subr.bf16.mxu0 0
        %1820 = vmatpush2.bf16.xpose.msra.mxu0 0
        %1821 = vmatprep.subr.bf16.mxu0 0
        %1822 = vmatpush2.bf16.xpose.msra.mxu0 0
        %1823 = vmatprep.subr.bf16.mxu0 0
        %1824 = vmatpush2.bf16.xpose.msra.mxu0 0
        %1825 = vmatprep.subr.bf16.mxu0 0
        %1826 = vmatpush2.bf16.xpose.msra.mxu0 0
        %1827 = vmatprep.mubr.bf16.mxu0 0
        %1828 = vmatmul.mubr.bf16.gmra.mxu0 %v1790
        %v1829 = vpop.f32.mrf.mxu0
        %v1830 = vadd.f32 %v1295, %v1829
        %v1831 = vpop.f32.mrf.mxu0
        %v1832 = vpop.f32.mrf.mxu0
        %v1833 = vpop.f32.mrf.mxu0
        %1834 = vdwg.mxu0
        %v1835 = vsel %vm1391, %v1780, -inf
        %1836 = vmax.xlane.f32.xlu0 %v1835
        %v1837 = vpop.xlane.xlu0 %1836
        %v1838 = vsel %vm1391, %v1830, -inf
        %1839 = vmax.xlane.f32.xlu0 %v1838
        %v1840 = vpop.xlane.xlu0 %1839
        %v1841 = vsub.f32 %v1780, %v1837
        %v1842 = vsub.f32 %v1830, %v1840
        %v1843 = vmul.f32 %v1841, 1.442695
        %v1844 = vpow.pop %v1843
        %v1845 = vmul.f32 %v1842, 1.442695
        %v1846 = vpow.pop %v1845
        %v1847 = vsel %vm1391, %v1844, 0.0
        %1848 = vadd.xlane.f32.xlu0 %v1847
        %v1849 = vpop.xlane.xlu0 %1848
        %v1850 = vsel %vm1391, %v1846, 0.0
        %1851 = vadd.xlane.f32.xlu0 %v1850
        %v1852 = vpop.xlane.xlu0 %1851
        %v1853 = vrcp.pop %v1849
        %v1854 = vrcp.pop %v1852
        %v1855 = vmul.f32 %v1844, %v1853
        %v1856 = vmul.f32 %v1846, %v1854
        %v1857 = vpack.c.bf16 %v1855, %v1855
        %v1858 = vpack.c.bf16 %v1856, %v1856
        %1859 = vrot.lane.b32.xlu0 %v1284, 64
        %v1860 = vpop.permute.xlu0 %1859
        %v1862 = vsel %vm1391, %v1857, 0
        %v1865 = vsel %vm1419, %v1860, 0
        %1867 = vmatprep.subr.bf16.mxu0 0
        %1868 = vmatpush1.bf16.msra.mxu0 0
        %1869 = vmatprep.subr.bf16.mxu0 0
        %1870 = vmatpush1.bf16.msra.mxu0 0
        %1871 = vmatprep.subr.bf16.mxu0 0
        %1872 = vmatpush1.bf16.msra.mxu0 0
        %1873 = vmatprep.subr.bf16.mxu0 0
        %1874 = vmatpush1.bf16.msra.mxu0 0
        %1875 = vmatprep.subr.bf16.mxu0 0
        %1876 = vmatpush1.bf16.msra.mxu0 0
        %1877 = vmatprep.subr.bf16.mxu0 0
        %1878 = vmatpush1.bf16.msra.mxu0 0
        %1879 = vmatprep.subr.bf16.mxu0 0
        %1880 = vmatpush1.bf16.msra.mxu0 0
        %1881 = vmatprep.subr.bf16.mxu0 0
        %1882 = vmatpush1.bf16.msra.mxu0 %v1865
        %1883 = vmatprep.subr.bf16.mxu0 0
        %1884 = vmatpush2.bf16.msra.mxu0 0
        %1885 = vmatprep.subr.bf16.mxu0 0
        %1886 = vmatpush2.bf16.msra.mxu0 0
        %1887 = vmatprep.subr.bf16.mxu0 0
        %1888 = vmatpush2.bf16.msra.mxu0 0
        %1889 = vmatprep.subr.bf16.mxu0 0
        %1890 = vmatpush2.bf16.msra.mxu0 0
        %1891 = vmatprep.subr.bf16.mxu0 0
        %1892 = vmatpush2.bf16.msra.mxu0 0
        %1893 = vmatprep.subr.bf16.mxu0 0
        %1894 = vmatpush2.bf16.msra.mxu0 0
        %1895 = vmatprep.subr.bf16.mxu0 0
        %1896 = vmatpush2.bf16.msra.mxu0 0
        %1897 = vmatprep.subr.bf16.mxu0 0
        %1898 = vmatpush2.bf16.msra.mxu0 0
        %1899 = vmatprep.mubr.bf16.mxu0 0
        %1900 = vmatmul.mubr.bf16.gmra.mxu0 %v1862
        %v1901 = vpop.f32.mrf.mxu0
        %v1902 = vadd.f32 0.0, %v1901
        %v1903 = vpop.f32.mrf.mxu0
        %v1904 = vpop.f32.mrf.mxu0
        %v1905 = vpop.f32.mrf.mxu0
        %1906 = vdwg.mxu0
        %1907 = vrot.lane.b32.xlu0 %v1285, 64
        %v1908 = vpop.permute.xlu0 %1907
        %v1910 = vsel %vm1391, %v1858, 0
        %v1913 = vsel %vm1419, %v1908, 0
        %1915 = vmatprep.subr.bf16.mxu0 0
        %1916 = vmatpush1.bf16.msra.mxu0 0
        %1917 = vmatprep.subr.bf16.mxu0 0
        %1918 = vmatpush1.bf16.msra.mxu0 0
        %1919 = vmatprep.subr.bf16.mxu0 0
        %1920 = vmatpush1.bf16.msra.mxu0 0
        %1921 = vmatprep.subr.bf16.mxu0 0
        %1922 = vmatpush1.bf16.msra.mxu0 0
        %1923 = vmatprep.subr.bf16.mxu0 0
        %1924 = vmatpush1.bf16.msra.mxu0 0
        %1925 = vmatprep.subr.bf16.mxu0 0
        %1926 = vmatpush1.bf16.msra.mxu0 0
        %1927 = vmatprep.subr.bf16.mxu0 0
        %1928 = vmatpush1.bf16.msra.mxu0 0
        %1929 = vmatprep.subr.bf16.mxu0 0
        %1930 = vmatpush1.bf16.msra.mxu0 %v1913
        %1931 = vmatprep.subr.bf16.mxu0 0
        %1932 = vmatpush2.bf16.msra.mxu0 0
        %1933 = vmatprep.subr.bf16.mxu0 0
        %1934 = vmatpush2.bf16.msra.mxu0 0
        %1935 = vmatprep.subr.bf16.mxu0 0
        %1936 = vmatpush2.bf16.msra.mxu0 0
        %1937 = vmatprep.subr.bf16.mxu0 0
        %1938 = vmatpush2.bf16.msra.mxu0 0
        %1939 = vmatprep.subr.bf16.mxu0 0
        %1940 = vmatpush2.bf16.msra.mxu0 0
        %1941 = vmatprep.subr.bf16.mxu0 0
        %1942 = vmatpush2.bf16.msra.mxu0 0
        %1943 = vmatprep.subr.bf16.mxu0 0
        %1944 = vmatpush2.bf16.msra.mxu0 0
        %1945 = vmatprep.subr.bf16.mxu0 0
        %1946 = vmatpush2.bf16.msra.mxu0 0
        %1947 = vmatprep.mubr.bf16.mxu0 0
        %1948 = vmatmul.mubr.bf16.gmra.mxu0 %v1910
        %v1949 = vpop.f32.mrf.mxu0
        %v1950 = vadd.f32 0.0, %v1949
        %v1951 = vpop.f32.mrf.mxu0
        %v1952 = vpop.f32.mrf.mxu0
        %v1953 = vpop.f32.mrf.mxu0
        %1954 = vdwg.mxu0
        %1955 = vrot.lane.b32.xlu0 %v1280, 32
        %v1956 = vpop.permute.xlu0 %1955
        %1957 = vrot.lane.b32.xlu0 %v1282, 32
        %v1958 = vpop.permute.xlu0 %1957
        %v1960 = vsel %vm1298, %v1956, 0
        %v1963 = vsel %vm1298, %v1958, 0
        %1965 = vmatprep.subr.bf16.mxu0 0
        %1966 = vmatpush1.bf16.xpose.msra.mxu0 0
        %1967 = vmatprep.subr.bf16.mxu0 0
        %1968 = vmatpush1.bf16.xpose.msra.mxu0 0
        %1969 = vmatprep.subr.bf16.mxu0 0
        %1970 = vmatpush1.bf16.xpose.msra.mxu0 0
        %1971 = vmatprep.subr.bf16.mxu0 0
        %1972 = vmatpush1.bf16.xpose.msra.mxu0 0
        %1973 = vmatprep.subr.bf16.mxu0 0
        %1974 = vmatpush1.bf16.xpose.msra.mxu0 0
        %1975 = vmatprep.subr.bf16.mxu0 0
        %1976 = vmatpush1.bf16.xpose.msra.mxu0 0
        %1977 = vmatprep.subr.bf16.mxu0 0
        %1978 = vmatpush1.bf16.xpose.msra.mxu0 0
        %1979 = vmatprep.subr.bf16.mxu0 0
        %1980 = vmatpush1.bf16.xpose.msra.mxu0 %v1963
        %1981 = vmatprep.subr.bf16.mxu0 0
        %1982 = vmatpush2.bf16.xpose.msra.mxu0 0
        %1983 = vmatprep.subr.bf16.mxu0 0
        %1984 = vmatpush2.bf16.xpose.msra.mxu0 0
        %1985 = vmatprep.subr.bf16.mxu0 0
        %1986 = vmatpush2.bf16.xpose.msra.mxu0 0
        %1987 = vmatprep.subr.bf16.mxu0 0
        %1988 = vmatpush2.bf16.xpose.msra.mxu0 0
        %1989 = vmatprep.subr.bf16.mxu0 0
        %1990 = vmatpush2.bf16.xpose.msra.mxu0 0
        %1991 = vmatprep.subr.bf16.mxu0 0
        %1992 = vmatpush2.bf16.xpose.msra.mxu0 0
        %1993 = vmatprep.subr.bf16.mxu0 0
        %1994 = vmatpush2.bf16.xpose.msra.mxu0 0
        %1995 = vmatprep.subr.bf16.mxu0 0
        %1996 = vmatpush2.bf16.xpose.msra.mxu0 0
        %1997 = vmatprep.mubr.bf16.mxu0 0
        %1998 = vmatmul.mubr.bf16.gmra.mxu0 %v1960
        %v1999 = vpop.f32.mrf.mxu0
        %v2000 = vadd.f32 %v1291, %v1999
        %v2001 = vpop.f32.mrf.mxu0
        %v2002 = vpop.f32.mrf.mxu0
        %v2003 = vpop.f32.mrf.mxu0
        %2004 = vdwg.mxu0
        %2005 = vrot.lane.b32.xlu0 %v1281, 32
        %v2006 = vpop.permute.xlu0 %2005
        %2007 = vrot.lane.b32.xlu0 %v1283, 32
        %v2008 = vpop.permute.xlu0 %2007
        %v2010 = vsel %vm1298, %v2006, 0
        %v2013 = vsel %vm1298, %v2008, 0
        %2015 = vmatprep.subr.bf16.mxu0 0
        %2016 = vmatpush1.bf16.xpose.msra.mxu0 0
        %2017 = vmatprep.subr.bf16.mxu0 0
        %2018 = vmatpush1.bf16.xpose.msra.mxu0 0
        %2019 = vmatprep.subr.bf16.mxu0 0
        %2020 = vmatpush1.bf16.xpose.msra.mxu0 0
        %2021 = vmatprep.subr.bf16.mxu0 0
        %2022 = vmatpush1.bf16.xpose.msra.mxu0 0
        %2023 = vmatprep.subr.bf16.mxu0 0
        %2024 = vmatpush1.bf16.xpose.msra.mxu0 0
        %2025 = vmatprep.subr.bf16.mxu0 0
        %2026 = vmatpush1.bf16.xpose.msra.mxu0 0
        %2027 = vmatprep.subr.bf16.mxu0 0
        %2028 = vmatpush1.bf16.xpose.msra.mxu0 0
        %2029 = vmatprep.subr.bf16.mxu0 0
        %2030 = vmatpush1.bf16.xpose.msra.mxu0 %v2013
        %2031 = vmatprep.subr.bf16.mxu0 0
        %2032 = vmatpush2.bf16.xpose.msra.mxu0 0
        %2033 = vmatprep.subr.bf16.mxu0 0
        %2034 = vmatpush2.bf16.xpose.msra.mxu0 0
        %2035 = vmatprep.subr.bf16.mxu0 0
        %2036 = vmatpush2.bf16.xpose.msra.mxu0 0
        %2037 = vmatprep.subr.bf16.mxu0 0
        %2038 = vmatpush2.bf16.xpose.msra.mxu0 0
        %2039 = vmatprep.subr.bf16.mxu0 0
        %2040 = vmatpush2.bf16.xpose.msra.mxu0 0
        %2041 = vmatprep.subr.bf16.mxu0 0
        %2042 = vmatpush2.bf16.xpose.msra.mxu0 0
        %2043 = vmatprep.subr.bf16.mxu0 0
        %2044 = vmatpush2.bf16.xpose.msra.mxu0 0
        %2045 = vmatprep.subr.bf16.mxu0 0
        %2046 = vmatpush2.bf16.xpose.msra.mxu0 0
        %2047 = vmatprep.mubr.bf16.mxu0 0
        %2048 = vmatmul.mubr.bf16.gmra.mxu0 %v2010
        %v2049 = vpop.f32.mrf.mxu0
        %v2050 = vadd.f32 %v1295, %v2049
        %v2051 = vpop.f32.mrf.mxu0
        %v2052 = vpop.f32.mrf.mxu0
        %v2053 = vpop.f32.mrf.mxu0
        %2054 = vdwg.mxu0
        %v2055 = vsel %vm1391, %v2000, -inf
        %2056 = vmax.xlane.f32.xlu0 %v2055
        %v2057 = vpop.xlane.xlu0 %2056
        %v2058 = vsel %vm1391, %v2050, -inf
        %2059 = vmax.xlane.f32.xlu0 %v2058
        %v2060 = vpop.xlane.xlu0 %2059
        %v2061 = vsub.f32 %v2000, %v2057
        %v2062 = vsub.f32 %v2050, %v2060
        %v2063 = vmul.f32 %v2061, 1.442695
        %v2064 = vpow.pop %v2063
        %v2065 = vmul.f32 %v2062, 1.442695
        %v2066 = vpow.pop %v2065
        %v2067 = vsel %vm1391, %v2064, 0.0
        %2068 = vadd.xlane.f32.xlu0 %v2067
        %v2069 = vpop.xlane.xlu0 %2068
        %v2070 = vsel %vm1391, %v2066, 0.0
        %2071 = vadd.xlane.f32.xlu0 %v2070
        %v2072 = vpop.xlane.xlu0 %2071
        %v2073 = vrcp.pop %v2069
        %v2074 = vrcp.pop %v2072
        %v2075 = vmul.f32 %v2064, %v2073
        %v2076 = vmul.f32 %v2066, %v2074
        %v2077 = vpack.c.bf16 %v2075, %v2075
        %v2078 = vpack.c.bf16 %v2076, %v2076
        %2079 = vrot.lane.b32.xlu0 %v1284, 32
        %v2080 = vpop.permute.xlu0 %2079
        %v2082 = vsel %vm1391, %v2077, 0
        %v2085 = vsel %vm1419, %v2080, 0
        %2087 = vmatprep.subr.bf16.mxu0 0
        %2088 = vmatpush1.bf16.msra.mxu0 0
        %2089 = vmatprep.subr.bf16.mxu0 0
        %2090 = vmatpush1.bf16.msra.mxu0 0
        %2091 = vmatprep.subr.bf16.mxu0 0
        %2092 = vmatpush1.bf16.msra.mxu0 0
        %2093 = vmatprep.subr.bf16.mxu0 0
        %2094 = vmatpush1.bf16.msra.mxu0 0
        %2095 = vmatprep.subr.bf16.mxu0 0
        %2096 = vmatpush1.bf16.msra.mxu0 0
        %2097 = vmatprep.subr.bf16.mxu0 0
        %2098 = vmatpush1.bf16.msra.mxu0 0
        %2099 = vmatprep.subr.bf16.mxu0 0
        %2100 = vmatpush1.bf16.msra.mxu0 0
        %2101 = vmatprep.subr.bf16.mxu0 0
        %2102 = vmatpush1.bf16.msra.mxu0 %v2085
        %2103 = vmatprep.subr.bf16.mxu0 0
        %2104 = vmatpush2.bf16.msra.mxu0 0
        %2105 = vmatprep.subr.bf16.mxu0 0
        %2106 = vmatpush2.bf16.msra.mxu0 0
        %2107 = vmatprep.subr.bf16.mxu0 0
        %2108 = vmatpush2.bf16.msra.mxu0 0
        %2109 = vmatprep.subr.bf16.mxu0 0
        %2110 = vmatpush2.bf16.msra.mxu0 0
        %2111 = vmatprep.subr.bf16.mxu0 0
        %2112 = vmatpush2.bf16.msra.mxu0 0
        %2113 = vmatprep.subr.bf16.mxu0 0
        %2114 = vmatpush2.bf16.msra.mxu0 0
        %2115 = vmatprep.subr.bf16.mxu0 0
        %2116 = vmatpush2.bf16.msra.mxu0 0
        %2117 = vmatprep.subr.bf16.mxu0 0
        %2118 = vmatpush2.bf16.msra.mxu0 0
        %2119 = vmatprep.mubr.bf16.mxu0 0
        %2120 = vmatmul.mubr.bf16.gmra.mxu0 %v2082
        %v2121 = vpop.f32.mrf.mxu0
        %v2122 = vadd.f32 0.0, %v2121
        %v2123 = vpop.f32.mrf.mxu0
        %v2124 = vpop.f32.mrf.mxu0
        %v2125 = vpop.f32.mrf.mxu0
        %2126 = vdwg.mxu0
        %2127 = vrot.lane.b32.xlu0 %v1285, 32
        %v2128 = vpop.permute.xlu0 %2127
        %v2130 = vsel %vm1391, %v2078, 0
        %v2133 = vsel %vm1419, %v2128, 0
        %2135 = vmatprep.subr.bf16.mxu0 0
        %2136 = vmatpush1.bf16.msra.mxu0 0
        %2137 = vmatprep.subr.bf16.mxu0 0
        %2138 = vmatpush1.bf16.msra.mxu0 0
        %2139 = vmatprep.subr.bf16.mxu0 0
        %2140 = vmatpush1.bf16.msra.mxu0 0
        %2141 = vmatprep.subr.bf16.mxu0 0
        %2142 = vmatpush1.bf16.msra.mxu0 0
        %2143 = vmatprep.subr.bf16.mxu0 0
        %2144 = vmatpush1.bf16.msra.mxu0 0
        %2145 = vmatprep.subr.bf16.mxu0 0
        %2146 = vmatpush1.bf16.msra.mxu0 0
        %2147 = vmatprep.subr.bf16.mxu0 0
        %2148 = vmatpush1.bf16.msra.mxu0 0
        %2149 = vmatprep.subr.bf16.mxu0 0
        %2150 = vmatpush1.bf16.msra.mxu0 %v2133
        %2151 = vmatprep.subr.bf16.mxu0 0
        %2152 = vmatpush2.bf16.msra.mxu0 0
        %2153 = vmatprep.subr.bf16.mxu0 0
        %2154 = vmatpush2.bf16.msra.mxu0 0
        %2155 = vmatprep.subr.bf16.mxu0 0
        %2156 = vmatpush2.bf16.msra.mxu0 0
        %2157 = vmatprep.subr.bf16.mxu0 0
        %2158 = vmatpush2.bf16.msra.mxu0 0
        %2159 = vmatprep.subr.bf16.mxu0 0
        %2160 = vmatpush2.bf16.msra.mxu0 0
        %2161 = vmatprep.subr.bf16.mxu0 0
        %2162 = vmatpush2.bf16.msra.mxu0 0
        %2163 = vmatprep.subr.bf16.mxu0 0
        %2164 = vmatpush2.bf16.msra.mxu0 0
        %2165 = vmatprep.subr.bf16.mxu0 0
        %2166 = vmatpush2.bf16.msra.mxu0 0
        %2167 = vmatprep.mubr.bf16.mxu0 0
        %2168 = vmatmul.mubr.bf16.gmra.mxu0 %v2130
        %v2169 = vpop.f32.mrf.mxu0
        %v2170 = vadd.f32 0.0, %v2169
        %v2171 = vpop.f32.mrf.mxu0
        %v2172 = vpop.f32.mrf.mxu0
        %v2173 = vpop.f32.mrf.mxu0
        %2174 = vdwg.mxu0
        %2177 = vrot.lane.b32.xlu0 %v1681, 32
        %v2178 = vpop.permute.xlu0 %2177
        %2179 = vrot.lane.b32.xlu0 %v1730, 32
        %v2180 = vpop.permute.xlu0 %2179
        %2185 = vrot.lane.b32.xlu0 %v1902, 64
        %v2186 = vpop.permute.xlu0 %2185
        %2187 = vrot.lane.b32.xlu0 %v1950, 64
        %v2188 = vpop.permute.xlu0 %2187
        %2193 = vrot.lane.b32.xlu0 %v2122, 96
        %v2194 = vpop.permute.xlu0 %2193
        %2195 = vrot.lane.b32.xlu0 %v2170, 96
        %v2196 = vpop.permute.xlu0 %2195
        %v2199 = vsel %vm1298, %v1458, %v2178
        %v2200 = vsel %vm1298, %v1504, %v2180
        %vm2201 = vcmask 523264
        %v2202 = vsel %vm2201, %v2199, %v2186
        %v2203 = vsel %vm2201, %v2200, %v2188
        %vm2204 = vcmask 785408
        %v2205 = vsel %vm2204, %v2202, %v2194
        %v2206 = vsel %vm2204, %v2203, %v2196
        %v2207 = vld [vmem:[%s800] sm:$0xf]
        %v2208 = vld [vmem:[%s800 + $0x4] sm:$0xf]
        %v2209 = vld [vmem:[%s800 + $0x8] sm:$0xf]
        %v2210 = vld [vmem:[%s800 + $0xc] sm:$0xf]
        %v2211 = vld [vmem:[%s800 + $0x10] sm:$0xf]
        %v2212 = vld [vmem:[%s800 + $0x14] sm:$0xf]
        %v2213 = vld [vmem:[%s800 + $0x18] sm:$0xf]
        %v2214 = vld [vmem:[%s800 + $0x1c] sm:$0xf]
        %v2215 = vld [vmem:[%s800 + $0x20] sm:$0xf]
        %v2216 = vld [vmem:[%s800 + $0x24] sm:$0xf]
        %v2217 = vld [vmem:[%s800 + $0x28] sm:$0xf]
        %v2218 = vld [vmem:[%s800 + $0x2c] sm:$0xf]
        %v2219 = vld [vmem:[%s800 + $0x30] sm:$0xf]
        %v2220 = vld [vmem:[%s800 + $0x34] sm:$0xf]
        %v2221 = vld [vmem:[%s800 + $0x38] sm:$0xf]
        %v2222 = vld [vmem:[%s800 + $0x3c] sm:$0xf]
        %v2223 = vpack.c.bf16 %v2206, %v2205
        %v2224 = vld [vmem:[%s947] sm:$0x1]
        %v2226 = vlaneseq
        %v2227 = vshrl.u32 %v2226, 7
        %v2228 = vsub.s32 0, %v2227
        %v2229 = vrot.slane %v2224, %v2228
        %v2247 = vunpack.c.l.b16 %v2207
        %v2248 = vunpack.c.l.b16 %v2208
        %v2249 = vunpack.c.l.b16 %v2209
        %v2250 = vunpack.c.l.b16 %v2210
        %v2251 = vunpack.c.l.b16 %v2211
        %v2252 = vunpack.c.l.b16 %v2212
        %v2253 = vunpack.c.l.b16 %v2213
        %v2254 = vunpack.c.l.b16 %v2214
        %v2255 = vunpack.c.l.b16 %v2215
        %v2256 = vunpack.c.l.b16 %v2216
        %v2257 = vunpack.c.l.b16 %v2217
        %v2258 = vunpack.c.l.b16 %v2218
        %v2259 = vunpack.c.l.b16 %v2219
        %v2260 = vunpack.c.l.b16 %v2220
        %v2261 = vunpack.c.l.b16 %v2221
        %v2262 = vunpack.c.l.b16 %v2222
        %v2263 = vpack.c.b16 %v2248, %v2247
        %v2264 = vpack.c.b16 %v2250, %v2249
        %v2265 = vpack.c.b16 %v2252, %v2251
        %v2266 = vpack.c.b16 %v2254, %v2253
        %v2267 = vpack.c.b16 %v2256, %v2255
        %v2268 = vpack.c.b16 %v2258, %v2257
        %v2269 = vpack.c.b16 %v2260, %v2259
        %v2270 = vpack.c.b16 %v2262, %v2261
        %2279 = vmatprep.subr.bf16.mxu0 0
        %2280 = vmatpush1.bf16.msra.mxu0 %v2270
        %2281 = vmatprep.subr.bf16.mxu0 0
        %2282 = vmatpush1.bf16.msra.mxu0 %v2269
        %2283 = vmatprep.subr.bf16.mxu0 0
        %2284 = vmatpush1.bf16.msra.mxu0 %v2268
        %2285 = vmatprep.subr.bf16.mxu0 0
        %2286 = vmatpush1.bf16.msra.mxu0 %v2267
        %2287 = vmatprep.subr.bf16.mxu0 0
        %2288 = vmatpush1.bf16.msra.mxu0 %v2266
        %2289 = vmatprep.subr.bf16.mxu0 0
        %2290 = vmatpush1.bf16.msra.mxu0 %v2265
        %2291 = vmatprep.subr.bf16.mxu0 0
        %2292 = vmatpush1.bf16.msra.mxu0 %v2264
        %2293 = vmatprep.subr.bf16.mxu0 0
        %2294 = vmatpush1.bf16.msra.mxu0 %v2263
        %2295 = vmatprep.subr.bf16.mxu0 0
        %2296 = vmatpush2.bf16.msra.mxu0 0
        %2297 = vmatprep.subr.bf16.mxu0 0
        %2298 = vmatpush2.bf16.msra.mxu0 0
        %2299 = vmatprep.subr.bf16.mxu0 0
        %2300 = vmatpush2.bf16.msra.mxu0 0
        %2301 = vmatprep.subr.bf16.mxu0 0
        %2302 = vmatpush2.bf16.msra.mxu0 0
        %2303 = vmatprep.subr.bf16.mxu0 0
        %2304 = vmatpush2.bf16.msra.mxu0 0
        %2305 = vmatprep.subr.bf16.mxu0 0
        %2306 = vmatpush2.bf16.msra.mxu0 0
        %2307 = vmatprep.subr.bf16.mxu0 0
        %2308 = vmatpush2.bf16.msra.mxu0 0
        %2309 = vmatprep.subr.bf16.mxu0 0
        %2310 = vmatpush2.bf16.msra.mxu0 0
        %2311 = vmatprep.mubr.bf16.mxu0 0
        %2312 = vmatmul.mubr.bf16.gmra.mxu0 %v2223
        %v2313 = vpop.f32.mrf.mxu0
        %v2314 = vadd.f32 %v2229, %v2313
        %v2315 = vpop.f32.mrf.mxu0
        %v2316 = vpop.f32.mrf.mxu0
        %v2317 = vadd.f32 %v2229, %v2316
        %v2318 = vpop.f32.mrf.mxu0
        %2319 = vdwg.mxu0
        %v2320 = vadd.f32 %v1014, %v2314
        %v2321 = vadd.f32 %v1015, %v2317
        %v2322 = vld [vmem:[%s950] sm:$0x1]
        %v2323 = vld [vmem:[%s953] sm:$0x1]
        %2324 = vadd.xlane.f32.xlu0 %v2320
        %v2325 = vpop.xlane.xlu0 %2324
        %2326 = vadd.xlane.f32.xlu0 %v2321
        %v2327 = vpop.xlane.xlu0 %2326
        %v2328 = vrcp.pop 128.0
        %v2329 = vmul.f32 %v2325, %v2328
        %v2330 = vmul.f32 %v2327, %v2328
        %v2331 = vsub.f32 %v2320, %v2329
        %v2332 = vsub.f32 %v2321, %v2330
        %v2333 = vmul.f32 %v2331, %v2331
        %v2334 = vmul.f32 %v2332, %v2332
        %2335 = vadd.xlane.f32.xlu0 %v2333
        %v2336 = vpop.xlane.xlu0 %2335
        %2337 = vadd.xlane.f32.xlu0 %v2334
        %v2338 = vpop.xlane.xlu0 %2337
        %v2339 = vmul.f32 %v2336, %v2328
        %v2340 = vmul.f32 %v2338, %v2328
        %v2341 = vadd.f32 %v2339, 1e-05
        %v2342 = vadd.f32 %v2340, 1e-05
        %v2343 = vrsqrt.pop %v2341
        %v2344 = vrsqrt.pop %v2342
        %v2345 = vmul.f32 %v2331, %v2343
        %v2346 = vmul.f32 %v2332, %v2344
        %v2348 = vlaneseq
        %v2349 = vshrl.u32 %v2348, 7
        %v2350 = vsub.s32 0, %v2349
        %v2351 = vrot.slane %v2322, %v2350
        %v2353 = vmul.f32 %v2345, %v2351
        %v2354 = vmul.f32 %v2346, %v2351
        %v2356 = vlaneseq
        %v2357 = vshrl.u32 %v2356, 7
        %v2358 = vsub.s32 0, %v2357
        %v2359 = vrot.slane %v2323, %v2358
        %v2361 = vadd.f32 %v2353, %v2359
        %v2362 = vadd.f32 %v2354, %v2359
        %v2363 = vld [vmem:[%s809] sm:$0xff]
        %v2364 = vld [vmem:[%s809 + $0x8] sm:$0xff]
        %v2365 = vld [vmem:[%s809 + $0x10] sm:$0xff]
        %v2366 = vld [vmem:[%s809 + $0x18] sm:$0xff]
        %v2367 = vld [vmem:[%s809 + $0x20] sm:$0xff]
        %v2368 = vld [vmem:[%s809 + $0x28] sm:$0xff]
        %v2369 = vld [vmem:[%s809 + $0x30] sm:$0xff]
        %v2370 = vld [vmem:[%s809 + $0x38] sm:$0xff]
        %v2371 = vld [vmem:[%s809 + $0x40] sm:$0xff]
        %v2372 = vld [vmem:[%s809 + $0x48] sm:$0xff]
        %v2373 = vld [vmem:[%s809 + $0x50] sm:$0xff]
        %v2374 = vld [vmem:[%s809 + $0x58] sm:$0xff]
        %v2375 = vld [vmem:[%s809 + $0x60] sm:$0xff]
        %v2376 = vld [vmem:[%s809 + $0x68] sm:$0xff]
        %v2377 = vld [vmem:[%s809 + $0x70] sm:$0xff]
        %v2378 = vld [vmem:[%s809 + $0x78] sm:$0xff]
        %v2379 = vpack.c.bf16 %v2362, %v2361
        %v2380 = vld [vmem:[%s957] sm:$0x3]
        %v2382 = vlaneseq
        %v2383 = vshrl.u32 %v2382, 7
        %v2384 = vsub.s32 0, %v2383
        %v2385 = vrot.slane %v2380, %v2384
        %v2386 = vlaneseq
        %v2387 = vshrl.u32 %v2386, 7
        %v2388 = vsub.s32 1, %v2387
        %v2389 = vrot.slane %v2380, %v2388
        %v2408 = vunpack.c.l.b16 %v2363
        %v2409 = vunpack.c.h.b16 %v2363
        %v2410 = vunpack.c.l.b16 %v2364
        %v2411 = vunpack.c.h.b16 %v2364
        %v2412 = vunpack.c.l.b16 %v2365
        %v2413 = vunpack.c.h.b16 %v2365
        %v2414 = vunpack.c.l.b16 %v2366
        %v2415 = vunpack.c.h.b16 %v2366
        %v2416 = vunpack.c.l.b16 %v2367
        %v2417 = vunpack.c.h.b16 %v2367
        %v2418 = vunpack.c.l.b16 %v2368
        %v2419 = vunpack.c.h.b16 %v2368
        %v2420 = vunpack.c.l.b16 %v2369
        %v2421 = vunpack.c.h.b16 %v2369
        %v2422 = vunpack.c.l.b16 %v2370
        %v2423 = vunpack.c.h.b16 %v2370
        %v2424 = vunpack.c.l.b16 %v2371
        %v2425 = vunpack.c.h.b16 %v2371
        %v2426 = vunpack.c.l.b16 %v2372
        %v2427 = vunpack.c.h.b16 %v2372
        %v2428 = vunpack.c.l.b16 %v2373
        %v2429 = vunpack.c.h.b16 %v2373
        %v2430 = vunpack.c.l.b16 %v2374
        %v2431 = vunpack.c.h.b16 %v2374
        %v2432 = vunpack.c.l.b16 %v2375
        %v2433 = vunpack.c.h.b16 %v2375
        %v2434 = vunpack.c.l.b16 %v2376
        %v2435 = vunpack.c.h.b16 %v2376
        %v2436 = vunpack.c.l.b16 %v2377
        %v2437 = vunpack.c.h.b16 %v2377
        %v2438 = vunpack.c.l.b16 %v2378
        %v2439 = vunpack.c.h.b16 %v2378
        %v2440 = vpack.c.b16 %v2410, %v2408
        %v2441 = vpack.c.b16 %v2411, %v2409
        %v2442 = vpack.c.b16 %v2414, %v2412
        %v2443 = vpack.c.b16 %v2415, %v2413
        %v2444 = vpack.c.b16 %v2418, %v2416
        %v2445 = vpack.c.b16 %v2419, %v2417
        %v2446 = vpack.c.b16 %v2422, %v2420
        %v2447 = vpack.c.b16 %v2423, %v2421
        %v2448 = vpack.c.b16 %v2426, %v2424
        %v2449 = vpack.c.b16 %v2427, %v2425
        %v2450 = vpack.c.b16 %v2430, %v2428
        %v2451 = vpack.c.b16 %v2431, %v2429
        %v2452 = vpack.c.b16 %v2434, %v2432
        %v2453 = vpack.c.b16 %v2435, %v2433
        %v2454 = vpack.c.b16 %v2438, %v2436
        %v2455 = vpack.c.b16 %v2439, %v2437
        %2472 = vmatprep.subr.bf16.mxu0 %v2455
        %2473 = vmatpush1.bf16.msra.mxu0 %v2454
        %2474 = vmatprep.subr.bf16.mxu0 %v2453
        %2475 = vmatpush1.bf16.msra.mxu0 %v2452
        %2476 = vmatprep.subr.bf16.mxu0 %v2451
        %2477 = vmatpush1.bf16.msra.mxu0 %v2450
        %2478 = vmatprep.subr.bf16.mxu0 %v2449
        %2479 = vmatpush1.bf16.msra.mxu0 %v2448
        %2480 = vmatprep.subr.bf16.mxu0 %v2447
        %2481 = vmatpush1.bf16.msra.mxu0 %v2446
        %2482 = vmatprep.subr.bf16.mxu0 %v2445
        %2483 = vmatpush1.bf16.msra.mxu0 %v2444
        %2484 = vmatprep.subr.bf16.mxu0 %v2443
        %2485 = vmatpush1.bf16.msra.mxu0 %v2442
        %2486 = vmatprep.subr.bf16.mxu0 %v2441
        %2487 = vmatpush1.bf16.msra.mxu0 %v2440
        %2488 = vmatprep.subr.bf16.mxu0 0
        %2489 = vmatpush2.bf16.msra.mxu0 0
        %2490 = vmatprep.subr.bf16.mxu0 0
        %2491 = vmatpush2.bf16.msra.mxu0 0
        %2492 = vmatprep.subr.bf16.mxu0 0
        %2493 = vmatpush2.bf16.msra.mxu0 0
        %2494 = vmatprep.subr.bf16.mxu0 0
        %2495 = vmatpush2.bf16.msra.mxu0 0
        %2496 = vmatprep.subr.bf16.mxu0 0
        %2497 = vmatpush2.bf16.msra.mxu0 0
        %2498 = vmatprep.subr.bf16.mxu0 0
        %2499 = vmatpush2.bf16.msra.mxu0 0
        %2500 = vmatprep.subr.bf16.mxu0 0
        %2501 = vmatpush2.bf16.msra.mxu0 0
        %2502 = vmatprep.subr.bf16.mxu0 0
        %2503 = vmatpush2.bf16.msra.mxu0 0
        %2504 = vmatprep.mubr.bf16.mxu0 0
        %2505 = vmatmul.mubr.bf16.gmra.mxu0 %v2379
        %v2506 = vpop.f32.mrf.mxu0
        %v2507 = vadd.f32 %v2385, %v2506
        %v2508 = vpop.f32.mrf.mxu0
        %v2509 = vadd.f32 %v2389, %v2508
        %v2510 = vpop.f32.mrf.mxu0
        %v2511 = vadd.f32 %v2385, %v2510
        %v2512 = vpop.f32.mrf.mxu0
        %v2513 = vadd.f32 %v2389, %v2512
        %2514 = vdwg.mxu0
        %v2515 = vmul.f32 %v2507, 0.5
        %v2516 = vmul.f32 %v2509, 0.5
        %v2517 = vmul.f32 %v2511, 0.5
        %v2518 = vmul.f32 %v2513, 0.5
        %v2519 = vmul.f32 %v2507, 0.044715
        %v2520 = vmul.f32 %v2509, 0.044715
        %v2521 = vmul.f32 %v2511, 0.044715
        %v2522 = vmul.f32 %v2513, 0.044715
        %v2523 = vmul.f32 %v2519, %v2507
        %v2524 = vmul.f32 %v2520, %v2509
        %v2525 = vmul.f32 %v2521, %v2511
        %v2526 = vmul.f32 %v2522, %v2513
        %v2527 = vmul.f32 %v2523, %v2507
        %v2528 = vmul.f32 %v2524, %v2509
        %v2529 = vmul.f32 %v2525, %v2511
        %v2530 = vmul.f32 %v2526, %v2513
        %v2531 = vadd.f32 %v2507, %v2527
        %v2532 = vadd.f32 %v2509, %v2528
        %v2533 = vadd.f32 %v2511, %v2529
        %v2534 = vadd.f32 %v2513, %v2530
        %v2535 = vmul.f32 %v2531, 0.7978846
        %v2536 = vmul.f32 %v2532, 0.7978846
        %v2537 = vmul.f32 %v2533, 0.7978846
        %v2538 = vmul.f32 %v2534, 0.7978846
        %v2539 = vtanh.pop %v2535
        %v2540 = vtanh.pop %v2536
        %v2541 = vtanh.pop %v2537
        %v2542 = vtanh.pop %v2538
        %v2543 = vadd.f32 %v2539, 1.0
        %v2544 = vadd.f32 %v2540, 1.0
        %v2545 = vadd.f32 %v2541, 1.0
        %v2546 = vadd.f32 %v2542, 1.0
        %v2547 = vmul.f32 %v2515, %v2543
        %v2548 = vmul.f32 %v2516, %v2544
        %v2549 = vmul.f32 %v2517, %v2545
        %v2550 = vmul.f32 %v2518, %v2546
        %v2551 = vld [vmem:[%s818] sm:$0xf]
        %v2552 = vld [vmem:[%s818 + $0x4] sm:$0xf]
        %v2553 = vld [vmem:[%s818 + $0x8] sm:$0xf]
        %v2554 = vld [vmem:[%s818 + $0xc] sm:$0xf]
        %v2555 = vld [vmem:[%s818 + $0x10] sm:$0xf]
        %v2556 = vld [vmem:[%s818 + $0x14] sm:$0xf]
        %v2557 = vld [vmem:[%s818 + $0x18] sm:$0xf]
        %v2558 = vld [vmem:[%s818 + $0x1c] sm:$0xf]
        %v2559 = vld [vmem:[%s818 + $0x20] sm:$0xf]
        %v2560 = vld [vmem:[%s818 + $0x24] sm:$0xf]
        %v2561 = vld [vmem:[%s818 + $0x28] sm:$0xf]
        %v2562 = vld [vmem:[%s818 + $0x2c] sm:$0xf]
        %v2563 = vld [vmem:[%s818 + $0x30] sm:$0xf]
        %v2564 = vld [vmem:[%s818 + $0x34] sm:$0xf]
        %v2565 = vld [vmem:[%s818 + $0x38] sm:$0xf]
        %v2566 = vld [vmem:[%s818 + $0x3c] sm:$0xf]
        %v2567 = vld [vmem:[%s818 + $0x40] sm:$0xf]
        %v2568 = vld [vmem:[%s818 + $0x44] sm:$0xf]
        %v2569 = vld [vmem:[%s818 + $0x48] sm:$0xf]
        %v2570 = vld [vmem:[%s818 + $0x4c] sm:$0xf]
        %v2571 = vld [vmem:[%s818 + $0x50] sm:$0xf]
        %v2572 = vld [vmem:[%s818 + $0x54] sm:$0xf]
        %v2573 = vld [vmem:[%s818 + $0x58] sm:$0xf]
        %v2574 = vld [vmem:[%s818 + $0x5c] sm:$0xf]
        %v2575 = vld [vmem:[%s818 + $0x60] sm:$0xf]
        %v2576 = vld [vmem:[%s818 + $0x64] sm:$0xf]
        %v2577 = vld [vmem:[%s818 + $0x68] sm:$0xf]
        %v2578 = vld [vmem:[%s818 + $0x6c] sm:$0xf]
        %v2579 = vld [vmem:[%s818 + $0x70] sm:$0xf]
        %v2580 = vld [vmem:[%s818 + $0x74] sm:$0xf]
        %v2581 = vld [vmem:[%s818 + $0x78] sm:$0xf]
        %v2582 = vld [vmem:[%s818 + $0x7c] sm:$0xf]
        %v2583 = vpack.c.bf16 %v2549, %v2547
        %v2584 = vpack.c.bf16 %v2550, %v2548
        %v2585 = vld [vmem:[%s960] sm:$0x1]
        %v2587 = vlaneseq
        %v2588 = vshrl.u32 %v2587, 7
        %v2589 = vsub.s32 0, %v2588
        %v2590 = vrot.slane %v2585, %v2589
        %v2624 = vunpack.c.l.b16 %v2551
        %v2625 = vunpack.c.l.b16 %v2552
        %v2626 = vunpack.c.l.b16 %v2553
        %v2627 = vunpack.c.l.b16 %v2554
        %v2628 = vunpack.c.l.b16 %v2555
        %v2629 = vunpack.c.l.b16 %v2556
        %v2630 = vunpack.c.l.b16 %v2557
        %v2631 = vunpack.c.l.b16 %v2558
        %v2632 = vunpack.c.l.b16 %v2559
        %v2633 = vunpack.c.l.b16 %v2560
        %v2634 = vunpack.c.l.b16 %v2561
        %v2635 = vunpack.c.l.b16 %v2562
        %v2636 = vunpack.c.l.b16 %v2563
        %v2637 = vunpack.c.l.b16 %v2564
        %v2638 = vunpack.c.l.b16 %v2565
        %v2639 = vunpack.c.l.b16 %v2566
        %v2640 = vunpack.c.l.b16 %v2567
        %v2641 = vunpack.c.l.b16 %v2568
        %v2642 = vunpack.c.l.b16 %v2569
        %v2643 = vunpack.c.l.b16 %v2570
        %v2644 = vunpack.c.l.b16 %v2571
        %v2645 = vunpack.c.l.b16 %v2572
        %v2646 = vunpack.c.l.b16 %v2573
        %v2647 = vunpack.c.l.b16 %v2574
        %v2648 = vunpack.c.l.b16 %v2575
        %v2649 = vunpack.c.l.b16 %v2576
        %v2650 = vunpack.c.l.b16 %v2577
        %v2651 = vunpack.c.l.b16 %v2578
        %v2652 = vunpack.c.l.b16 %v2579
        %v2653 = vunpack.c.l.b16 %v2580
        %v2654 = vunpack.c.l.b16 %v2581
        %v2655 = vunpack.c.l.b16 %v2582
        %v2656 = vpack.c.b16 %v2625, %v2624
        %v2657 = vpack.c.b16 %v2627, %v2626
        %v2658 = vpack.c.b16 %v2629, %v2628
        %v2659 = vpack.c.b16 %v2631, %v2630
        %v2660 = vpack.c.b16 %v2633, %v2632
        %v2661 = vpack.c.b16 %v2635, %v2634
        %v2662 = vpack.c.b16 %v2637, %v2636
        %v2663 = vpack.c.b16 %v2639, %v2638
        %v2664 = vpack.c.b16 %v2641, %v2640
        %v2665 = vpack.c.b16 %v2643, %v2642
        %v2666 = vpack.c.b16 %v2645, %v2644
        %v2667 = vpack.c.b16 %v2647, %v2646
        %v2668 = vpack.c.b16 %v2649, %v2648
        %v2669 = vpack.c.b16 %v2651, %v2650
        %v2670 = vpack.c.b16 %v2653, %v2652
        %v2671 = vpack.c.b16 %v2655, %v2654
        %2688 = vmatprep.subr.bf16.mxu0 0
        %2689 = vmatpush1.bf16.msra.mxu0 %v2663
        %2690 = vmatprep.subr.bf16.mxu0 0
        %2691 = vmatpush1.bf16.msra.mxu0 %v2662
        %2692 = vmatprep.subr.bf16.mxu0 0
        %2693 = vmatpush1.bf16.msra.mxu0 %v2661
        %2694 = vmatprep.subr.bf16.mxu0 0
        %2695 = vmatpush1.bf16.msra.mxu0 %v2660
        %2696 = vmatprep.subr.bf16.mxu0 0
        %2697 = vmatpush1.bf16.msra.mxu0 %v2659
        %2698 = vmatprep.subr.bf16.mxu0 0
        %2699 = vmatpush1.bf16.msra.mxu0 %v2658
        %2700 = vmatprep.subr.bf16.mxu0 0
        %2701 = vmatpush1.bf16.msra.mxu0 %v2657
        %2702 = vmatprep.subr.bf16.mxu0 0
        %2703 = vmatpush1.bf16.msra.mxu0 %v2656
        %2704 = vmatprep.subr.bf16.mxu0 0
        %2705 = vmatpush2.bf16.msra.mxu0 %v2671
        %2706 = vmatprep.subr.bf16.mxu0 0
        %2707 = vmatpush2.bf16.msra.mxu0 %v2670
        %2708 = vmatprep.subr.bf16.mxu0 0
        %2709 = vmatpush2.bf16.msra.mxu0 %v2669
        %2710 = vmatprep.subr.bf16.mxu0 0
        %2711 = vmatpush2.bf16.msra.mxu0 %v2668
        %2712 = vmatprep.subr.bf16.mxu0 0
        %2713 = vmatpush2.bf16.msra.mxu0 %v2667
        %2714 = vmatprep.subr.bf16.mxu0 0
        %2715 = vmatpush2.bf16.msra.mxu0 %v2666
        %2716 = vmatprep.subr.bf16.mxu0 0
        %2717 = vmatpush2.bf16.msra.mxu0 %v2665
        %2718 = vmatprep.subr.bf16.mxu0 0
        %2719 = vmatpush2.bf16.msra.mxu0 %v2664
        %2720 = vmatprep.mubr.bf16.mxu0 %v2584
        %2721 = vmatmul.mubr.bf16.gmra.mxu0 %v2583
        %v2722 = vpop.f32.mrf.mxu0
        %v2723 = vadd.f32 %v2590, %v2722
        %v2724 = vpop.f32.mrf.mxu0
        %v2725 = vpop.f32.mrf.mxu0
        %v2726 = vadd.f32 %v2590, %v2725
        %v2727 = vpop.f32.mrf.mxu0
        %2728 = vdwg.mxu0
        %v2729 = vadd.f32 %v2361, %v2723
        %v2730 = vadd.f32 %v2362, %v2726
        %v2731 = vld [vmem:[%s826] sm:$0x1]
        %v2732 = vld [vmem:[%s963] sm:$0x1]
        %2733 = vadd.xlane.f32.xlu0 %v2729
        %v2734 = vpop.xlane.xlu0 %2733
        %2735 = vadd.xlane.f32.xlu0 %v2730
        %v2736 = vpop.xlane.xlu0 %2735
        %v2737 = vmul.f32 %v2734, %v2328
        %v2738 = vmul.f32 %v2736, %v2328
        %v2739 = vsub.f32 %v2729, %v2737
        %v2740 = vsub.f32 %v2730, %v2738
        %v2741 = vmul.f32 %v2739, %v2739
        %v2742 = vmul.f32 %v2740, %v2740
        %2743 = vadd.xlane.f32.xlu0 %v2741
        %v2744 = vpop.xlane.xlu0 %2743
        %2745 = vadd.xlane.f32.xlu0 %v2742
        %v2746 = vpop.xlane.xlu0 %2745
        %v2747 = vmul.f32 %v2744, %v2328
        %v2748 = vmul.f32 %v2746, %v2328
        %v2749 = vadd.f32 %v2747, 1e-05
        %v2750 = vadd.f32 %v2748, 1e-05
        %v2751 = vrsqrt.pop %v2749
        %v2752 = vrsqrt.pop %v2750
        %v2753 = vmul.f32 %v2739, %v2751
        %v2754 = vmul.f32 %v2740, %v2752
        %v2756 = vlaneseq
        %v2757 = vshrl.u32 %v2756, 7
        %v2758 = vsub.s32 0, %v2757
        %v2759 = vrot.slane %v2731, %v2758
        %v2761 = vmul.f32 %v2753, %v2759
        %v2762 = vmul.f32 %v2754, %v2759
        %v2764 = vlaneseq
        %v2765 = vshrl.u32 %v2764, 7
        %v2766 = vsub.s32 0, %v2765
        %v2767 = vrot.slane %v2732, %v2766
        %v2769 = vadd.f32 %v2761, %v2767
        %v2770 = vadd.f32 %v2762, %v2767
        %2771 = vst [vmem:[#allocation2] sm:$0xff] %v2769
        %2772 = vst [vmem:[#allocation2 + $0x8] sm:$0xff] %v2770
        %p2773 = scmp.eq.s32.totalorder %s45, 1
        // Predicated region
        $region137: #{forward.1} parent=103 // pred_check
          %p2774 = pneg %p2773
        $region138: #{forward.1} parent=103 // pred_check_branch
          %2776 = sbr.rel (%p2774) target = $region140
        $region139: #{forward.1} parent=103 // pred_region
          %v2778 = vrot.slane %v2770, 7
          %vm2780 = vcmask 1040384
          %v2781 = vsel %vm2780, %v2769, %v2778
          %v2782 = vld [vmem:[#allocation11] sm:$0xf]
          %v2783 = vld [vmem:[#allocation11 + $0x4] sm:$0xf]
          %v2784 = vld [vmem:[#allocation11 + $0x8] sm:$0xf]
          %v2785 = vld [vmem:[#allocation11 + $0xc] sm:$0xf]
          %v2786 = vld [vmem:[#allocation11 + $0x10] sm:$0xf]
          %v2787 = vld [vmem:[#allocation11 + $0x14] sm:$0xf]
          %v2788 = vld [vmem:[#allocation11 + $0x18] sm:$0xf]
          %v2789 = vld [vmem:[#allocation11 + $0x1c] sm:$0xf]
          %v2790 = vld [vmem:[#allocation11 + $0x20] sm:$0xf]
          %v2791 = vld [vmem:[#allocation11 + $0x24] sm:$0xf]
          %v2792 = vld [vmem:[#allocation11 + $0x28] sm:$0xf]
          %v2793 = vld [vmem:[#allocation11 + $0x2c] sm:$0xf]
          %v2794 = vld [vmem:[#allocation11 + $0x30] sm:$0xf]
          %v2795 = vld [vmem:[#allocation11 + $0x34] sm:$0xf]
          %v2796 = vld [vmem:[#allocation11 + $0x38] sm:$0xf]
          %v2797 = vld [vmem:[#allocation11 + $0x3c] sm:$0xf]
          %v2798 = vpack.c.bf16 %v2781, %v2781
          %v2799 = vld [vmem:[%s17] sm:$0x1]
          %v2801 = vlaneseq
          %v2802 = vshrl.u32 %v2801, 7
          %v2803 = vsub.s32 0, %v2802
          %v2804 = vrot.slane %v2799, %v2803
          %v2822 = vunpack.c.l.b16 %v2782
          %v2823 = vunpack.c.l.b16 %v2783
          %v2824 = vunpack.c.l.b16 %v2784
          %v2825 = vunpack.c.l.b16 %v2785
          %v2826 = vunpack.c.l.b16 %v2786
          %v2827 = vunpack.c.l.b16 %v2787
          %v2828 = vunpack.c.l.b16 %v2788
          %v2829 = vunpack.c.l.b16 %v2789
          %v2830 = vunpack.c.l.b16 %v2790
          %v2831 = vunpack.c.l.b16 %v2791
          %v2832 = vunpack.c.l.b16 %v2792
          %v2833 = vunpack.c.l.b16 %v2793
          %v2834 = vunpack.c.l.b16 %v2794
          %v2835 = vunpack.c.l.b16 %v2795
          %v2836 = vunpack.c.l.b16 %v2796
          %v2837 = vunpack.c.l.b16 %v2797
          %v2838 = vpack.c.b16 %v2823, %v2822
          %v2839 = vpack.c.b16 %v2825, %v2824
          %v2840 = vpack.c.b16 %v2827, %v2826
          %v2841 = vpack.c.b16 %v2829, %v2828
          %v2842 = vpack.c.b16 %v2831, %v2830
          %v2843 = vpack.c.b16 %v2833, %v2832
          %v2844 = vpack.c.b16 %v2835, %v2834
          %v2845 = vpack.c.b16 %v2837, %v2836
          %2854 = vmatprep.subr.bf16.mxu0 0
          %2855 = vmatpush1.bf16.msra.mxu0 %v2845
          %2856 = vmatprep.subr.bf16.mxu0 0
          %2857 = vmatpush1.bf16.msra.mxu0 %v2844
          %2858 = vmatprep.subr.bf16.mxu0 0
          %2859 = vmatpush1.bf16.msra.mxu0 %v2843
          %2860 = vmatprep.subr.bf16.mxu0 0
          %2861 = vmatpush1.bf16.msra.mxu0 %v2842
          %2862 = vmatprep.subr.bf16.mxu0 0
          %2863 = vmatpush1.bf16.msra.mxu0 %v2841
          %2864 = vmatprep.subr.bf16.mxu0 0
          %2865 = vmatpush1.bf16.msra.mxu0 %v2840
          %2866 = vmatprep.subr.bf16.mxu0 0
          %2867 = vmatpush1.bf16.msra.mxu0 %v2839
          %2868 = vmatprep.subr.bf16.mxu0 0
          %2869 = vmatpush1.bf16.msra.mxu0 %v2838
          %2870 = vmatprep.subr.bf16.mxu0 0
          %2871 = vmatpush2.bf16.msra.mxu0 0
          %2872 = vmatprep.subr.bf16.mxu0 0
          %2873 = vmatpush2.bf16.msra.mxu0 0
          %2874 = vmatprep.subr.bf16.mxu0 0
          %2875 = vmatpush2.bf16.msra.mxu0 0
          %2876 = vmatprep.subr.bf16.mxu0 0
          %2877 = vmatpush2.bf16.msra.mxu0 0
          %2878 = vmatprep.subr.bf16.mxu0 0
          %2879 = vmatpush2.bf16.msra.mxu0 0
          %2880 = vmatprep.subr.bf16.mxu0 0
          %2881 = vmatpush2.bf16.msra.mxu0 0
          %2882 = vmatprep.subr.bf16.mxu0 0
          %2883 = vmatpush2.bf16.msra.mxu0 0
          %2884 = vmatprep.subr.bf16.mxu0 0
          %2885 = vmatpush2.bf16.msra.mxu0 0
          %2886 = vmatprep.mubr.bf16.mxu0 0
          %2887 = vmatmul.mubr.bf16.gmra.mxu0 %v2798
          %v2888 = vpop.f32.mrf.mxu0
          %v2889 = vadd.f32 %v2804, %v2888
          %v2890 = vpop.f32.mrf.mxu0
          %v2891 = vpop.f32.mrf.mxu0
          %v2892 = vpop.f32.mrf.mxu0
          %2893 = vdwg.mxu0
          %v2894 = vtanh.pop %v2889
          %v2895 = vld [vmem:[#allocation12] sm:$0xf]
          %v2896 = vld [vmem:[#allocation12 + $0x4] sm:$0xf]
          %v2897 = vld [vmem:[#allocation12 + $0x8] sm:$0xf]
          %v2898 = vld [vmem:[#allocation12 + $0xc] sm:$0xf]
          %v2899 = vld [vmem:[#allocation12 + $0x10] sm:$0xf]
          %v2900 = vld [vmem:[#allocation12 + $0x14] sm:$0xf]
          %v2901 = vld [vmem:[#allocation12 + $0x18] sm:$0xf]
          %v2902 = vld [vmem:[#allocation12 + $0x1c] sm:$0xf]
          %v2903 = vld [vmem:[#allocation12 + $0x20] sm:$0xf]
          %v2904 = vld [vmem:[#allocation12 + $0x24] sm:$0xf]
          %v2905 = vld [vmem:[#allocation12 + $0x28] sm:$0xf]
          %v2906 = vld [vmem:[#allocation12 + $0x2c] sm:$0xf]
          %v2907 = vld [vmem:[#allocation12 + $0x30] sm:$0xf]
          %v2908 = vld [vmem:[#allocation12 + $0x34] sm:$0xf]
          %v2909 = vld [vmem:[#allocation12 + $0x38] sm:$0xf]
          %v2910 = vld [vmem:[#allocation12 + $0x3c] sm:$0xf]
          %v2911 = vpack.c.bf16 %v2894, %v2894
          %v2912 = vld [vmem:[#allocation14] sm:$0x1]
          %v2914 = vlaneseq
          %v2915 = vshrl.u32 %v2914, 7
          %v2916 = vsub.s32 0, %v2915
          %v2917 = vrot.slane %v2912, %v2916
          %v2935 = vunpack.c.l.b16 %v2895
          %v2936 = vunpack.c.l.b16 %v2896
          %v2937 = vunpack.c.l.b16 %v2897
          %v2938 = vunpack.c.l.b16 %v2898
          %v2939 = vunpack.c.l.b16 %v2899
          %v2940 = vunpack.c.l.b16 %v2900
          %v2941 = vunpack.c.l.b16 %v2901
          %v2942 = vunpack.c.l.b16 %v2902
          %v2943 = vunpack.c.l.b16 %v2903
          %v2944 = vunpack.c.l.b16 %v2904
          %v2945 = vunpack.c.l.b16 %v2905
          %v2946 = vunpack.c.l.b16 %v2906
          %v2947 = vunpack.c.l.b16 %v2907
          %v2948 = vunpack.c.l.b16 %v2908
          %v2949 = vunpack.c.l.b16 %v2909
          %v2950 = vunpack.c.l.b16 %v2910
          %v2951 = vpack.c.b16 %v2936, %v2935
          %v2952 = vpack.c.b16 %v2938, %v2937
          %v2953 = vpack.c.b16 %v2940, %v2939
          %v2954 = vpack.c.b16 %v2942, %v2941
          %v2955 = vpack.c.b16 %v2944, %v2943
          %v2956 = vpack.c.b16 %v2946, %v2945
          %v2957 = vpack.c.b16 %v2948, %v2947
          %v2958 = vpack.c.b16 %v2950, %v2949
          %2967 = vmatprep.subr.bf16.mxu0 0
          %2968 = vmatpush1.bf16.msra.mxu0 %v2958
          %2969 = vmatprep.subr.bf16.mxu0 0
          %2970 = vmatpush1.bf16.msra.mxu0 %v2957
          %2971 = vmatprep.subr.bf16.mxu0 0
          %2972 = vmatpush1.bf16.msra.mxu0 %v2956
          %2973 = vmatprep.subr.bf16.mxu0 0
          %2974 = vmatpush1.bf16.msra.mxu0 %v2955
          %2975 = vmatprep.subr.bf16.mxu0 0
          %2976 = vmatpush1.bf16.msra.mxu0 %v2954
          %2977 = vmatprep.subr.bf16.mxu0 0
          %2978 = vmatpush1.bf16.msra.mxu0 %v2953
          %2979 = vmatprep.subr.bf16.mxu0 0
          %2980 = vmatpush1.bf16.msra.mxu0 %v2952
          %2981 = vmatprep.subr.bf16.mxu0 0
          %2982 = vmatpush1.bf16.msra.mxu0 %v2951
          %2983 = vmatprep.subr.bf16.mxu0 0
          %2984 = vmatpush2.bf16.msra.mxu0 0
          %2985 = vmatprep.subr.bf16.mxu0 0
          %2986 = vmatpush2.bf16.msra.mxu0 0
          %2987 = vmatprep.subr.bf16.mxu0 0
          %2988 = vmatpush2.bf16.msra.mxu0 0
          %2989 = vmatprep.subr.bf16.mxu0 0
          %2990 = vmatpush2.bf16.msra.mxu0 0
          %2991 = vmatprep.subr.bf16.mxu0 0
          %2992 = vmatpush2.bf16.msra.mxu0 0
          %2993 = vmatprep.subr.bf16.mxu0 0
          %2994 = vmatpush2.bf16.msra.mxu0 0
          %2995 = vmatprep.subr.bf16.mxu0 0
          %2996 = vmatpush2.bf16.msra.mxu0 0
          %2997 = vmatprep.subr.bf16.mxu0 0
          %2998 = vmatpush2.bf16.msra.mxu0 0
          %2999 = vmatprep.mubr.bf16.mxu0 0
          %3000 = vmatmul.mubr.bf16.gmra.mxu0 %v2911
          %v3001 = vpop.f32.mrf.mxu0
          %v3002 = vadd.f32 %v2917, %v3001
          %v3003 = vpop.f32.mrf.mxu0
          %v3004 = vpop.f32.mrf.mxu0
          %v3005 = vpop.f32.mrf.mxu0
          %3006 = vdwg.mxu0
          %3007 = vst [vmem:[#allocation15] sm:$0x3] %v3002
          %vm3008 = vcmask 1041408
          %v3009 = vsel %vm3008, %v3002, -inf
          %3010 = vmax.xlane.f32.xlu0 %v3009
          %v3011 = vpop.xlane.xlu0 %3010
          %v3012 = vsub.f32 %v3002, %v3011
          %v3013 = vmul.f32 %v3012, 1.442695
          %v3014 = vpow.pop %v3013
          %v3015 = vsel %vm3008, %v3014, 0.0
          %3016 = vadd.xlane.f32.xlu0 %v3015
          %v3017 = vpop.xlane.xlu0 %3016
          %v3018 = vlog2.pop %v3017
          %v3019 = vmul.f32 %v3018, 0.6931472
          %v3020 = vadd.f32 %v3019, %v3011
          %v3021 = vld [vmem:[%s20] sm:$0x3]
          %v3022 = vmul.f32 %v3002, %v3021
          %v3023 = vsel %vm3008, %v3022, 0.0
          %3024 = vadd.xlane.f32.xlu0 %v3023
          %v3025 = vpop.xlane.xlu0 %3024
          %v3026 = vsub.f32 %v3020, %v3025
          %vm3027 = vcmask 1024
          %3028 = vst.msk [vmem:[%s22] sm:$0x3] %vm3027, %v3026
        $region140: #{forward.1} parent=103 // pred_fallthru
          _
        // Predicated region
        $region141: #{forward.1} parent=103 // pred_check
          %p3029 = pneg %p559
        $region142: #{forward.1} parent=103 // pred_check_branch
          %3031 = sbr.rel (%p3029) target = $region144
        $region143: #{forward.1} parent=103 // pred_region
          %s3033 = ssub.s32 32, 32
          %3034 = vsyncadd [#allocation5], %s3033
          %s3036 = sshll.u32 [#allocation15], 4
          %s3037 = int_to_ptr.vmem [resolvable:$true] %s3036
          %3039 = dma.vmem_to_hbm [thread:$0]  %s3037, 32, %s21, [#allocation5]
        $region144: #{forward.1} parent=103 // pred_fallthru
          _
        // Predicated region
        $region145: #{forward.1} parent=103 // pred_check
          %p3040 = pneg %p580
        $region146: #{forward.1} parent=103 // pred_check_branch
          %3042 = sbr.rel (%p3040) target = $region148
        $region147: #{forward.1} parent=103 // pred_region
          _
        $region148: #{forward.1} parent=103 // pred_fallthru
          _
        // Predicated region
        $region149: #{forward.1} parent=103 // pred_check
          %p3043 = pneg %p559
        $region150: #{forward.1} parent=103 // pred_check_branch
          %3045 = sbr.rel (%p3043) target = $region152
        $region151: #{forward.1} parent=103 // pred_region
          %3046 = dma.done [#allocation5], 32
        $region152: #{forward.1} parent=103 // pred_fallthru
          _
        // Predicated region
        $region153: #{forward.1} parent=103 // pred_check
          %p3047 = pneg %p580
        $region154: #{forward.1} parent=103 // pred_check_branch
          %3049 = sbr.rel (%p3047) target = $region156
        $region155: #{forward.1} parent=103 // pred_region
          _
        $region156: #{forward.1} parent=103 // pred_fallthru
          _
      $region104: #{forward.1} parent=5 // pred_fallthru
        _
      %p3050 = scmp.le.s32.totalorder 2, %s40
      // Predicated region
      $region157: #{forward.1} parent=5 // pred_check
        %p3051 = pneg %p3050
      $region158: #{forward.1} parent=5 // pred_check_branch
        %3053 = sbr.rel (%p3051) target = $region160
      $region159: #{forward.1} parent=5 // pred_region
        %s3054 = ssub.s32 %s40, 2
      $region160: #{forward.1} parent=5 // pred_fallthru
        _
    $region6: #{forward.1} parent=1 // loop_footer
      %s44 = sadd.s32 1, %s40
    $region7: #{forward.1} parent=1 // loop_footer_branch
      %39 = sbr.rel target = $region3
    $region8: #{forward.1} parent=1 // loop_exit
      _
    %3055 = vsyncpa [#allocation4], 1
    %s3056 = scalar_lea.sflag [#allocation4], 1
    %3057 = vsyncpa %s3056, 1
    %3058 = vsyncpa [#allocation7], 1
    %s3059 = scalar_lea.sflag [#allocation7], 1
    %3060 = vsyncpa %s3059, 1
    %3061 = vsyncpa [#allocation10], 1
    %s3062 = scalar_lea.sflag [#allocation10], 1
    %3063 = vsyncpa %s3062, 1
    %3064 = vsyncpa [#allocation13], 1
    %3065 = vsyncpa [#allocation5], 1
    %s3066 = scalar_lea.sflag [#allocation5], 1
    %3067 = vsyncpa %s3066, 1

</llo_original>
